<compile_context>
chip_gen: v7x
topology: tpu7x:2x2x1
jax: 0.10.0
libtpu: 0.0.40
codegen_flags: <defaults>
</compile_context>

<pallas_src>
import functools

import jax
import jax.numpy as jnp
from jax.experimental import pallas as pl
from jax.experimental.pallas import tpu as pltpu


def _round_up(x, m):
    return ((x + m - 1) // m) * m


# ---------------------------------------------------------------------------
# Pallas kernel: 2-layer MLP over edge features + masked max aggregation
# (neighbors batched G-at-a-time through block-diagonal weights)
# ---------------------------------------------------------------------------
def _pointconv_kernel(feats_ref, w1_ref, w2_ref, out_ref, *, n_groups, group, d_pack, h1p, h2):
    """feats_ref: [Kp*DP, TM] bf16 -- rows = (neighbor k, feature d); feature row `Din` of each
                   neighbor block is the 1/0 validity mask (bias/mask handling is folded into
                   the weights, so the kernel never touches it explicitly).
       w1_ref:    [G*H1P, G*DP]  bf16 block-diagonal (w1.T + b1 fold + mask-carrier row)
       w2_ref:    [G*H2,  G*H1P] bf16 block-diagonal (w2.T + b2 fold via carrier column)
       out_ref:   [H2, TM]       f32 (transposed, lane-dense)
    """
    TM = out_ref.shape[1]
    w1 = w1_ref[...]
    w2 = w2_ref[...]
    gdp = group * d_pack

    acc = jnp.zeros((h2, TM), jnp.float32)
    for grp in range(n_groups):                                         # short static loop (K//G)
        f = feats_ref[grp * gdp:(grp + 1) * gdp, :]                     # [G*DP, TM] bf16
        h1 = jnp.dot(w1, f, preferred_element_type=jnp.float32)         # [G*H1P, TM] f32
        h1 = jnp.maximum(h1, 0.0).astype(jnp.bfloat16)                  # ReLU + cast for MXU
        hh = jnp.dot(w2, h1, preferred_element_type=jnp.float32)        # [G*H2, TM]  f32
        hh = jnp.maximum(hh, 0.0)                                       # ReLU
        # Invalid neighbors produce exactly 0 through both layers (features, b1 and b2 are all
        # gated by the mask row), and valid h >= 0 post-ReLU, so max with those 0 blocks equals
        # the reference -inf-masked max.  Slices are sublane-aligned (H2 % 8 == 0).
        for j in range(group):
            acc = jnp.maximum(acc, hh[j * h2:(j + 1) * h2, :])
    out_ref[...] = acc


def pointconv_pallas(feats, mask, w1, b1, w2, b2, *, tm=512, group=None):
    """feats: [M, K, Din] f32, mask: [M, K] (1 valid / 0 pad) -> [M, H2] f32."""
    M, K, Din = feats.shape
    H1 = w1.shape[1]
    H2 = w2.shape[1]
    DP = _round_up(Din + 1, 8)        # Din features + 1 mask row, padded to 8 sublanes
    H1P = _round_up(H1 + 1, 8)        # H1 hidden units + 1 mask-carrier row

    # Neighbors per MXU call: aim to fill the 256-wide stationary array of v6e/v7x; v5e's
    # 128-wide MXU just takes additional passes over the same block-diagonal weights.
    if group is None:
        group = max(1, min(K, 256 // _round_up(H1, 8)))
    G = group
    Kp = _round_up(K, G)

    # Point-tile size.  Cap so the grid has >= 2 steps whenever there is enough work, so
    # v7x's two TensorCores are both used under dimension_semantics=("parallel",).
    m128 = _round_up(max(M, 1), 128)
    tm = min(tm, m128)
    if tm == m128 and m128 >= 256:
        tm = _round_up(m128 // 2, 128)
    Mp = _round_up(M, tm)

    # Pack features edge-transposed and lane-dense: rows = (neighbor k, feature d), cols = points.
    mask_f = mask.astype(jnp.float32)
    feats = jnp.where(mask_f[..., None] > 0, feats, 0.0)
    pieces = [feats, mask_f[..., None]]
    if DP > Din + 1:
        pieces.append(jnp.zeros((M, K, DP - Din - 1), jnp.float32))
    packed = jnp.concatenate(pieces, axis=-1)                           # [M, K, DP]
    if Kp > K:
        packed = jnp.pad(packed, ((0, 0), (0, Kp - K), (0, 0)))         # pad neighbors (mask=0)
    packed = jnp.pad(packed, ((0, Mp - M), (0, 0), (0, 0)))             # [Mp, Kp, DP]
    packed = packed.transpose(1, 2, 0).reshape(Kp * DP, Mp)             # [Kp*DP, Mp]
    packed = packed.astype(jnp.bfloat16)

    # Per-neighbor weight block with b1 folded into the mask column, one mask-carrier hidden
    # row, and b2 folded into the carrier's layer-2 column.  Padding rows/cols stay zero.
    w1_blk = jnp.zeros((H1P, DP), jnp.float32)
    w1_blk = w1_blk.at[:H1, :Din].set(w1.T)
    w1_blk = w1_blk.at[:H1, Din].set(jnp.reshape(b1, (-1,)))            # b1 fold (mask column)
    w1_blk = w1_blk.at[H1, Din].set(1.0)                                # mask carrier
    w2_blk = jnp.zeros((H2, H1P), jnp.float32)
    w2_blk = w2_blk.at[:, :H1].set(w2.T)
    w2_blk = w2_blk.at[:, H1].set(jnp.reshape(b2, (-1,)))               # b2 fold (carrier column)

    eye = jnp.eye(G, dtype=jnp.float32)
    w1_bd = jnp.kron(eye, w1_blk).astype(jnp.bfloat16)                  # [G*H1P, G*DP]
    w2_bd = jnp.kron(eye, w2_blk).astype(jnp.bfloat16)                  # [G*H2,  G*H1P]

    kernel = functools.partial(_pointconv_kernel, n_groups=Kp // G, group=G,
                               d_pack=DP, h1p=H1P, h2=H2)

    out_t = pl.pallas_call(
        kernel,
        out_shape=jax.ShapeDtypeStruct((H2, Mp), jnp.float32),
        grid_spec=pltpu.PrefetchScalarGridSpec(
            num_scalar_prefetch=0,
            grid=(Mp // tm,),
            in_specs=[
                pl.BlockSpec((Kp * DP, tm), lambda i: (0, i)),
                pl.BlockSpec((G * H1P, G * DP), lambda i: (0, 0)),
                pl.BlockSpec((G * H2, G * H1P), lambda i: (0, 0)),
            ],
            out_specs=pl.BlockSpec((H2, tm), lambda i: (0, i)),
        ),
        compiler_params=pltpu.CompilerParams(
            dimension_semantics=("parallel",),
            vmem_limit_bytes=32 * 1024 * 1024,
        ),
    )(packed, w1_bd, w2_bd)

    return out_t[:, :M].T                                               # [M, H2] f32


# ---------------------------------------------------------------------------
# Glue: FPS sampling and radius neighbor search (per-graph, fixed sizes)
# ---------------------------------------------------------------------------
def fps_per_graph(pos_b, m):
    """Farthest point sampling of m points from pos_b [N, 3] (start = index 0)."""
    N = pos_b.shape[0]

    def body(i, carry):
        d, idxs = carry
        last = idxs[i]
        dist = jnp.sum((pos_b - pos_b[last]) ** 2, axis=-1)
        d = jnp.minimum(d, dist)
        nxt = jnp.argmax(d).astype(jnp.int32)
        idxs = idxs.at[i + 1].set(nxt)
        return d, idxs

    d0 = jnp.full((N,), jnp.inf, dtype=jnp.float32)
    idxs0 = jnp.zeros((m,), jnp.int32)
    _, idxs = jax.lax.fori_loop(0, m - 1, body, (d0, idxs0))
    return idxs


def radius_per_graph(pos_b, q_pos, r, K):
    """For each query, up to K neighbors (by index order) within radius r. Returns (idx[M,K], mask[M,K])."""
    N = pos_b.shape[0]
    d2 = jnp.sum((q_pos[:, None, :] - pos_b[None, :, :]) ** 2, axis=-1)   # [M, N]
    within = d2 <= (r * r)
    key = jnp.where(within, jnp.arange(N, dtype=jnp.int32)[None, :], N)
    sorted_key = jnp.sort(key, axis=1)[:, :K]                             # first K valid indices
    mask = sorted_key < N
    nbr = jnp.where(mask, sorted_key, 0)
    return nbr, mask


def build_edge_features(x, pos, ratio, r, K):
    """Gather per-edge inputs for PointConv.  x: [B,N,C], pos: [B,N,3]."""
    B, N, C = x.shape
    M = int(N * ratio)

    def per_graph(xb, pb):
        idx = fps_per_graph(pb, M)                       # [M]
        q_pos = pb[idx]                                  # [M, 3]
        nbr, mask = radius_per_graph(pb, q_pos, r, K)    # [M, K]
        x_j = xb[nbr]                                    # [M, K, C]
        rel = pb[nbr] - q_pos[:, None, :]                # [M, K, 3]
        feats = jnp.concatenate([x_j, rel], axis=-1)     # [M, K, C+3]
        feats = jnp.where(mask[:, :, None], feats, 0.0)
        return feats, mask.astype(jnp.float32), q_pos

    feats, mask, q_pos = jax.vmap(per_graph)(x, pos)
    Din = C + 3
    return (feats.reshape(B * M, K, Din), mask.reshape(B * M, K),
            q_pos.reshape(B * M, 3), M)


def sa_module_forward(x, pos, ratio, r, params, K=64):
    """x: [B, N, C], pos: [B, N, 3]. Returns (x_out [B*M, H2], pos_out [B*M, 3], batch_out [B*M])."""
    w1, b1, w2, b2 = params
    B = x.shape[0]
    feats, mask, q_pos, M = build_edge_features(x, pos, ratio, r, K)
    x_out = pointconv_pallas(feats, mask, w1, b1, w2, b2)
    batch_out = jnp.repeat(jnp.arange(B, dtype=jnp.int32), M)
    return x_out, q_pos, batch_out


def ref_pointconv(feats, mask, w1, b1, w2, b2):
    """Pure-JAX reference with the same bf16 quantization as the kernel (weights, biases,
       inputs and the inter-layer activation all pass through bf16)."""
    q = lambda a: a.astype(jnp.bfloat16).astype(jnp.float32)
    m = mask[:, :, None].astype(jnp.float32)
    f = q(jnp.where(m > 0, feats, 0.0))
    h = jnp.einsum('mkd,dh->mkh', f, q(w1)) + q(b1) * m
    h = jnp.maximum(h, 0.0)
    h = jnp.einsum('mkh,hg->mkg', q(h), q(w2)) + q(b2) * m
    h = jnp.maximum(h, 0.0)
    return jnp.max(h, axis=1)            # invalid neighbors contribute exactly 0


if __name__ == "__main__":
    key = jax.random.PRNGKey(0)
    B, N, C = 2, 64, 4
    ratio, r, K = 0.5, 0.5, 64
    H1, H2 = 32, 32
    Din = C + 3

    k1, k2, k3, k4, k5, k6 = jax.random.split(key, 6)
    x = jax.random.normal(k1, (B, N, C), dtype=jnp.float32)
    pos = jax.random.uniform(k2, (B, N, 3), dtype=jnp.float32)

    # Deterministic MLP params for PointConv's local nn: Linear(Din,H1)+ReLU, Linear(H1,H2)+ReLU.
    w1 = jax.random.normal(k3, (Din, H1), dtype=jnp.float32) * 0.2
    b1 = jax.random.normal(k4, (1, H1), dtype=jnp.float32) * 0.05
    w2 = jax.random.normal(k5, (H1, H2), dtype=jnp.float32) * 0.2
    b2 = jax.random.normal(k6, (1, H2), dtype=jnp.float32) * 0.05

    x_out, pos_out, batch_out = sa_module_forward(x, pos, ratio, r, (w1, b1, w2, b2), K=K)
    jax.block_until_ready((x_out, pos_out, batch_out))

    # Sanity-check the Pallas hot path against a pure-JAX reference (same bf16 quantization).
    feats, mask, _, M = build_edge_features(x, pos, ratio, r, K)
    ref = ref_pointconv(feats, mask, w1, b1, w2, b2)
    assert jnp.allclose(x_out, ref, atol=2e-2, rtol=2e-2), "mismatch vs reference"
    assert x_out.shape == (B * M, H2)
    assert pos_out.shape == (B * M, 3)
    assert batch_out.shape == (B * M,)

    print("KERNEL_OK")
</pallas_src>

<mosaic_0001>
module attributes {stable_mosaic.version = 11 : i64} {
  func.func @_pointconv_kernel(%arg0: i32, %arg1: memref<512x128xbf16, #tpu.memory_space<vmem>>, %arg2: memref<320x64xbf16, #tpu.memory_space<vmem>>, %arg3: memref<256x320xbf16, #tpu.memory_space<vmem>>, %arg4: memref<32x128xf32, #tpu.memory_space<vmem>>) attributes {dimension_semantics = [#tpu.dimension_semantics<parallel>], iteration_bounds = array<i64: 1>, scalar_prefetch = 0 : i64, scratch_operands = 0 : i64, tpu.core_type = #tpu.core_type<tc>, window_params = [{transform_indices = @transform_0, window_bounds = array<i64: 512, 128>}, {pipeline_mode = #tpu.pipeline_mode<synchronous>, transform_indices = @transform_1, window_bounds = array<i64: 320, 64>}, {pipeline_mode = #tpu.pipeline_mode<synchronous>, transform_indices = @transform_2, window_bounds = array<i64: 256, 320>}, {transform_indices = @transform_3, window_bounds = array<i64: 32, 128>}]} {
    %c0 = arith.constant 0 : index
    %c0_0 = arith.constant 0 : index
    %0 = vector.load %arg2[%c0, %c0_0] : memref<320x64xbf16, #tpu.memory_space<vmem>>, vector<320x64xbf16>
    %c0_1 = arith.constant 0 : index
    %c0_2 = arith.constant 0 : index
    %1 = vector.load %arg3[%c0_1, %c0_2] : memref<256x320xbf16, #tpu.memory_space<vmem>>, vector<256x320xbf16>
    %cst = arith.constant 0.000000e+00 : f32
    %2 = vector.broadcast %cst : f32 to vector<32x128xf32>
    %c0_3 = arith.constant 0 : index
    %c0_4 = arith.constant 0 : index
    %3 = vector.load %arg1[%c0_3, %c0_4] : memref<512x128xbf16, #tpu.memory_space<vmem>>, vector<64x128xbf16>
    %cst_5 = arith.constant dense<0.000000e+00> : vector<320x128xf32>
    %4 = tpu.matmul %0, %3, %cst_5 {dimension_numbers = #tpu.dot_dimension_numbers<[1], [0], [0], [1], [0, 0, 1, 1], [], []>} : vector<320x64xbf16>, vector<64x128xbf16>, vector<320x128xf32> -> vector<320x128xf32>
    %cst_6 = arith.constant 0.000000e+00 : f32
    %5 = vector.broadcast %cst_6 : f32 to vector<320x128xf32>
    %6 = arith.maximumf %4, %5 : vector<320x128xf32>
    %7 = arith.truncf %6 : vector<320x128xf32> to vector<320x128xbf16>
    %cst_7 = arith.constant dense<0.000000e+00> : vector<256x128xf32>
    %8 = tpu.matmul %1, %7, %cst_7 {dimension_numbers = #tpu.dot_dimension_numbers<[1], [0], [0], [1], [0, 0, 1, 1], [], []>} : vector<256x320xbf16>, vector<320x128xbf16>, vector<256x128xf32> -> vector<256x128xf32>
    %cst_8 = arith.constant 0.000000e+00 : f32
    %9 = vector.broadcast %cst_8 : f32 to vector<256x128xf32>
    %10 = arith.maximumf %8, %9 : vector<256x128xf32>
    %11 = vector.extract_strided_slice %10 {offsets = [0, 0], sizes = [32, 128], strides = [1, 1]} : vector<256x128xf32> to vector<32x128xf32>
    %12 = arith.maximumf %2, %11 : vector<32x128xf32>
    %13 = vector.extract_strided_slice %10 {offsets = [32, 0], sizes = [32, 128], strides = [1, 1]} : vector<256x128xf32> to vector<32x128xf32>
    %14 = arith.maximumf %12, %13 : vector<32x128xf32>
    %15 = vector.extract_strided_slice %10 {offsets = [64, 0], sizes = [32, 128], strides = [1, 1]} : vector<256x128xf32> to vector<32x128xf32>
    %16 = arith.maximumf %14, %15 : vector<32x128xf32>
    %17 = vector.extract_strided_slice %10 {offsets = [96, 0], sizes = [32, 128], strides = [1, 1]} : vector<256x128xf32> to vector<32x128xf32>
    %18 = arith.maximumf %16, %17 : vector<32x128xf32>
    %19 = vector.extract_strided_slice %10 {offsets = [128, 0], sizes = [32, 128], strides = [1, 1]} : vector<256x128xf32> to vector<32x128xf32>
    %20 = arith.maximumf %18, %19 : vector<32x128xf32>
    %21 = vector.extract_strided_slice %10 {offsets = [160, 0], sizes = [32, 128], strides = [1, 1]} : vector<256x128xf32> to vector<32x128xf32>
    %22 = arith.maximumf %20, %21 : vector<32x128xf32>
    %23 = vector.extract_strided_slice %10 {offsets = [192, 0], sizes = [32, 128], strides = [1, 1]} : vector<256x128xf32> to vector<32x128xf32>
    %24 = arith.maximumf %22, %23 : vector<32x128xf32>
    %25 = vector.extract_strided_slice %10 {offsets = [224, 0], sizes = [32, 128], strides = [1, 1]} : vector<256x128xf32> to vector<32x128xf32>
    %26 = arith.maximumf %24, %25 : vector<32x128xf32>
    %c64 = arith.constant 64 : index
    %c0_9 = arith.constant 0 : index
    %27 = vector.load %arg1[%c64, %c0_9] : memref<512x128xbf16, #tpu.memory_space<vmem>>, vector<64x128xbf16>
    %cst_10 = arith.constant dense<0.000000e+00> : vector<320x128xf32>
    %28 = tpu.matmul %0, %27, %cst_10 {dimension_numbers = #tpu.dot_dimension_numbers<[1], [0], [0], [1], [0, 0, 1, 1], [], []>} : vector<320x64xbf16>, vector<64x128xbf16>, vector<320x128xf32> -> vector<320x128xf32>
    %cst_11 = arith.constant 0.000000e+00 : f32
    %29 = vector.broadcast %cst_11 : f32 to vector<320x128xf32>
    %30 = arith.maximumf %28, %29 : vector<320x128xf32>
    %31 = arith.truncf %30 : vector<320x128xf32> to vector<320x128xbf16>
    %cst_12 = arith.constant dense<0.000000e+00> : vector<256x128xf32>
    %32 = tpu.matmul %1, %31, %cst_12 {dimension_numbers = #tpu.dot_dimension_numbers<[1], [0], [0], [1], [0, 0, 1, 1], [], []>} : vector<256x320xbf16>, vector<320x128xbf16>, vector<256x128xf32> -> vector<256x128xf32>
    %cst_13 = arith.constant 0.000000e+00 : f32
    %33 = vector.broadcast %cst_13 : f32 to vector<256x128xf32>
    %34 = arith.maximumf %32, %33 : vector<256x128xf32>
    %35 = vector.extract_strided_slice %34 {offsets = [0, 0], sizes = [32, 128], strides = [1, 1]} : vector<256x128xf32> to vector<32x128xf32>
    %36 = arith.maximumf %26, %35 : vector<32x128xf32>
    %37 = vector.extract_strided_slice %34 {offsets = [32, 0], sizes = [32, 128], strides = [1, 1]} : vector<256x128xf32> to vector<32x128xf32>
    %38 = arith.maximumf %36, %37 : vector<32x128xf32>
    %39 = vector.extract_strided_slice %34 {offsets = [64, 0], sizes = [32, 128], strides = [1, 1]} : vector<256x128xf32> to vector<32x128xf32>
    %40 = arith.maximumf %38, %39 : vector<32x128xf32>
    %41 = vector.extract_strided_slice %34 {offsets = [96, 0], sizes = [32, 128], strides = [1, 1]} : vector<256x128xf32> to vector<32x128xf32>
    %42 = arith.maximumf %40, %41 : vector<32x128xf32>
    %43 = vector.extract_strided_slice %34 {offsets = [128, 0], sizes = [32, 128], strides = [1, 1]} : vector<256x128xf32> to vector<32x128xf32>
    %44 = arith.maximumf %42, %43 : vector<32x128xf32>
    %45 = vector.extract_strided_slice %34 {offsets = [160, 0], sizes = [32, 128], strides = [1, 1]} : vector<256x128xf32> to vector<32x128xf32>
    %46 = arith.maximumf %44, %45 : vector<32x128xf32>
    %47 = vector.extract_strided_slice %34 {offsets = [192, 0], sizes = [32, 128], strides = [1, 1]} : vector<256x128xf32> to vector<32x128xf32>
    %48 = arith.maximumf %46, %47 : vector<32x128xf32>
    %49 = vector.extract_strided_slice %34 {offsets = [224, 0], sizes = [32, 128], strides = [1, 1]} : vector<256x128xf32> to vector<32x128xf32>
    %50 = arith.maximumf %48, %49 : vector<32x128xf32>
    %c128 = arith.constant 128 : index
    %c0_14 = arith.constant 0 : index
    %51 = vector.load %arg1[%c128, %c0_14] : memref<512x128xbf16, #tpu.memory_space<vmem>>, vector<64x128xbf16>
    %cst_15 = arith.constant dense<0.000000e+00> : vector<320x128xf32>
    %52 = tpu.matmul %0, %51, %cst_15 {dimension_numbers = #tpu.dot_dimension_numbers<[1], [0], [0], [1], [0, 0, 1, 1], [], []>} : vector<320x64xbf16>, vector<64x128xbf16>, vector<320x128xf32> -> vector<320x128xf32>
    %cst_16 = arith.constant 0.000000e+00 : f32
    %53 = vector.broadcast %cst_16 : f32 to vector<320x128xf32>
    %54 = arith.maximumf %52, %53 : vector<320x128xf32>
    %55 = arith.truncf %54 : vector<320x128xf32> to vector<320x128xbf16>
    %cst_17 = arith.constant dense<0.000000e+00> : vector<256x128xf32>
    %56 = tpu.matmul %1, %55, %cst_17 {dimension_numbers = #tpu.dot_dimension_numbers<[1], [0], [0], [1], [0, 0, 1, 1], [], []>} : vector<256x320xbf16>, vector<320x128xbf16>, vector<256x128xf32> -> vector<256x128xf32>
    %cst_18 = arith.constant 0.000000e+00 : f32
    %57 = vector.broadcast %cst_18 : f32 to vector<256x128xf32>
    %58 = arith.maximumf %56, %57 : vector<256x128xf32>
    %59 = vector.extract_strided_slice %58 {offsets = [0, 0], sizes = [32, 128], strides = [1, 1]} : vector<256x128xf32> to vector<32x128xf32>
    %60 = arith.maximumf %50, %59 : vector<32x128xf32>
    %61 = vector.extract_strided_slice %58 {offsets = [32, 0], sizes = [32, 128], strides = [1, 1]} : vector<256x128xf32> to vector<32x128xf32>
    %62 = arith.maximumf %60, %61 : vector<32x128xf32>
    %63 = vector.extract_strided_slice %58 {offsets = [64, 0], sizes = [32, 128], strides = [1, 1]} : vector<256x128xf32> to vector<32x128xf32>
    %64 = arith.maximumf %62, %63 : vector<32x128xf32>
    %65 = vector.extract_strided_slice %58 {offsets = [96, 0], sizes = [32, 128], strides = [1, 1]} : vector<256x128xf32> to vector<32x128xf32>
    %66 = arith.maximumf %64, %65 : vector<32x128xf32>
    %67 = vector.extract_strided_slice %58 {offsets = [128, 0], sizes = [32, 128], strides = [1, 1]} : vector<256x128xf32> to vector<32x128xf32>
    %68 = arith.maximumf %66, %67 : vector<32x128xf32>
    %69 = vector.extract_strided_slice %58 {offsets = [160, 0], sizes = [32, 128], strides = [1, 1]} : vector<256x128xf32> to vector<32x128xf32>
    %70 = arith.maximumf %68, %69 : vector<32x128xf32>
    %71 = vector.extract_strided_slice %58 {offsets = [192, 0], sizes = [32, 128], strides = [1, 1]} : vector<256x128xf32> to vector<32x128xf32>
    %72 = arith.maximumf %70, %71 : vector<32x128xf32>
    %73 = vector.extract_strided_slice %58 {offsets = [224, 0], sizes = [32, 128], strides = [1, 1]} : vector<256x128xf32> to vector<32x128xf32>
    %74 = arith.maximumf %72, %73 : vector<32x128xf32>
    %c192 = arith.constant 192 : index
    %c0_19 = arith.constant 0 : index
    %75 = vector.load %arg1[%c192, %c0_19] : memref<512x128xbf16, #tpu.memory_space<vmem>>, vector<64x128xbf16>
    %cst_20 = arith.constant dense<0.000000e+00> : vector<320x128xf32>
    %76 = tpu.matmul %0, %75, %cst_20 {dimension_numbers = #tpu.dot_dimension_numbers<[1], [0], [0], [1], [0, 0, 1, 1], [], []>} : vector<320x64xbf16>, vector<64x128xbf16>, vector<320x128xf32> -> vector<320x128xf32>
    %cst_21 = arith.constant 0.000000e+00 : f32
    %77 = vector.broadcast %cst_21 : f32 to vector<320x128xf32>
    %78 = arith.maximumf %76, %77 : vector<320x128xf32>
    %79 = arith.truncf %78 : vector<320x128xf32> to vector<320x128xbf16>
    %cst_22 = arith.constant dense<0.000000e+00> : vector<256x128xf32>
    %80 = tpu.matmul %1, %79, %cst_22 {dimension_numbers = #tpu.dot_dimension_numbers<[1], [0], [0], [1], [0, 0, 1, 1], [], []>} : vector<256x320xbf16>, vector<320x128xbf16>, vector<256x128xf32> -> vector<256x128xf32>
    %cst_23 = arith.constant 0.000000e+00 : f32
    %81 = vector.broadcast %cst_23 : f32 to vector<256x128xf32>
    %82 = arith.maximumf %80, %81 : vector<256x128xf32>
    %83 = vector.extract_strided_slice %82 {offsets = [0, 0], sizes = [32, 128], strides = [1, 1]} : vector<256x128xf32> to vector<32x128xf32>
    %84 = arith.maximumf %74, %83 : vector<32x128xf32>
    %85 = vector.extract_strided_slice %82 {offsets = [32, 0], sizes = [32, 128], strides = [1, 1]} : vector<256x128xf32> to vector<32x128xf32>
    %86 = arith.maximumf %84, %85 : vector<32x128xf32>
    %87 = vector.extract_strided_slice %82 {offsets = [64, 0], sizes = [32, 128], strides = [1, 1]} : vector<256x128xf32> to vector<32x128xf32>
    %88 = arith.maximumf %86, %87 : vector<32x128xf32>
    %89 = vector.extract_strided_slice %82 {offsets = [96, 0], sizes = [32, 128], strides = [1, 1]} : vector<256x128xf32> to vector<32x128xf32>
    %90 = arith.maximumf %88, %89 : vector<32x128xf32>
    %91 = vector.extract_strided_slice %82 {offsets = [128, 0], sizes = [32, 128], strides = [1, 1]} : vector<256x128xf32> to vector<32x128xf32>
    %92 = arith.maximumf %90, %91 : vector<32x128xf32>
    %93 = vector.extract_strided_slice %82 {offsets = [160, 0], sizes = [32, 128], strides = [1, 1]} : vector<256x128xf32> to vector<32x128xf32>
    %94 = arith.maximumf %92, %93 : vector<32x128xf32>
    %95 = vector.extract_strided_slice %82 {offsets = [192, 0], sizes = [32, 128], strides = [1, 1]} : vector<256x128xf32> to vector<32x128xf32>
    %96 = arith.maximumf %94, %95 : vector<32x128xf32>
    %97 = vector.extract_strided_slice %82 {offsets = [224, 0], sizes = [32, 128], strides = [1, 1]} : vector<256x128xf32> to vector<32x128xf32>
    %98 = arith.maximumf %96, %97 : vector<32x128xf32>
    %c256 = arith.constant 256 : index
    %c0_24 = arith.constant 0 : index
    %99 = vector.load %arg1[%c256, %c0_24] : memref<512x128xbf16, #tpu.memory_space<vmem>>, vector<64x128xbf16>
    %cst_25 = arith.constant dense<0.000000e+00> : vector<320x128xf32>
    %100 = tpu.matmul %0, %99, %cst_25 {dimension_numbers = #tpu.dot_dimension_numbers<[1], [0], [0], [1], [0, 0, 1, 1], [], []>} : vector<320x64xbf16>, vector<64x128xbf16>, vector<320x128xf32> -> vector<320x128xf32>
    %cst_26 = arith.constant 0.000000e+00 : f32
    %101 = vector.broadcast %cst_26 : f32 to vector<320x128xf32>
    %102 = arith.maximumf %100, %101 : vector<320x128xf32>
    %103 = arith.truncf %102 : vector<320x128xf32> to vector<320x128xbf16>
    %cst_27 = arith.constant dense<0.000000e+00> : vector<256x128xf32>
    %104 = tpu.matmul %1, %103, %cst_27 {dimension_numbers = #tpu.dot_dimension_numbers<[1], [0], [0], [1], [0, 0, 1, 1], [], []>} : vector<256x320xbf16>, vector<320x128xbf16>, vector<256x128xf32> -> vector<256x128xf32>
    %cst_28 = arith.constant 0.000000e+00 : f32
    %105 = vector.broadcast %cst_28 : f32 to vector<256x128xf32>
    %106 = arith.maximumf %104, %105 : vector<256x128xf32>
    %107 = vector.extract_strided_slice %106 {offsets = [0, 0], sizes = [32, 128], strides = [1, 1]} : vector<256x128xf32> to vector<32x128xf32>
    %108 = arith.maximumf %98, %107 : vector<32x128xf32>
    %109 = vector.extract_strided_slice %106 {offsets = [32, 0], sizes = [32, 128], strides = [1, 1]} : vector<256x128xf32> to vector<32x128xf32>
    %110 = arith.maximumf %108, %109 : vector<32x128xf32>
    %111 = vector.extract_strided_slice %106 {offsets = [64, 0], sizes = [32, 128], strides = [1, 1]} : vector<256x128xf32> to vector<32x128xf32>
    %112 = arith.maximumf %110, %111 : vector<32x128xf32>
    %113 = vector.extract_strided_slice %106 {offsets = [96, 0], sizes = [32, 128], strides = [1, 1]} : vector<256x128xf32> to vector<32x128xf32>
    %114 = arith.maximumf %112, %113 : vector<32x128xf32>
    %115 = vector.extract_strided_slice %106 {offsets = [128, 0], sizes = [32, 128], strides = [1, 1]} : vector<256x128xf32> to vector<32x128xf32>
    %116 = arith.maximumf %114, %115 : vector<32x128xf32>
    %117 = vector.extract_strided_slice %106 {offsets = [160, 0], sizes = [32, 128], strides = [1, 1]} : vector<256x128xf32> to vector<32x128xf32>
    %118 = arith.maximumf %116, %117 : vector<32x128xf32>
    %119 = vector.extract_strided_slice %106 {offsets = [192, 0], sizes = [32, 128], strides = [1, 1]} : vector<256x128xf32> to vector<32x128xf32>
    %120 = arith.maximumf %118, %119 : vector<32x128xf32>
    %121 = vector.extract_strided_slice %106 {offsets = [224, 0], sizes = [32, 128], strides = [1, 1]} : vector<256x128xf32> to vector<32x128xf32>
    %122 = arith.maximumf %120, %121 : vector<32x128xf32>
    %c320 = arith.constant 320 : index
    %c0_29 = arith.constant 0 : index
    %123 = vector.load %arg1[%c320, %c0_29] : memref<512x128xbf16, #tpu.memory_space<vmem>>, vector<64x128xbf16>
    %cst_30 = arith.constant dense<0.000000e+00> : vector<320x128xf32>
    %124 = tpu.matmul %0, %123, %cst_30 {dimension_numbers = #tpu.dot_dimension_numbers<[1], [0], [0], [1], [0, 0, 1, 1], [], []>} : vector<320x64xbf16>, vector<64x128xbf16>, vector<320x128xf32> -> vector<320x128xf32>
    %cst_31 = arith.constant 0.000000e+00 : f32
    %125 = vector.broadcast %cst_31 : f32 to vector<320x128xf32>
    %126 = arith.maximumf %124, %125 : vector<320x128xf32>
    %127 = arith.truncf %126 : vector<320x128xf32> to vector<320x128xbf16>
    %cst_32 = arith.constant dense<0.000000e+00> : vector<256x128xf32>
    %128 = tpu.matmul %1, %127, %cst_32 {dimension_numbers = #tpu.dot_dimension_numbers<[1], [0], [0], [1], [0, 0, 1, 1], [], []>} : vector<256x320xbf16>, vector<320x128xbf16>, vector<256x128xf32> -> vector<256x128xf32>
    %cst_33 = arith.constant 0.000000e+00 : f32
    %129 = vector.broadcast %cst_33 : f32 to vector<256x128xf32>
    %130 = arith.maximumf %128, %129 : vector<256x128xf32>
    %131 = vector.extract_strided_slice %130 {offsets = [0, 0], sizes = [32, 128], strides = [1, 1]} : vector<256x128xf32> to vector<32x128xf32>
    %132 = arith.maximumf %122, %131 : vector<32x128xf32>
    %133 = vector.extract_strided_slice %130 {offsets = [32, 0], sizes = [32, 128], strides = [1, 1]} : vector<256x128xf32> to vector<32x128xf32>
    %134 = arith.maximumf %132, %133 : vector<32x128xf32>
    %135 = vector.extract_strided_slice %130 {offsets = [64, 0], sizes = [32, 128], strides = [1, 1]} : vector<256x128xf32> to vector<32x128xf32>
    %136 = arith.maximumf %134, %135 : vector<32x128xf32>
    %137 = vector.extract_strided_slice %130 {offsets = [96, 0], sizes = [32, 128], strides = [1, 1]} : vector<256x128xf32> to vector<32x128xf32>
    %138 = arith.maximumf %136, %137 : vector<32x128xf32>
    %139 = vector.extract_strided_slice %130 {offsets = [128, 0], sizes = [32, 128], strides = [1, 1]} : vector<256x128xf32> to vector<32x128xf32>
    %140 = arith.maximumf %138, %139 : vector<32x128xf32>
    %141 = vector.extract_strided_slice %130 {offsets = [160, 0], sizes = [32, 128], strides = [1, 1]} : vector<256x128xf32> to vector<32x128xf32>
    %142 = arith.maximumf %140, %141 : vector<32x128xf32>
    %143 = vector.extract_strided_slice %130 {offsets = [192, 0], sizes = [32, 128], strides = [1, 1]} : vector<256x128xf32> to vector<32x128xf32>
    %144 = arith.maximumf %142, %143 : vector<32x128xf32>
    %145 = vector.extract_strided_slice %130 {offsets = [224, 0], sizes = [32, 128], strides = [1, 1]} : vector<256x128xf32> to vector<32x128xf32>
    %146 = arith.maximumf %144, %145 : vector<32x128xf32>
    %c384 = arith.constant 384 : index
    %c0_34 = arith.constant 0 : index
    %147 = vector.load %arg1[%c384, %c0_34] : memref<512x128xbf16, #tpu.memory_space<vmem>>, vector<64x128xbf16>
    %cst_35 = arith.constant dense<0.000000e+00> : vector<320x128xf32>
    %148 = tpu.matmul %0, %147, %cst_35 {dimension_numbers = #tpu.dot_dimension_numbers<[1], [0], [0], [1], [0, 0, 1, 1], [], []>} : vector<320x64xbf16>, vector<64x128xbf16>, vector<320x128xf32> -> vector<320x128xf32>
    %cst_36 = arith.constant 0.000000e+00 : f32
    %149 = vector.broadcast %cst_36 : f32 to vector<320x128xf32>
    %150 = arith.maximumf %148, %149 : vector<320x128xf32>
    %151 = arith.truncf %150 : vector<320x128xf32> to vector<320x128xbf16>
    %cst_37 = arith.constant dense<0.000000e+00> : vector<256x128xf32>
    %152 = tpu.matmul %1, %151, %cst_37 {dimension_numbers = #tpu.dot_dimension_numbers<[1], [0], [0], [1], [0, 0, 1, 1], [], []>} : vector<256x320xbf16>, vector<320x128xbf16>, vector<256x128xf32> -> vector<256x128xf32>
    %cst_38 = arith.constant 0.000000e+00 : f32
    %153 = vector.broadcast %cst_38 : f32 to vector<256x128xf32>
    %154 = arith.maximumf %152, %153 : vector<256x128xf32>
    %155 = vector.extract_strided_slice %154 {offsets = [0, 0], sizes = [32, 128], strides = [1, 1]} : vector<256x128xf32> to vector<32x128xf32>
    %156 = arith.maximumf %146, %155 : vector<32x128xf32>
    %157 = vector.extract_strided_slice %154 {offsets = [32, 0], sizes = [32, 128], strides = [1, 1]} : vector<256x128xf32> to vector<32x128xf32>
    %158 = arith.maximumf %156, %157 : vector<32x128xf32>
    %159 = vector.extract_strided_slice %154 {offsets = [64, 0], sizes = [32, 128], strides = [1, 1]} : vector<256x128xf32> to vector<32x128xf32>
    %160 = arith.maximumf %158, %159 : vector<32x128xf32>
    %161 = vector.extract_strided_slice %154 {offsets = [96, 0], sizes = [32, 128], strides = [1, 1]} : vector<256x128xf32> to vector<32x128xf32>
    %162 = arith.maximumf %160, %161 : vector<32x128xf32>
    %163 = vector.extract_strided_slice %154 {offsets = [128, 0], sizes = [32, 128], strides = [1, 1]} : vector<256x128xf32> to vector<32x128xf32>
    %164 = arith.maximumf %162, %163 : vector<32x128xf32>
    %165 = vector.extract_strided_slice %154 {offsets = [160, 0], sizes = [32, 128], strides = [1, 1]} : vector<256x128xf32> to vector<32x128xf32>
    %166 = arith.maximumf %164, %165 : vector<32x128xf32>
    %167 = vector.extract_strided_slice %154 {offsets = [192, 0], sizes = [32, 128], strides = [1, 1]} : vector<256x128xf32> to vector<32x128xf32>
    %168 = arith.maximumf %166, %167 : vector<32x128xf32>
    %169 = vector.extract_strided_slice %154 {offsets = [224, 0], sizes = [32, 128], strides = [1, 1]} : vector<256x128xf32> to vector<32x128xf32>
    %170 = arith.maximumf %168, %169 : vector<32x128xf32>
    %c448 = arith.constant 448 : index
    %c0_39 = arith.constant 0 : index
    %171 = vector.load %arg1[%c448, %c0_39] : memref<512x128xbf16, #tpu.memory_space<vmem>>, vector<64x128xbf16>
    %cst_40 = arith.constant dense<0.000000e+00> : vector<320x128xf32>
    %172 = tpu.matmul %0, %171, %cst_40 {dimension_numbers = #tpu.dot_dimension_numbers<[1], [0], [0], [1], [0, 0, 1, 1], [], []>} : vector<320x64xbf16>, vector<64x128xbf16>, vector<320x128xf32> -> vector<320x128xf32>
    %cst_41 = arith.constant 0.000000e+00 : f32
    %173 = vector.broadcast %cst_41 : f32 to vector<320x128xf32>
    %174 = arith.maximumf %172, %173 : vector<320x128xf32>
    %175 = arith.truncf %174 : vector<320x128xf32> to vector<320x128xbf16>
    %cst_42 = arith.constant dense<0.000000e+00> : vector<256x128xf32>
    %176 = tpu.matmul %1, %175, %cst_42 {dimension_numbers = #tpu.dot_dimension_numbers<[1], [0], [0], [1], [0, 0, 1, 1], [], []>} : vector<256x320xbf16>, vector<320x128xbf16>, vector<256x128xf32> -> vector<256x128xf32>
    %cst_43 = arith.constant 0.000000e+00 : f32
    %177 = vector.broadcast %cst_43 : f32 to vector<256x128xf32>
    %178 = arith.maximumf %176, %177 : vector<256x128xf32>
    %179 = vector.extract_strided_slice %178 {offsets = [0, 0], sizes = [32, 128], strides = [1, 1]} : vector<256x128xf32> to vector<32x128xf32>
    %180 = arith.maximumf %170, %179 : vector<32x128xf32>
    %181 = vector.extract_strided_slice %178 {offsets = [32, 0], sizes = [32, 128], strides = [1, 1]} : vector<256x128xf32> to vector<32x128xf32>
    %182 = arith.maximumf %180, %181 : vector<32x128xf32>
    %183 = vector.extract_strided_slice %178 {offsets = [64, 0], sizes = [32, 128], strides = [1, 1]} : vector<256x128xf32> to vector<32x128xf32>
    %184 = arith.maximumf %182, %183 : vector<32x128xf32>
    %185 = vector.extract_strided_slice %178 {offsets = [96, 0], sizes = [32, 128], strides = [1, 1]} : vector<256x128xf32> to vector<32x128xf32>
    %186 = arith.maximumf %184, %185 : vector<32x128xf32>
    %187 = vector.extract_strided_slice %178 {offsets = [128, 0], sizes = [32, 128], strides = [1, 1]} : vector<256x128xf32> to vector<32x128xf32>
    %188 = arith.maximumf %186, %187 : vector<32x128xf32>
    %189 = vector.extract_strided_slice %178 {offsets = [160, 0], sizes = [32, 128], strides = [1, 1]} : vector<256x128xf32> to vector<32x128xf32>
    %190 = arith.maximumf %188, %189 : vector<32x128xf32>
    %191 = vector.extract_strided_slice %178 {offsets = [192, 0], sizes = [32, 128], strides = [1, 1]} : vector<256x128xf32> to vector<32x128xf32>
    %192 = arith.maximumf %190, %191 : vector<32x128xf32>
    %193 = vector.extract_strided_slice %178 {offsets = [224, 0], sizes = [32, 128], strides = [1, 1]} : vector<256x128xf32> to vector<32x128xf32>
    %194 = arith.maximumf %192, %193 : vector<32x128xf32>
    %c0_44 = arith.constant 0 : index
    %c0_45 = arith.constant 0 : index
    %195 = vector.load %arg4[%c0_44, %c0_45] : memref<32x128xf32, #tpu.memory_space<vmem>>, vector<32x128xf32>
    tpu.vector_store %arg4[%c0_44, %c0_45], %194 {strides = array<i32>} : memref<32x128xf32, #tpu.memory_space<vmem>>, vector<32x128xf32>,
    return
  }
  func.func @transform_0(%arg0: i32) -> (i32, i32) {
    %c0_i32 = arith.constant 0 : i32
    %c0_i32_0 = arith.constant 0 : i32
    return %c0_i32, %arg0 : i32, i32
  }
  func.func @transform_1(%arg0: i32) -> (i32, i32) {
    %c0_i32 = arith.constant 0 : i32
    %c0_i32_0 = arith.constant 0 : i32
    %c0_i32_1 = arith.constant 0 : i32
    return %c0_i32, %c0_i32_0 : i32, i32
  }
  func.func @transform_2(%arg0: i32) -> (i32, i32) {
    %c0_i32 = arith.constant 0 : i32
    %c0_i32_0 = arith.constant 0 : i32
    %c0_i32_1 = arith.constant 0 : i32
    return %c0_i32, %c0_i32_0 : i32, i32
  }
  func.func @transform_3(%arg0: i32) -> (i32, i32) {
    %c0_i32 = arith.constant 0 : i32
    %c0_i32_0 = arith.constant 0 : i32
    return %c0_i32, %arg0 : i32, i32
  }
}

</mosaic_0001>

<llo_original>
// kernel: tpu_custom_call.1
$region0: #{tpu_custom_call.1}
  #allocation0 [shape = 'u32[]', space=smem, size = 0x4, offset = 0x4, fixed_abs, tag = 'smem constant byte address 0x4 - core index']
  #allocation1 [shape = 'u32[144,128]{1,0:T(1,128)}', space=vmem, size = 0x12000, scoped, tag = 'internal scratch']
  %s0 = inlined_call_operand.vmem [shape: bf16[512,128], index: 0, kind: input, shape index: {}]
  %s1 = inlined_call_operand.vmem [shape: bf16[320,64], index: 1, kind: input, shape index: {}]
  %s2 = inlined_call_operand.vmem [shape: bf16[256,320], index: 2, kind: input, shape index: {}]
  %s3 = inlined_call_operand.hbm [shape: f32[32,128], index: 3, kind: output, shape index: {}]
  %s4 = sld [smem:[#allocation0]]
  $region22: #{tpu_custom_call.1} parent=0
    _
  %s6 = ssub.s32 1, %s4
  %s7 = scalar_select 0, %s6, %s4
  $region1: #{tpu_custom_call.1} parent=0
    #allocation2 [shape = 'u8[16384]{0}', space=vmem, size = 0x4000, scoped, tag = 'output window, operand 0, single buffered']
    #allocation3 [shape = 's32[1]{0}', space=sflag, size = 0x4, scoped, tag = 'scoped memory for tpu_custom_call.1']
    %8 = vsyncpa [#allocation3], 0
    // Predicated region
    $region2: #{tpu_custom_call.1} parent=1 // pred_check
      _
    $region3: #{tpu_custom_call.1} parent=1 // pred_check_branch
      %10 = sbr.rel (0) target = $region5
    $region4: #{tpu_custom_call.1} parent=1 // pred_region
      _
    $region5: #{tpu_custom_call.1} parent=1 // pred_fallthru
      _
    // Predicated region
    $region6: #{tpu_custom_call.1} parent=1 // pred_check
      _
    $region7: #{tpu_custom_call.1} parent=1 // pred_check_branch
      %12 = sbr.rel (0) target = $region9
    $region8: #{tpu_custom_call.1} parent=1 // pred_region
      _
    $region9: #{tpu_custom_call.1} parent=1 // pred_fallthru
      _
    // Predicated region
    $region10: #{tpu_custom_call.1} parent=1 // pred_check
      _
    $region11: #{tpu_custom_call.1} parent=1 // pred_check_branch
      %14 = sbr.rel (0) target = $region13
    $region12: #{tpu_custom_call.1} parent=1 // pred_region
      _
    $region13: #{tpu_custom_call.1} parent=1 // pred_fallthru
      _
    %v16 = vld [vmem:[%s1] sm:$0xf]
    %v17 = vld [vmem:[%s1 + $0x4] sm:$0xf]
    %v18 = vld [vmem:[%s1 + $0x8] sm:$0xf]
    %v19 = vld [vmem:[%s1 + $0xc] sm:$0xf]
    %v20 = vld [vmem:[%s1 + $0x10] sm:$0xf]
    %v21 = vld [vmem:[%s1 + $0x14] sm:$0xf]
    %v22 = vld [vmem:[%s1 + $0x18] sm:$0xf]
    %v23 = vld [vmem:[%s1 + $0x1c] sm:$0xf]
    %v24 = vld [vmem:[%s1 + $0x20] sm:$0xf]
    %v25 = vld [vmem:[%s1 + $0x24] sm:$0xf]
    %v26 = vld [vmem:[%s1 + $0x28] sm:$0xf]
    %v27 = vld [vmem:[%s1 + $0x2c] sm:$0xf]
    %v28 = vld [vmem:[%s1 + $0x30] sm:$0xf]
    %v29 = vld [vmem:[%s1 + $0x34] sm:$0xf]
    %v30 = vld [vmem:[%s1 + $0x38] sm:$0xf]
    %v31 = vld [vmem:[%s1 + $0x3c] sm:$0xf]
    %v32 = vld [vmem:[%s1 + $0x40] sm:$0xf]
    %v33 = vld [vmem:[%s1 + $0x44] sm:$0xf]
    %v34 = vld [vmem:[%s1 + $0x48] sm:$0xf]
    %v35 = vld [vmem:[%s1 + $0x4c] sm:$0xf]
    %v36 = vld [vmem:[%s1 + $0x50] sm:$0xf]
    %v37 = vld [vmem:[%s1 + $0x54] sm:$0xf]
    %v38 = vld [vmem:[%s1 + $0x58] sm:$0xf]
    %v39 = vld [vmem:[%s1 + $0x5c] sm:$0xf]
    %v40 = vld [vmem:[%s1 + $0x60] sm:$0xf]
    %v41 = vld [vmem:[%s1 + $0x64] sm:$0xf]
    %v42 = vld [vmem:[%s1 + $0x68] sm:$0xf]
    %v43 = vld [vmem:[%s1 + $0x6c] sm:$0xf]
    %v44 = vld [vmem:[%s1 + $0x70] sm:$0xf]
    %v45 = vld [vmem:[%s1 + $0x74] sm:$0xf]
    %v46 = vld [vmem:[%s1 + $0x78] sm:$0xf]
    %v47 = vld [vmem:[%s1 + $0x7c] sm:$0xf]
    %v48 = vld [vmem:[%s1 + $0x80] sm:$0xf]
    %v49 = vld [vmem:[%s1 + $0x84] sm:$0xf]
    %v50 = vld [vmem:[%s1 + $0x88] sm:$0xf]
    %v51 = vld [vmem:[%s1 + $0x8c] sm:$0xf]
    %v52 = vld [vmem:[%s1 + $0x90] sm:$0xf]
    %v53 = vld [vmem:[%s1 + $0x94] sm:$0xf]
    %v54 = vld [vmem:[%s1 + $0x98] sm:$0xf]
    %v55 = vld [vmem:[%s1 + $0x9c] sm:$0xf]
    %v56 = vld [vmem:[%s2] sm:$0xff]
    %v57 = vld [vmem:[%s2 + $0x8] sm:$0xf]
    %v58 = vld [vmem:[%s2 + $0xc] sm:$0xff]
    %v59 = vld [vmem:[%s2 + $0x14] sm:$0xf]
    %v60 = vld [vmem:[%s2 + $0x18] sm:$0xff]
    %v61 = vld [vmem:[%s2 + $0x20] sm:$0xf]
    %v62 = vld [vmem:[%s2 + $0x24] sm:$0xff]
    %v63 = vld [vmem:[%s2 + $0x2c] sm:$0xf]
    %v64 = vld [vmem:[%s2 + $0x30] sm:$0xff]
    %v65 = vld [vmem:[%s2 + $0x38] sm:$0xf]
    %v66 = vld [vmem:[%s2 + $0x3c] sm:$0xff]
    %v67 = vld [vmem:[%s2 + $0x44] sm:$0xf]
    %v68 = vld [vmem:[%s2 + $0x48] sm:$0xff]
    %v69 = vld [vmem:[%s2 + $0x50] sm:$0xf]
    %v70 = vld [vmem:[%s2 + $0x54] sm:$0xff]
    %v71 = vld [vmem:[%s2 + $0x5c] sm:$0xf]
    %v72 = vld [vmem:[%s2 + $0x60] sm:$0xff]
    %v73 = vld [vmem:[%s2 + $0x68] sm:$0xf]
    %v74 = vld [vmem:[%s2 + $0x6c] sm:$0xff]
    %v75 = vld [vmem:[%s2 + $0x74] sm:$0xf]
    %v76 = vld [vmem:[%s2 + $0x78] sm:$0xff]
    %v77 = vld [vmem:[%s2 + $0x80] sm:$0xf]
    %v78 = vld [vmem:[%s2 + $0x84] sm:$0xff]
    %v79 = vld [vmem:[%s2 + $0x8c] sm:$0xf]
    %v80 = vld [vmem:[%s2 + $0x90] sm:$0xff]
    %v81 = vld [vmem:[%s2 + $0x98] sm:$0xf]
    %v82 = vld [vmem:[%s2 + $0x9c] sm:$0xff]
    %v83 = vld [vmem:[%s2 + $0xa4] sm:$0xf]
    %v84 = vld [vmem:[%s2 + $0xa8] sm:$0xff]
    %v85 = vld [vmem:[%s2 + $0xb0] sm:$0xf]
    %v86 = vld [vmem:[%s2 + $0xb4] sm:$0xff]
    %v87 = vld [vmem:[%s2 + $0xbc] sm:$0xf]
    %v88 = vld [vmem:[%s2 + $0xc0] sm:$0xff]
    %v89 = vld [vmem:[%s2 + $0xc8] sm:$0xf]
    %v90 = vld [vmem:[%s2 + $0xcc] sm:$0xff]
    %v91 = vld [vmem:[%s2 + $0xd4] sm:$0xf]
    %v92 = vld [vmem:[%s2 + $0xd8] sm:$0xff]
    %v93 = vld [vmem:[%s2 + $0xe0] sm:$0xf]
    %v94 = vld [vmem:[%s2 + $0xe4] sm:$0xff]
    %v95 = vld [vmem:[%s2 + $0xec] sm:$0xf]
    %v96 = vld [vmem:[%s2 + $0xf0] sm:$0xff]
    %v97 = vld [vmem:[%s2 + $0xf8] sm:$0xf]
    %v98 = vld [vmem:[%s2 + $0xfc] sm:$0xff]
    %v99 = vld [vmem:[%s2 + $0x104] sm:$0xf]
    %v100 = vld [vmem:[%s2 + $0x108] sm:$0xff]
    %v101 = vld [vmem:[%s2 + $0x110] sm:$0xf]
    %v102 = vld [vmem:[%s2 + $0x114] sm:$0xff]
    %v103 = vld [vmem:[%s2 + $0x11c] sm:$0xf]
    %v104 = vld [vmem:[%s2 + $0x120] sm:$0xff]
    %v105 = vld [vmem:[%s2 + $0x128] sm:$0xf]
    %v106 = vld [vmem:[%s2 + $0x12c] sm:$0xff]
    %v107 = vld [vmem:[%s2 + $0x134] sm:$0xf]
    %v108 = vld [vmem:[%s2 + $0x138] sm:$0xff]
    %v109 = vld [vmem:[%s2 + $0x140] sm:$0xf]
    %v110 = vld [vmem:[%s2 + $0x144] sm:$0xff]
    %v111 = vld [vmem:[%s2 + $0x14c] sm:$0xf]
    %v112 = vld [vmem:[%s2 + $0x150] sm:$0xff]
    %v113 = vld [vmem:[%s2 + $0x158] sm:$0xf]
    %v114 = vld [vmem:[%s2 + $0x15c] sm:$0xff]
    %v115 = vld [vmem:[%s2 + $0x164] sm:$0xf]
    %v116 = vld [vmem:[%s2 + $0x168] sm:$0xff]
    %v117 = vld [vmem:[%s2 + $0x170] sm:$0xf]
    %v118 = vld [vmem:[%s2 + $0x174] sm:$0xff]
    %v119 = vld [vmem:[%s2 + $0x17c] sm:$0xf]
    %v120 = vld [vmem:[%s0] sm:$0xf]
    %v121 = vld [vmem:[%s0 + $0x4] sm:$0xf]
    %v122 = vld [vmem:[%s0 + $0x8] sm:$0xf]
    %v123 = vld [vmem:[%s0 + $0xc] sm:$0xf]
    %v124 = vld [vmem:[%s0 + $0x10] sm:$0xf]
    %v125 = vld [vmem:[%s0 + $0x14] sm:$0xf]
    %v126 = vld [vmem:[%s0 + $0x18] sm:$0xf]
    %v127 = vld [vmem:[%s0 + $0x1c] sm:$0xf]
    %v168 = vunpack.c.l.b16 %v16
    %v169 = vunpack.c.l.b16 %v17
    %v170 = vunpack.c.l.b16 %v18
    %v171 = vunpack.c.l.b16 %v19
    %v172 = vunpack.c.l.b16 %v20
    %v173 = vunpack.c.l.b16 %v21
    %v174 = vunpack.c.l.b16 %v22
    %v175 = vunpack.c.l.b16 %v23
    %v176 = vunpack.c.l.b16 %v24
    %v177 = vunpack.c.l.b16 %v25
    %v178 = vunpack.c.l.b16 %v26
    %v179 = vunpack.c.l.b16 %v27
    %v180 = vunpack.c.l.b16 %v28
    %v181 = vunpack.c.l.b16 %v29
    %v182 = vunpack.c.l.b16 %v30
    %v183 = vunpack.c.l.b16 %v31
    %v184 = vunpack.c.l.b16 %v32
    %v185 = vunpack.c.l.b16 %v33
    %v186 = vunpack.c.l.b16 %v34
    %v187 = vunpack.c.l.b16 %v35
    %v188 = vunpack.c.l.b16 %v36
    %v189 = vunpack.c.l.b16 %v37
    %v190 = vunpack.c.l.b16 %v38
    %v191 = vunpack.c.l.b16 %v39
    %v192 = vunpack.c.l.b16 %v40
    %v193 = vunpack.c.l.b16 %v41
    %v194 = vunpack.c.l.b16 %v42
    %v195 = vunpack.c.l.b16 %v43
    %v196 = vunpack.c.l.b16 %v44
    %v197 = vunpack.c.l.b16 %v45
    %v198 = vunpack.c.l.b16 %v46
    %v199 = vunpack.c.l.b16 %v47
    %v200 = vunpack.c.l.b16 %v48
    %v201 = vunpack.c.l.b16 %v49
    %v202 = vunpack.c.l.b16 %v50
    %v203 = vunpack.c.l.b16 %v51
    %v204 = vunpack.c.l.b16 %v52
    %v205 = vunpack.c.l.b16 %v53
    %v206 = vunpack.c.l.b16 %v54
    %v207 = vunpack.c.l.b16 %v55
    %v208 = vpack.c.b16 %v169, %v168
    %v209 = vpack.c.b16 %v171, %v170
    %v210 = vpack.c.b16 %v173, %v172
    %v211 = vpack.c.b16 %v175, %v174
    %v212 = vpack.c.b16 %v177, %v176
    %v213 = vpack.c.b16 %v179, %v178
    %v214 = vpack.c.b16 %v181, %v180
    %v215 = vpack.c.b16 %v183, %v182
    %v216 = vpack.c.b16 %v185, %v184
    %v217 = vpack.c.b16 %v187, %v186
    %v218 = vpack.c.b16 %v189, %v188
    %v219 = vpack.c.b16 %v191, %v190
    %v220 = vpack.c.b16 %v193, %v192
    %v221 = vpack.c.b16 %v195, %v194
    %v222 = vpack.c.b16 %v197, %v196
    %v223 = vpack.c.b16 %v199, %v198
    %v224 = vpack.c.b16 %v201, %v200
    %v225 = vpack.c.b16 %v203, %v202
    %v226 = vpack.c.b16 %v205, %v204
    %v227 = vpack.c.b16 %v207, %v206
    %v236 = vunpack.c.l.b16 %v120
    %v237 = vunpack.c.l.b16 %v121
    %v238 = vunpack.c.l.b16 %v122
    %v239 = vunpack.c.l.b16 %v123
    %v240 = vunpack.c.l.b16 %v124
    %v241 = vunpack.c.l.b16 %v125
    %v242 = vunpack.c.l.b16 %v126
    %v243 = vunpack.c.l.b16 %v127
    %v244 = vpack.c.b16 %v237, %v236
    %v245 = vpack.c.b16 %v239, %v238
    %v246 = vpack.c.b16 %v241, %v240
    %v247 = vpack.c.b16 %v243, %v242
    %vm252 = vcmask 523264
    %v254 = vsel %vm252, %v208, 0
    %v257 = vsel %vm252, %v209, 0
    %v260 = vsel %vm252, %v210, 0
    %v263 = vsel %vm252, %v211, 0
    %v266 = vsel %vm252, %v212, 0
    %v269 = vsel %vm252, %v213, 0
    %v272 = vsel %vm252, %v214, 0
    %v275 = vsel %vm252, %v215, 0
    %v278 = vsel %vm252, %v216, 0
    %v281 = vsel %vm252, %v217, 0
    %v284 = vsel %vm252, %v218, 0
    %v287 = vsel %vm252, %v219, 0
    %v290 = vsel %vm252, %v220, 0
    %v293 = vsel %vm252, %v221, 0
    %v296 = vsel %vm252, %v222, 0
    %v299 = vsel %vm252, %v223, 0
    %v302 = vsel %vm252, %v224, 0
    %v305 = vsel %vm252, %v225, 0
    %v308 = vsel %vm252, %v226, 0
    %v311 = vsel %vm252, %v227, 0
    %313 = vmatprep.subr.bf16.mxu0 0
    %314 = vmatpush1.bf16.msra.mxu0 %v244
    %315 = vmatprep.subr.bf16.mxu0 0
    %316 = vmatpush1.bf16.msra.mxu0 %v245
    %317 = vmatprep.subr.bf16.mxu0 0
    %318 = vmatpush1.bf16.msra.mxu0 %v246
    %319 = vmatprep.subr.bf16.mxu0 0
    %320 = vmatpush1.bf16.msra.mxu0 %v247
    %321 = vmatprep.subr.bf16.mxu0 0
    %322 = vmatpush1.bf16.msra.mxu0 0
    %323 = vmatprep.subr.bf16.mxu0 0
    %324 = vmatpush1.bf16.msra.mxu0 0
    %325 = vmatprep.subr.bf16.mxu0 0
    %326 = vmatpush1.bf16.msra.mxu0 0
    %327 = vmatprep.subr.bf16.mxu0 0
    %328 = vmatpush1.bf16.msra.mxu0 0
    %329 = vmatprep.subr.bf16.mxu0 0
    %330 = vmatpush1.bf16.msra.mxu0 0
    %331 = vmatprep.subr.bf16.mxu0 0
    %332 = vmatpush1.bf16.msra.mxu0 0
    %333 = vmatprep.subr.bf16.mxu0 0
    %334 = vmatpush1.bf16.msra.mxu0 0
    %335 = vmatprep.subr.bf16.mxu0 0
    %336 = vmatpush1.bf16.msra.mxu0 0
    %337 = vmatprep.subr.bf16.mxu0 0
    %338 = vmatpush1.bf16.msra.mxu0 0
    %339 = vmatprep.subr.bf16.mxu0 0
    %340 = vmatpush1.bf16.msra.mxu0 0
    %341 = vmatprep.subr.bf16.mxu0 0
    %342 = vmatpush1.bf16.msra.mxu0 0
    %343 = vmatprep.subr.bf16.mxu0 0
    %344 = vmatpush1.bf16.msra.mxu0 0
    %345 = vmatprep.mubr.bf16.mxu0 0
    %346 = vmatmul.mubr.bf16.gmra.mrb[0].mxu0 %v254
    %v347 = vpop.f32.mrb[0].mxu0
    %v348 = vadd.f32 0.0, %v347
    %v349 = vpop.f32.mrb[0].mxu0
    %v350 = vpop.f32.mrb[0].mxu0
    %v351 = vadd.f32 0.0, %v350
    %v352 = vpop.f32.mrb[0].mxu0
    %353 = vmatprep.mubr.bf16.mxu0 0
    %354 = vmatmul.mubr.bf16.gmra.mrb[0].mxu0 %v257
    %v355 = vpop.f32.mrb[0].mxu0
    %v356 = vadd.f32 0.0, %v355
    %v357 = vpop.f32.mrb[0].mxu0
    %v358 = vpop.f32.mrb[0].mxu0
    %v359 = vadd.f32 0.0, %v358
    %v360 = vpop.f32.mrb[0].mxu0
    %361 = vmatprep.mubr.bf16.mxu0 0
    %362 = vmatmul.mubr.bf16.gmra.mrb[0].mxu0 %v260
    %v363 = vpop.f32.mrb[0].mxu0
    %v364 = vadd.f32 0.0, %v363
    %v365 = vpop.f32.mrb[0].mxu0
    %v366 = vpop.f32.mrb[0].mxu0
    %v367 = vadd.f32 0.0, %v366
    %v368 = vpop.f32.mrb[0].mxu0
    %369 = vmatprep.mubr.bf16.mxu0 0
    %370 = vmatmul.mubr.bf16.gmra.mrb[0].mxu0 %v263
    %v371 = vpop.f32.mrb[0].mxu0
    %v372 = vadd.f32 0.0, %v371
    %v373 = vpop.f32.mrb[0].mxu0
    %v374 = vpop.f32.mrb[0].mxu0
    %v375 = vadd.f32 0.0, %v374
    %v376 = vpop.f32.mrb[0].mxu0
    %377 = vmatprep.mubr.bf16.mxu0 0
    %378 = vmatmul.mubr.bf16.gmra.mrb[0].mxu0 %v266
    %v379 = vpop.f32.mrb[0].mxu0
    %v380 = vadd.f32 0.0, %v379
    %v381 = vpop.f32.mrb[0].mxu0
    %v382 = vpop.f32.mrb[0].mxu0
    %v383 = vadd.f32 0.0, %v382
    %v384 = vpop.f32.mrb[0].mxu0
    %385 = vmatprep.mubr.bf16.mxu0 0
    %386 = vmatmul.mubr.bf16.gmra.mrb[0].mxu0 %v269
    %v387 = vpop.f32.mrb[0].mxu0
    %v388 = vadd.f32 0.0, %v387
    %v389 = vpop.f32.mrb[0].mxu0
    %v390 = vpop.f32.mrb[0].mxu0
    %v391 = vadd.f32 0.0, %v390
    %v392 = vpop.f32.mrb[0].mxu0
    %393 = vmatprep.mubr.bf16.mxu0 0
    %394 = vmatmul.mubr.bf16.gmra.mrb[0].mxu0 %v272
    %v395 = vpop.f32.mrb[0].mxu0
    %v396 = vadd.f32 0.0, %v395
    %v397 = vpop.f32.mrb[0].mxu0
    %v398 = vpop.f32.mrb[0].mxu0
    %v399 = vadd.f32 0.0, %v398
    %v400 = vpop.f32.mrb[0].mxu0
    %401 = vmatprep.mubr.bf16.mxu0 0
    %402 = vmatmul.mubr.bf16.gmra.mrb[0].mxu0 %v275
    %v403 = vpop.f32.mrb[0].mxu0
    %v404 = vadd.f32 0.0, %v403
    %v405 = vpop.f32.mrb[0].mxu0
    %v406 = vpop.f32.mrb[0].mxu0
    %v407 = vadd.f32 0.0, %v406
    %v408 = vpop.f32.mrb[0].mxu0
    %409 = vmatprep.mubr.bf16.mxu0 0
    %410 = vmatmul.mubr.bf16.gmra.mrb[0].mxu0 %v278
    %v411 = vpop.f32.mrb[0].mxu0
    %v412 = vadd.f32 0.0, %v411
    %v413 = vpop.f32.mrb[0].mxu0
    %v414 = vpop.f32.mrb[0].mxu0
    %v415 = vadd.f32 0.0, %v414
    %v416 = vpop.f32.mrb[0].mxu0
    %417 = vmatprep.mubr.bf16.mxu0 0
    %418 = vmatmul.mubr.bf16.gmra.mrb[0].mxu0 %v281
    %v419 = vpop.f32.mrb[0].mxu0
    %v420 = vadd.f32 0.0, %v419
    %v421 = vpop.f32.mrb[0].mxu0
    %v422 = vpop.f32.mrb[0].mxu0
    %v423 = vadd.f32 0.0, %v422
    %v424 = vpop.f32.mrb[0].mxu0
    %425 = vmatprep.mubr.bf16.mxu0 0
    %426 = vmatmul.mubr.bf16.gmra.mrb[0].mxu0 %v284
    %v427 = vpop.f32.mrb[0].mxu0
    %v428 = vadd.f32 0.0, %v427
    %v429 = vpop.f32.mrb[0].mxu0
    %v430 = vpop.f32.mrb[0].mxu0
    %v431 = vadd.f32 0.0, %v430
    %v432 = vpop.f32.mrb[0].mxu0
    %433 = vmatprep.mubr.bf16.mxu0 0
    %434 = vmatmul.mubr.bf16.gmra.mrb[0].mxu0 %v287
    %v435 = vpop.f32.mrb[0].mxu0
    %v436 = vadd.f32 0.0, %v435
    %v437 = vpop.f32.mrb[0].mxu0
    %v438 = vpop.f32.mrb[0].mxu0
    %v439 = vadd.f32 0.0, %v438
    %v440 = vpop.f32.mrb[0].mxu0
    %441 = vmatprep.mubr.bf16.mxu0 0
    %442 = vmatmul.mubr.bf16.gmra.mrb[0].mxu0 %v290
    %v443 = vpop.f32.mrb[0].mxu0
    %v444 = vadd.f32 0.0, %v443
    %v445 = vpop.f32.mrb[0].mxu0
    %v446 = vpop.f32.mrb[0].mxu0
    %v447 = vadd.f32 0.0, %v446
    %v448 = vpop.f32.mrb[0].mxu0
    %449 = vmatprep.mubr.bf16.mxu0 0
    %450 = vmatmul.mubr.bf16.gmra.mrb[0].mxu0 %v293
    %v451 = vpop.f32.mrb[0].mxu0
    %v452 = vadd.f32 0.0, %v451
    %v453 = vpop.f32.mrb[0].mxu0
    %v454 = vpop.f32.mrb[0].mxu0
    %v455 = vadd.f32 0.0, %v454
    %v456 = vpop.f32.mrb[0].mxu0
    %457 = vmatprep.mubr.bf16.mxu0 0
    %458 = vmatmul.mubr.bf16.gmra.mrb[0].mxu0 %v296
    %v459 = vpop.f32.mrb[0].mxu0
    %v460 = vadd.f32 0.0, %v459
    %v461 = vpop.f32.mrb[0].mxu0
    %v462 = vpop.f32.mrb[0].mxu0
    %v463 = vadd.f32 0.0, %v462
    %v464 = vpop.f32.mrb[0].mxu0
    %465 = vmatprep.mubr.bf16.mxu0 0
    %466 = vmatmul.mubr.bf16.gmra.mrb[0].mxu0 %v299
    %v467 = vpop.f32.mrb[0].mxu0
    %v468 = vadd.f32 0.0, %v467
    %v469 = vpop.f32.mrb[0].mxu0
    %v470 = vpop.f32.mrb[0].mxu0
    %v471 = vadd.f32 0.0, %v470
    %v472 = vpop.f32.mrb[0].mxu0
    %473 = vmatprep.mubr.bf16.mxu0 0
    %474 = vmatmul.mubr.bf16.gmra.mrb[0].mxu0 %v302
    %v475 = vpop.f32.mrb[0].mxu0
    %v476 = vadd.f32 0.0, %v475
    %v477 = vpop.f32.mrb[0].mxu0
    %v478 = vpop.f32.mrb[0].mxu0
    %v479 = vadd.f32 0.0, %v478
    %v480 = vpop.f32.mrb[0].mxu0
    %481 = vmatprep.mubr.bf16.mxu0 0
    %482 = vmatmul.mubr.bf16.gmra.mrb[0].mxu0 %v305
    %v483 = vpop.f32.mrb[0].mxu0
    %v484 = vadd.f32 0.0, %v483
    %v485 = vpop.f32.mrb[0].mxu0
    %v486 = vpop.f32.mrb[0].mxu0
    %v487 = vadd.f32 0.0, %v486
    %v488 = vpop.f32.mrb[0].mxu0
    %489 = vmatprep.mubr.bf16.mxu0 0
    %490 = vmatmul.mubr.bf16.gmra.mrb[0].mxu0 %v308
    %v491 = vpop.f32.mrb[0].mxu0
    %v492 = vadd.f32 0.0, %v491
    %v493 = vpop.f32.mrb[0].mxu0
    %v494 = vpop.f32.mrb[0].mxu0
    %v495 = vadd.f32 0.0, %v494
    %v496 = vpop.f32.mrb[0].mxu0
    %497 = vmatprep.mubr.bf16.mxu0 0
    %498 = vmatmul.mubr.bf16.gmra.mrb[0].mxu0 %v311
    %v499 = vpop.f32.mrb[0].mxu0
    %v500 = vadd.f32 0.0, %v499
    %v501 = vpop.f32.mrb[0].mxu0
    %v502 = vpop.f32.mrb[0].mxu0
    %v503 = vadd.f32 0.0, %v502
    %v504 = vpop.f32.mrb[0].mxu0
    %505 = vdwg.mxu0
    %v506 = vmax.f32 %v348, 0.0
    %v507 = vmax.f32 %v351, 0.0
    %v508 = vmax.f32 %v356, 0.0
    %v509 = vmax.f32 %v359, 0.0
    %v510 = vmax.f32 %v364, 0.0
    %v511 = vmax.f32 %v367, 0.0
    %v512 = vmax.f32 %v372, 0.0
    %v513 = vmax.f32 %v375, 0.0
    %v514 = vmax.f32 %v380, 0.0
    %v515 = vmax.f32 %v383, 0.0
    %v516 = vmax.f32 %v388, 0.0
    %v517 = vmax.f32 %v391, 0.0
    %v518 = vmax.f32 %v396, 0.0
    %v519 = vmax.f32 %v399, 0.0
    %v520 = vmax.f32 %v404, 0.0
    %v521 = vmax.f32 %v407, 0.0
    %v522 = vmax.f32 %v412, 0.0
    %v523 = vmax.f32 %v415, 0.0
    %v524 = vmax.f32 %v420, 0.0
    %v525 = vmax.f32 %v423, 0.0
    %v526 = vmax.f32 %v428, 0.0
    %v527 = vmax.f32 %v431, 0.0
    %v528 = vmax.f32 %v436, 0.0
    %v529 = vmax.f32 %v439, 0.0
    %v530 = vmax.f32 %v444, 0.0
    %v531 = vmax.f32 %v447, 0.0
    %v532 = vmax.f32 %v452, 0.0
    %v533 = vmax.f32 %v455, 0.0
    %v534 = vmax.f32 %v460, 0.0
    %v535 = vmax.f32 %v463, 0.0
    %v536 = vmax.f32 %v468, 0.0
    %v537 = vmax.f32 %v471, 0.0
    %v538 = vmax.f32 %v476, 0.0
    %v539 = vmax.f32 %v479, 0.0
    %v540 = vmax.f32 %v484, 0.0
    %v541 = vmax.f32 %v487, 0.0
    %v542 = vmax.f32 %v492, 0.0
    %v543 = vmax.f32 %v495, 0.0
    %v544 = vmax.f32 %v500, 0.0
    %v545 = vmax.f32 %v503, 0.0
    %v546 = vpack.c.bf16 %v507, %v506
    %v547 = vpack.c.bf16 %v509, %v508
    %v548 = vpack.c.bf16 %v511, %v510
    %v549 = vpack.c.bf16 %v513, %v512
    %v550 = vpack.c.bf16 %v515, %v514
    %v551 = vpack.c.bf16 %v517, %v516
    %v552 = vpack.c.bf16 %v519, %v518
    %v553 = vpack.c.bf16 %v521, %v520
    %v554 = vpack.c.bf16 %v523, %v522
    %v555 = vpack.c.bf16 %v525, %v524
    %v556 = vpack.c.bf16 %v527, %v526
    %v557 = vpack.c.bf16 %v529, %v528
    %v558 = vpack.c.bf16 %v531, %v530
    %v559 = vpack.c.bf16 %v533, %v532
    %v560 = vpack.c.bf16 %v535, %v534
    %v561 = vpack.c.bf16 %v537, %v536
    %v562 = vpack.c.bf16 %v539, %v538
    %v563 = vpack.c.bf16 %v541, %v540
    %v564 = vpack.c.bf16 %v543, %v542
    %v565 = vpack.c.bf16 %v545, %v544
    %v630 = vunpack.c.l.b16 %v56
    %v631 = vunpack.c.h.b16 %v56
    %v632 = vunpack.c.l.b16 %v57
    %v633 = vunpack.c.l.b16 %v58
    %v634 = vunpack.c.h.b16 %v58
    %v635 = vunpack.c.l.b16 %v59
    %v636 = vunpack.c.l.b16 %v60
    %v637 = vunpack.c.h.b16 %v60
    %v638 = vunpack.c.l.b16 %v61
    %v639 = vunpack.c.l.b16 %v62
    %v640 = vunpack.c.h.b16 %v62
    %v641 = vunpack.c.l.b16 %v63
    %v642 = vunpack.c.l.b16 %v64
    %v643 = vunpack.c.h.b16 %v64
    %v644 = vunpack.c.l.b16 %v65
    %v645 = vunpack.c.l.b16 %v66
    %v646 = vunpack.c.h.b16 %v66
    %v647 = vunpack.c.l.b16 %v67
    %v648 = vunpack.c.l.b16 %v68
    %v649 = vunpack.c.h.b16 %v68
    %v650 = vunpack.c.l.b16 %v69
    %v651 = vunpack.c.l.b16 %v70
    %v652 = vunpack.c.h.b16 %v70
    %v653 = vunpack.c.l.b16 %v71
    %v654 = vunpack.c.l.b16 %v72
    %v655 = vunpack.c.h.b16 %v72
    %v656 = vunpack.c.l.b16 %v73
    %v657 = vunpack.c.l.b16 %v74
    %v658 = vunpack.c.h.b16 %v74
    %v659 = vunpack.c.l.b16 %v75
    %v660 = vunpack.c.l.b16 %v76
    %v661 = vunpack.c.h.b16 %v76
    %v662 = vunpack.c.l.b16 %v77
    %v663 = vunpack.c.l.b16 %v78
    %v664 = vunpack.c.h.b16 %v78
    %v665 = vunpack.c.l.b16 %v79
    %v666 = vunpack.c.l.b16 %v80
    %v667 = vunpack.c.h.b16 %v80
    %v668 = vunpack.c.l.b16 %v81
    %v669 = vunpack.c.l.b16 %v82
    %v670 = vunpack.c.h.b16 %v82
    %v671 = vunpack.c.l.b16 %v83
    %v672 = vunpack.c.l.b16 %v84
    %v673 = vunpack.c.h.b16 %v84
    %v674 = vunpack.c.l.b16 %v85
    %v675 = vunpack.c.l.b16 %v86
    %v676 = vunpack.c.h.b16 %v86
    %v677 = vunpack.c.l.b16 %v87
    %v678 = vunpack.c.l.b16 %v88
    %v679 = vunpack.c.h.b16 %v88
    %v680 = vunpack.c.l.b16 %v89
    %v681 = vunpack.c.l.b16 %v90
    %v682 = vunpack.c.h.b16 %v90
    %v683 = vunpack.c.l.b16 %v91
    %v684 = vunpack.c.l.b16 %v92
    %v685 = vunpack.c.h.b16 %v92
    %v686 = vunpack.c.l.b16 %v93
    %v687 = vunpack.c.l.b16 %v94
    %v688 = vunpack.c.h.b16 %v94
    %v689 = vunpack.c.l.b16 %v95
    %v690 = vunpack.c.l.b16 %v96
    %v691 = vunpack.c.h.b16 %v96
    %v692 = vunpack.c.l.b16 %v97
    %v693 = vunpack.c.l.b16 %v98
    %v694 = vunpack.c.h.b16 %v98
    %v695 = vunpack.c.l.b16 %v99
    %v696 = vunpack.c.l.b16 %v100
    %v697 = vunpack.c.h.b16 %v100
    %v698 = vunpack.c.l.b16 %v101
    %v699 = vunpack.c.l.b16 %v102
    %v700 = vunpack.c.h.b16 %v102
    %v701 = vunpack.c.l.b16 %v103
    %v702 = vunpack.c.l.b16 %v104
    %v703 = vunpack.c.h.b16 %v104
    %v704 = vunpack.c.l.b16 %v105
    %v705 = vunpack.c.l.b16 %v106
    %v706 = vunpack.c.h.b16 %v106
    %v707 = vunpack.c.l.b16 %v107
    %v708 = vunpack.c.l.b16 %v108
    %v709 = vunpack.c.h.b16 %v108
    %v710 = vunpack.c.l.b16 %v109
    %v711 = vunpack.c.l.b16 %v110
    %v712 = vunpack.c.h.b16 %v110
    %v713 = vunpack.c.l.b16 %v111
    %v714 = vunpack.c.l.b16 %v112
    %v715 = vunpack.c.h.b16 %v112
    %v716 = vunpack.c.l.b16 %v113
    %v717 = vunpack.c.l.b16 %v114
    %v718 = vunpack.c.h.b16 %v114
    %v719 = vunpack.c.l.b16 %v115
    %v720 = vunpack.c.l.b16 %v116
    %v721 = vunpack.c.h.b16 %v116
    %v722 = vunpack.c.l.b16 %v117
    %v723 = vunpack.c.l.b16 %v118
    %v724 = vunpack.c.h.b16 %v118
    %v725 = vunpack.c.l.b16 %v119
    %v726 = vpack.c.b16 %v633, %v630
    %v727 = vpack.c.b16 %v634, %v631
    %v728 = vpack.c.b16 %v635, %v632
    %v729 = vpack.c.b16 %v639, %v636
    %v730 = vpack.c.b16 %v640, %v637
    %v731 = vpack.c.b16 %v641, %v638
    %v732 = vpack.c.b16 %v645, %v642
    %v733 = vpack.c.b16 %v646, %v643
    %v734 = vpack.c.b16 %v647, %v644
    %v735 = vpack.c.b16 %v651, %v648
    %v736 = vpack.c.b16 %v652, %v649
    %v737 = vpack.c.b16 %v653, %v650
    %v738 = vpack.c.b16 %v657, %v654
    %v739 = vpack.c.b16 %v658, %v655
    %v740 = vpack.c.b16 %v659, %v656
    %v741 = vpack.c.b16 %v663, %v660
    %v742 = vpack.c.b16 %v664, %v661
    %v743 = vpack.c.b16 %v665, %v662
    %v744 = vpack.c.b16 %v669, %v666
    %v745 = vpack.c.b16 %v670, %v667
    %v746 = vpack.c.b16 %v671, %v668
    %v747 = vpack.c.b16 %v675, %v672
    %v748 = vpack.c.b16 %v676, %v673
    %v749 = vpack.c.b16 %v677, %v674
    %v750 = vpack.c.b16 %v681, %v678
    %v751 = vpack.c.b16 %v682, %v679
    %v752 = vpack.c.b16 %v683, %v680
    %v753 = vpack.c.b16 %v687, %v684
    %v754 = vpack.c.b16 %v688, %v685
    %v755 = vpack.c.b16 %v689, %v686
    %v756 = vpack.c.b16 %v693, %v690
    %v757 = vpack.c.b16 %v694, %v691
    %v758 = vpack.c.b16 %v695, %v692
    %v759 = vpack.c.b16 %v699, %v696
    %v760 = vpack.c.b16 %v700, %v697
    %v761 = vpack.c.b16 %v701, %v698
    %v762 = vpack.c.b16 %v705, %v702
    %v763 = vpack.c.b16 %v706, %v703
    %v764 = vpack.c.b16 %v707, %v704
    %v765 = vpack.c.b16 %v711, %v708
    %v766 = vpack.c.b16 %v712, %v709
    %v767 = vpack.c.b16 %v713, %v710
    %v768 = vpack.c.b16 %v717, %v714
    %v769 = vpack.c.b16 %v718, %v715
    %v770 = vpack.c.b16 %v719, %v716
    %v771 = vpack.c.b16 %v723, %v720
    %v772 = vpack.c.b16 %v724, %v721
    %v773 = vpack.c.b16 %v725, %v722
    %v807 = vsel %vm252, %v728, 0
    %v810 = vsel %vm252, %v731, 0
    %v813 = vsel %vm252, %v734, 0
    %v816 = vsel %vm252, %v737, 0
    %v819 = vsel %vm252, %v740, 0
    %v822 = vsel %vm252, %v743, 0
    %v825 = vsel %vm252, %v746, 0
    %v828 = vsel %vm252, %v749, 0
    %v831 = vsel %vm252, %v752, 0
    %v834 = vsel %vm252, %v755, 0
    %v837 = vsel %vm252, %v758, 0
    %v840 = vsel %vm252, %v761, 0
    %v843 = vsel %vm252, %v764, 0
    %v846 = vsel %vm252, %v767, 0
    %v849 = vsel %vm252, %v770, 0
    %v852 = vsel %vm252, %v773, 0
    %854 = vmatprep.subr.bf16.mxu0 0
    %855 = vmatpush1.bf16.msra.mxu0 %v546
    %856 = vmatprep.subr.bf16.mxu0 0
    %857 = vmatpush1.bf16.msra.mxu0 %v547
    %858 = vmatprep.subr.bf16.mxu0 0
    %859 = vmatpush1.bf16.msra.mxu0 %v548
    %860 = vmatprep.subr.bf16.mxu0 0
    %861 = vmatpush1.bf16.msra.mxu0 %v549
    %862 = vmatprep.subr.bf16.mxu0 0
    %863 = vmatpush1.bf16.msra.mxu0 %v550
    %864 = vmatprep.subr.bf16.mxu0 0
    %865 = vmatpush1.bf16.msra.mxu0 %v551
    %866 = vmatprep.subr.bf16.mxu0 0
    %867 = vmatpush1.bf16.msra.mxu0 %v552
    %868 = vmatprep.subr.bf16.mxu0 0
    %869 = vmatpush1.bf16.msra.mxu0 %v553
    %870 = vmatprep.subr.bf16.mxu0 0
    %871 = vmatpush1.bf16.msra.mxu0 %v554
    %872 = vmatprep.subr.bf16.mxu0 0
    %873 = vmatpush1.bf16.msra.mxu0 %v555
    %874 = vmatprep.subr.bf16.mxu0 0
    %875 = vmatpush1.bf16.msra.mxu0 %v556
    %876 = vmatprep.subr.bf16.mxu0 0
    %877 = vmatpush1.bf16.msra.mxu0 %v557
    %878 = vmatprep.subr.bf16.mxu0 0
    %879 = vmatpush1.bf16.msra.mxu0 %v558
    %880 = vmatprep.subr.bf16.mxu0 0
    %881 = vmatpush1.bf16.msra.mxu0 %v559
    %882 = vmatprep.subr.bf16.mxu0 0
    %883 = vmatpush1.bf16.msra.mxu0 %v560
    %884 = vmatprep.subr.bf16.mxu0 0
    %885 = vmatpush1.bf16.msra.mxu0 %v561
    %886 = vmatprep.mubr.bf16.mxu0 %v727
    %887 = vmatmul.mubr.bf16.gmra.mrb[0].mxu0 %v726
    %v888 = vpop.f32.mrb[0].mxu0
    %v889 = vadd.f32 0.0, %v888
    %v890 = vpop.f32.mrb[0].mxu0
    %v891 = vpop.f32.mrb[0].mxu0
    %v892 = vadd.f32 0.0, %v891
    %v893 = vpop.f32.mrb[0].mxu0
    %894 = vmatprep.mubr.bf16.mxu0 %v730
    %895 = vmatmul.mubr.bf16.gmra.mrb[0].mxu0 %v729
    %v896 = vpop.f32.mrb[0].mxu0
    %v897 = vadd.f32 0.0, %v896
    %v898 = vpop.f32.mrb[0].mxu0
    %v899 = vpop.f32.mrb[0].mxu0
    %v900 = vadd.f32 0.0, %v899
    %v901 = vpop.f32.mrb[0].mxu0
    %902 = vmatprep.mubr.bf16.mxu0 %v733
    %903 = vmatmul.mubr.bf16.gmra.mrb[0].mxu0 %v732
    %v904 = vpop.f32.mrb[0].mxu0
    %v905 = vadd.f32 0.0, %v904
    %v906 = vpop.f32.mrb[0].mxu0
    %v907 = vpop.f32.mrb[0].mxu0
    %v908 = vadd.f32 0.0, %v907
    %v909 = vpop.f32.mrb[0].mxu0
    %910 = vmatprep.mubr.bf16.mxu0 %v736
    %911 = vmatmul.mubr.bf16.gmra.mrb[0].mxu0 %v735
    %v912 = vpop.f32.mrb[0].mxu0
    %v913 = vadd.f32 0.0, %v912
    %v914 = vpop.f32.mrb[0].mxu0
    %v915 = vpop.f32.mrb[0].mxu0
    %v916 = vadd.f32 0.0, %v915
    %v917 = vpop.f32.mrb[0].mxu0
    %918 = vmatprep.mubr.bf16.mxu0 %v739
    %919 = vmatmul.mubr.bf16.gmra.mrb[0].mxu0 %v738
    %v920 = vpop.f32.mrb[0].mxu0
    %v921 = vadd.f32 0.0, %v920
    %v922 = vpop.f32.mrb[0].mxu0
    %v923 = vpop.f32.mrb[0].mxu0
    %v924 = vadd.f32 0.0, %v923
    %v925 = vpop.f32.mrb[0].mxu0
    %926 = vmatprep.mubr.bf16.mxu0 %v742
    %927 = vmatmul.mubr.bf16.gmra.mrb[0].mxu0 %v741
    %v928 = vpop.f32.mrb[0].mxu0
    %v929 = vadd.f32 0.0, %v928
    %v930 = vpop.f32.mrb[0].mxu0
    %v931 = vpop.f32.mrb[0].mxu0
    %v932 = vadd.f32 0.0, %v931
    %v933 = vpop.f32.mrb[0].mxu0
    %934 = vmatprep.mubr.bf16.mxu0 %v745
    %935 = vmatmul.mubr.bf16.gmra.mrb[0].mxu0 %v744
    %v936 = vpop.f32.mrb[0].mxu0
    %v937 = vadd.f32 0.0, %v936
    %v938 = vpop.f32.mrb[0].mxu0
    %v939 = vpop.f32.mrb[0].mxu0
    %v940 = vadd.f32 0.0, %v939
    %v941 = vpop.f32.mrb[0].mxu0
    %942 = vmatprep.mubr.bf16.mxu0 %v748
    %943 = vmatmul.mubr.bf16.gmra.mrb[0].mxu0 %v747
    %v944 = vpop.f32.mrb[0].mxu0
    %v945 = vadd.f32 0.0, %v944
    %v946 = vpop.f32.mrb[0].mxu0
    %v947 = vpop.f32.mrb[0].mxu0
    %v948 = vadd.f32 0.0, %v947
    %v949 = vpop.f32.mrb[0].mxu0
    %950 = vmatprep.mubr.bf16.mxu0 %v751
    %951 = vmatmul.mubr.bf16.gmra.mrb[0].mxu0 %v750
    %v952 = vpop.f32.mrb[0].mxu0
    %v953 = vadd.f32 0.0, %v952
    %v954 = vpop.f32.mrb[0].mxu0
    %v955 = vpop.f32.mrb[0].mxu0
    %v956 = vadd.f32 0.0, %v955
    %v957 = vpop.f32.mrb[0].mxu0
    %958 = vmatprep.mubr.bf16.mxu0 %v754
    %959 = vmatmul.mubr.bf16.gmra.mrb[0].mxu0 %v753
    %v960 = vpop.f32.mrb[0].mxu0
    %v961 = vadd.f32 0.0, %v960
    %v962 = vpop.f32.mrb[0].mxu0
    %v963 = vpop.f32.mrb[0].mxu0
    %v964 = vadd.f32 0.0, %v963
    %v965 = vpop.f32.mrb[0].mxu0
    %966 = vmatprep.mubr.bf16.mxu0 %v757
    %967 = vmatmul.mubr.bf16.gmra.mrb[0].mxu0 %v756
    %v968 = vpop.f32.mrb[0].mxu0
    %v969 = vadd.f32 0.0, %v968
    %v970 = vpop.f32.mrb[0].mxu0
    %v971 = vpop.f32.mrb[0].mxu0
    %v972 = vadd.f32 0.0, %v971
    %v973 = vpop.f32.mrb[0].mxu0
    %974 = vmatprep.mubr.bf16.mxu0 %v760
    %975 = vmatmul.mubr.bf16.gmra.mrb[0].mxu0 %v759
    %v976 = vpop.f32.mrb[0].mxu0
    %v977 = vadd.f32 0.0, %v976
    %v978 = vpop.f32.mrb[0].mxu0
    %v979 = vpop.f32.mrb[0].mxu0
    %v980 = vadd.f32 0.0, %v979
    %v981 = vpop.f32.mrb[0].mxu0
    %982 = vmatprep.mubr.bf16.mxu0 %v763
    %983 = vmatmul.mubr.bf16.gmra.mrb[0].mxu0 %v762
    %v984 = vpop.f32.mrb[0].mxu0
    %v985 = vadd.f32 0.0, %v984
    %v986 = vpop.f32.mrb[0].mxu0
    %v987 = vpop.f32.mrb[0].mxu0
    %v988 = vadd.f32 0.0, %v987
    %v989 = vpop.f32.mrb[0].mxu0
    %990 = vmatprep.mubr.bf16.mxu0 %v766
    %991 = vmatmul.mubr.bf16.gmra.mrb[0].mxu0 %v765
    %v992 = vpop.f32.mrb[0].mxu0
    %v993 = vadd.f32 0.0, %v992
    %v994 = vpop.f32.mrb[0].mxu0
    %v995 = vpop.f32.mrb[0].mxu0
    %v996 = vadd.f32 0.0, %v995
    %v997 = vpop.f32.mrb[0].mxu0
    %998 = vmatprep.mubr.bf16.mxu0 %v769
    %999 = vmatmul.mubr.bf16.gmra.mrb[0].mxu0 %v768
    %v1000 = vpop.f32.mrb[0].mxu0
    %v1001 = vadd.f32 0.0, %v1000
    %v1002 = vpop.f32.mrb[0].mxu0
    %v1003 = vpop.f32.mrb[0].mxu0
    %v1004 = vadd.f32 0.0, %v1003
    %v1005 = vpop.f32.mrb[0].mxu0
    %1006 = vmatprep.mubr.bf16.mxu0 %v772
    %1007 = vmatmul.mubr.bf16.gmra.mrb[0].mxu0 %v771
    %v1008 = vpop.f32.mrb[0].mxu0
    %v1009 = vadd.f32 0.0, %v1008
    %v1010 = vpop.f32.mrb[0].mxu0
    %v1011 = vpop.f32.mrb[0].mxu0
    %v1012 = vadd.f32 0.0, %v1011
    %v1013 = vpop.f32.mrb[0].mxu0
    %1014 = vdwg.mxu0
    %1015 = vmatprep.subr.bf16.mxu0 0
    %1016 = vmatpush1.bf16.msra.mxu0 %v562
    %1017 = vmatprep.subr.bf16.mxu0 0
    %1018 = vmatpush1.bf16.msra.mxu0 %v563
    %1019 = vmatprep.subr.bf16.mxu0 0
    %1020 = vmatpush1.bf16.msra.mxu0 %v564
    %1021 = vmatprep.subr.bf16.mxu0 0
    %1022 = vmatpush1.bf16.msra.mxu0 %v565
    %1023 = vmatprep.subr.bf16.mxu0 0
    %1024 = vmatpush1.bf16.msra.mxu0 0
    %1025 = vmatprep.subr.bf16.mxu0 0
    %1026 = vmatpush1.bf16.msra.mxu0 0
    %1027 = vmatprep.subr.bf16.mxu0 0
    %1028 = vmatpush1.bf16.msra.mxu0 0
    %1029 = vmatprep.subr.bf16.mxu0 0
    %1030 = vmatpush1.bf16.msra.mxu0 0
    %1031 = vmatprep.subr.bf16.mxu0 0
    %1032 = vmatpush1.bf16.msra.mxu0 0
    %1033 = vmatprep.subr.bf16.mxu0 0
    %1034 = vmatpush1.bf16.msra.mxu0 0
    %1035 = vmatprep.subr.bf16.mxu0 0
    %1036 = vmatpush1.bf16.msra.mxu0 0
    %1037 = vmatprep.subr.bf16.mxu0 0
    %1038 = vmatpush1.bf16.msra.mxu0 0
    %1039 = vmatprep.subr.bf16.mxu0 0
    %1040 = vmatpush1.bf16.msra.mxu0 0
    %1041 = vmatprep.subr.bf16.mxu0 0
    %1042 = vmatpush1.bf16.msra.mxu0 0
    %1043 = vmatprep.subr.bf16.mxu0 0
    %1044 = vmatpush1.bf16.msra.mxu0 0
    %1045 = vmatprep.subr.bf16.mxu0 0
    %1046 = vmatpush1.bf16.msra.mxu0 0
    %1047 = vmatprep.mubr.bf16.mxu0 0
    %1048 = vmatmul.mubr.bf16.gmra.mrb[0].mxu0 %v807
    %v1049 = vpop.f32.mrb[0].mxu0
    %v1050 = vadd.f32 %v889, %v1049
    %v1051 = vpop.f32.mrb[0].mxu0
    %v1052 = vpop.f32.mrb[0].mxu0
    %v1053 = vadd.f32 %v892, %v1052
    %v1054 = vpop.f32.mrb[0].mxu0
    %1055 = vmatprep.mubr.bf16.mxu0 0
    %1056 = vmatmul.mubr.bf16.gmra.mrb[0].mxu0 %v810
    %v1057 = vpop.f32.mrb[0].mxu0
    %v1058 = vadd.f32 %v897, %v1057
    %v1059 = vpop.f32.mrb[0].mxu0
    %v1060 = vpop.f32.mrb[0].mxu0
    %v1061 = vadd.f32 %v900, %v1060
    %v1062 = vpop.f32.mrb[0].mxu0
    %1063 = vmatprep.mubr.bf16.mxu0 0
    %1064 = vmatmul.mubr.bf16.gmra.mrb[0].mxu0 %v813
    %v1065 = vpop.f32.mrb[0].mxu0
    %v1066 = vadd.f32 %v905, %v1065
    %v1067 = vpop.f32.mrb[0].mxu0
    %v1068 = vpop.f32.mrb[0].mxu0
    %v1069 = vadd.f32 %v908, %v1068
    %v1070 = vpop.f32.mrb[0].mxu0
    %1071 = vmatprep.mubr.bf16.mxu0 0
    %1072 = vmatmul.mubr.bf16.gmra.mrb[0].mxu0 %v816
    %v1073 = vpop.f32.mrb[0].mxu0
    %v1074 = vadd.f32 %v913, %v1073
    %v1075 = vpop.f32.mrb[0].mxu0
    %v1076 = vpop.f32.mrb[0].mxu0
    %v1077 = vadd.f32 %v916, %v1076
    %v1078 = vpop.f32.mrb[0].mxu0
    %1079 = vmatprep.mubr.bf16.mxu0 0
    %1080 = vmatmul.mubr.bf16.gmra.mrb[0].mxu0 %v819
    %v1081 = vpop.f32.mrb[0].mxu0
    %v1082 = vadd.f32 %v921, %v1081
    %v1083 = vpop.f32.mrb[0].mxu0
    %v1084 = vpop.f32.mrb[0].mxu0
    %v1085 = vadd.f32 %v924, %v1084
    %v1086 = vpop.f32.mrb[0].mxu0
    %1087 = vmatprep.mubr.bf16.mxu0 0
    %1088 = vmatmul.mubr.bf16.gmra.mrb[0].mxu0 %v822
    %v1089 = vpop.f32.mrb[0].mxu0
    %v1090 = vadd.f32 %v929, %v1089
    %v1091 = vpop.f32.mrb[0].mxu0
    %v1092 = vpop.f32.mrb[0].mxu0
    %v1093 = vadd.f32 %v932, %v1092
    %v1094 = vpop.f32.mrb[0].mxu0
    %1095 = vmatprep.mubr.bf16.mxu0 0
    %1096 = vmatmul.mubr.bf16.gmra.mrb[0].mxu0 %v825
    %v1097 = vpop.f32.mrb[0].mxu0
    %v1098 = vadd.f32 %v937, %v1097
    %v1099 = vpop.f32.mrb[0].mxu0
    %v1100 = vpop.f32.mrb[0].mxu0
    %v1101 = vadd.f32 %v940, %v1100
    %v1102 = vpop.f32.mrb[0].mxu0
    %1103 = vmatprep.mubr.bf16.mxu0 0
    %1104 = vmatmul.mubr.bf16.gmra.mrb[0].mxu0 %v828
    %v1105 = vpop.f32.mrb[0].mxu0
    %v1106 = vadd.f32 %v945, %v1105
    %v1107 = vpop.f32.mrb[0].mxu0
    %v1108 = vpop.f32.mrb[0].mxu0
    %v1109 = vadd.f32 %v948, %v1108
    %v1110 = vpop.f32.mrb[0].mxu0
    %1111 = vmatprep.mubr.bf16.mxu0 0
    %1112 = vmatmul.mubr.bf16.gmra.mrb[0].mxu0 %v831
    %v1113 = vpop.f32.mrb[0].mxu0
    %v1114 = vadd.f32 %v953, %v1113
    %v1115 = vpop.f32.mrb[0].mxu0
    %v1116 = vpop.f32.mrb[0].mxu0
    %v1117 = vadd.f32 %v956, %v1116
    %v1118 = vpop.f32.mrb[0].mxu0
    %1119 = vmatprep.mubr.bf16.mxu0 0
    %1120 = vmatmul.mubr.bf16.gmra.mrb[0].mxu0 %v834
    %v1121 = vpop.f32.mrb[0].mxu0
    %v1122 = vadd.f32 %v961, %v1121
    %v1123 = vpop.f32.mrb[0].mxu0
    %v1124 = vpop.f32.mrb[0].mxu0
    %v1125 = vadd.f32 %v964, %v1124
    %v1126 = vpop.f32.mrb[0].mxu0
    %1127 = vmatprep.mubr.bf16.mxu0 0
    %1128 = vmatmul.mubr.bf16.gmra.mrb[0].mxu0 %v837
    %v1129 = vpop.f32.mrb[0].mxu0
    %v1130 = vadd.f32 %v969, %v1129
    %v1131 = vpop.f32.mrb[0].mxu0
    %v1132 = vpop.f32.mrb[0].mxu0
    %v1133 = vadd.f32 %v972, %v1132
    %v1134 = vpop.f32.mrb[0].mxu0
    %1135 = vmatprep.mubr.bf16.mxu0 0
    %1136 = vmatmul.mubr.bf16.gmra.mrb[0].mxu0 %v840
    %v1137 = vpop.f32.mrb[0].mxu0
    %v1138 = vadd.f32 %v977, %v1137
    %v1139 = vpop.f32.mrb[0].mxu0
    %v1140 = vpop.f32.mrb[0].mxu0
    %v1141 = vadd.f32 %v980, %v1140
    %v1142 = vpop.f32.mrb[0].mxu0
    %1143 = vmatprep.mubr.bf16.mxu0 0
    %1144 = vmatmul.mubr.bf16.gmra.mrb[0].mxu0 %v843
    %v1145 = vpop.f32.mrb[0].mxu0
    %v1146 = vadd.f32 %v985, %v1145
    %v1147 = vpop.f32.mrb[0].mxu0
    %v1148 = vpop.f32.mrb[0].mxu0
    %v1149 = vadd.f32 %v988, %v1148
    %v1150 = vpop.f32.mrb[0].mxu0
    %1151 = vmatprep.mubr.bf16.mxu0 0
    %1152 = vmatmul.mubr.bf16.gmra.mrb[0].mxu0 %v846
    %v1153 = vpop.f32.mrb[0].mxu0
    %v1154 = vadd.f32 %v993, %v1153
    %v1155 = vpop.f32.mrb[0].mxu0
    %v1156 = vpop.f32.mrb[0].mxu0
    %v1157 = vadd.f32 %v996, %v1156
    %v1158 = vpop.f32.mrb[0].mxu0
    %1159 = vmatprep.mubr.bf16.mxu0 0
    %1160 = vmatmul.mubr.bf16.gmra.mrb[0].mxu0 %v849
    %v1161 = vpop.f32.mrb[0].mxu0
    %v1162 = vadd.f32 %v1001, %v1161
    %v1163 = vpop.f32.mrb[0].mxu0
    %v1164 = vpop.f32.mrb[0].mxu0
    %v1165 = vadd.f32 %v1004, %v1164
    %v1166 = vpop.f32.mrb[0].mxu0
    %1167 = vmatprep.mubr.bf16.mxu0 0
    %1168 = vmatmul.mubr.bf16.gmra.mrb[0].mxu0 %v852
    %v1169 = vpop.f32.mrb[0].mxu0
    %v1170 = vadd.f32 %v1009, %v1169
    %v1171 = vpop.f32.mrb[0].mxu0
    %v1172 = vpop.f32.mrb[0].mxu0
    %v1173 = vadd.f32 %v1012, %v1172
    %v1174 = vpop.f32.mrb[0].mxu0
    %1175 = vdwg.mxu0
    %v1176 = vmax.f32 %v1050, 0.0
    %v1177 = vmax.f32 %v1053, 0.0
    %v1178 = vmax.f32 %v1058, 0.0
    %v1179 = vmax.f32 %v1061, 0.0
    %v1180 = vmax.f32 %v1066, 0.0
    %v1181 = vmax.f32 %v1069, 0.0
    %v1182 = vmax.f32 %v1074, 0.0
    %v1183 = vmax.f32 %v1077, 0.0
    %v1184 = vmax.f32 %v1082, 0.0
    %v1185 = vmax.f32 %v1085, 0.0
    %v1186 = vmax.f32 %v1090, 0.0
    %v1187 = vmax.f32 %v1093, 0.0
    %v1188 = vmax.f32 %v1098, 0.0
    %v1189 = vmax.f32 %v1101, 0.0
    %v1190 = vmax.f32 %v1106, 0.0
    %v1191 = vmax.f32 %v1109, 0.0
    %v1192 = vmax.f32 %v1114, 0.0
    %v1193 = vmax.f32 %v1117, 0.0
    %v1194 = vmax.f32 %v1122, 0.0
    %v1195 = vmax.f32 %v1125, 0.0
    %v1196 = vmax.f32 %v1130, 0.0
    %v1197 = vmax.f32 %v1133, 0.0
    %v1198 = vmax.f32 %v1138, 0.0
    %v1199 = vmax.f32 %v1141, 0.0
    %v1200 = vmax.f32 %v1146, 0.0
    %v1201 = vmax.f32 %v1149, 0.0
    %v1202 = vmax.f32 %v1154, 0.0
    %v1203 = vmax.f32 %v1157, 0.0
    %v1204 = vmax.f32 %v1162, 0.0
    %v1205 = vmax.f32 %v1165, 0.0
    %v1206 = vmax.f32 %v1170, 0.0
    %v1207 = vmax.f32 %v1173, 0.0
    %v1208 = vmax.f32 %v1176, 0.0
    %v1209 = vmax.f32 %v1177, 0.0
    %v1210 = vmax.f32 %v1178, 0.0
    %v1211 = vmax.f32 %v1179, 0.0
    %v1212 = vmax.f32 %v1208, %v1180
    %v1213 = vmax.f32 %v1209, %v1181
    %v1214 = vmax.f32 %v1210, %v1182
    %v1215 = vmax.f32 %v1211, %v1183
    %v1216 = vmax.f32 %v1212, %v1184
    %v1217 = vmax.f32 %v1213, %v1185
    %v1218 = vmax.f32 %v1214, %v1186
    %v1219 = vmax.f32 %v1215, %v1187
    %v1220 = vmax.f32 %v1216, %v1188
    %v1221 = vmax.f32 %v1217, %v1189
    %v1222 = vmax.f32 %v1218, %v1190
    %v1223 = vmax.f32 %v1219, %v1191
    %v1224 = vmax.f32 %v1220, %v1192
    %v1225 = vmax.f32 %v1221, %v1193
    %v1226 = vmax.f32 %v1222, %v1194
    %v1227 = vmax.f32 %v1223, %v1195
    %v1228 = vmax.f32 %v1224, %v1196
    %v1229 = vmax.f32 %v1225, %v1197
    %v1230 = vmax.f32 %v1226, %v1198
    %v1231 = vmax.f32 %v1227, %v1199
    %v1232 = vmax.f32 %v1228, %v1200
    %v1233 = vmax.f32 %v1229, %v1201
    %v1234 = vmax.f32 %v1230, %v1202
    %v1235 = vmax.f32 %v1231, %v1203
    %v1236 = vmax.f32 %v1232, %v1204
    %v1237 = vmax.f32 %v1233, %v1205
    %v1238 = vmax.f32 %v1234, %v1206
    %v1239 = vmax.f32 %v1235, %v1207
    %v1240 = vld [vmem:[%s0 + $0x20] sm:$0xf]
    %v1241 = vld [vmem:[%s0 + $0x24] sm:$0xf]
    %v1242 = vld [vmem:[%s0 + $0x28] sm:$0xf]
    %v1243 = vld [vmem:[%s0 + $0x2c] sm:$0xf]
    %v1244 = vld [vmem:[%s0 + $0x30] sm:$0xf]
    %v1245 = vld [vmem:[%s0 + $0x34] sm:$0xf]
    %v1246 = vld [vmem:[%s0 + $0x38] sm:$0xf]
    %v1247 = vld [vmem:[%s0 + $0x3c] sm:$0xf]
    %v1256 = vunpack.c.l.b16 %v1240
    %v1257 = vunpack.c.l.b16 %v1241
    %v1258 = vunpack.c.l.b16 %v1242
    %v1259 = vunpack.c.l.b16 %v1243
    %v1260 = vunpack.c.l.b16 %v1244
    %v1261 = vunpack.c.l.b16 %v1245
    %v1262 = vunpack.c.l.b16 %v1246
    %v1263 = vunpack.c.l.b16 %v1247
    %v1264 = vpack.c.b16 %v1257, %v1256
    %v1265 = vpack.c.b16 %v1259, %v1258
    %v1266 = vpack.c.b16 %v1261, %v1260
    %v1267 = vpack.c.b16 %v1263, %v1262
    %1272 = vmatprep.subr.bf16.mxu0 0
    %1273 = vmatpush1.bf16.msra.mxu0 %v1264
    %1274 = vmatprep.subr.bf16.mxu0 0
    %1275 = vmatpush1.bf16.msra.mxu0 %v1265
    %1276 = vmatprep.subr.bf16.mxu0 0
    %1277 = vmatpush1.bf16.msra.mxu0 %v1266
    %1278 = vmatprep.subr.bf16.mxu0 0
    %1279 = vmatpush1.bf16.msra.mxu0 %v1267
    %1280 = vmatprep.subr.bf16.mxu0 0
    %1281 = vmatpush1.bf16.msra.mxu0 0
    %1282 = vmatprep.subr.bf16.mxu0 0
    %1283 = vmatpush1.bf16.msra.mxu0 0
    %1284 = vmatprep.subr.bf16.mxu0 0
    %1285 = vmatpush1.bf16.msra.mxu0 0
    %1286 = vmatprep.subr.bf16.mxu0 0
    %1287 = vmatpush1.bf16.msra.mxu0 0
    %1288 = vmatprep.subr.bf16.mxu0 0
    %1289 = vmatpush1.bf16.msra.mxu0 0
    %1290 = vmatprep.subr.bf16.mxu0 0
    %1291 = vmatpush1.bf16.msra.mxu0 0
    %1292 = vmatprep.subr.bf16.mxu0 0
    %1293 = vmatpush1.bf16.msra.mxu0 0
    %1294 = vmatprep.subr.bf16.mxu0 0
    %1295 = vmatpush1.bf16.msra.mxu0 0
    %1296 = vmatprep.subr.bf16.mxu0 0
    %1297 = vmatpush1.bf16.msra.mxu0 0
    %1298 = vmatprep.subr.bf16.mxu0 0
    %1299 = vmatpush1.bf16.msra.mxu0 0
    %1300 = vmatprep.subr.bf16.mxu0 0
    %1301 = vmatpush1.bf16.msra.mxu0 0
    %1302 = vmatprep.subr.bf16.mxu0 0
    %1303 = vmatpush1.bf16.msra.mxu0 0
    %1304 = vmatprep.mubr.bf16.mxu0 0
    %1305 = vmatmul.mubr.bf16.gmra.mrb[0].mxu0 %v254
    %v1306 = vpop.f32.mrb[0].mxu0
    %v1307 = vadd.f32 0.0, %v1306
    %v1308 = vpop.f32.mrb[0].mxu0
    %v1309 = vpop.f32.mrb[0].mxu0
    %v1310 = vadd.f32 0.0, %v1309
    %v1311 = vpop.f32.mrb[0].mxu0
    %1312 = vmatprep.mubr.bf16.mxu0 0
    %1313 = vmatmul.mubr.bf16.gmra.mrb[0].mxu0 %v257
    %v1314 = vpop.f32.mrb[0].mxu0
    %v1315 = vadd.f32 0.0, %v1314
    %v1316 = vpop.f32.mrb[0].mxu0
    %v1317 = vpop.f32.mrb[0].mxu0
    %v1318 = vadd.f32 0.0, %v1317
    %v1319 = vpop.f32.mrb[0].mxu0
    %1320 = vmatprep.mubr.bf16.mxu0 0
    %1321 = vmatmul.mubr.bf16.gmra.mrb[0].mxu0 %v260
    %v1322 = vpop.f32.mrb[0].mxu0
    %v1323 = vadd.f32 0.0, %v1322
    %v1324 = vpop.f32.mrb[0].mxu0
    %v1325 = vpop.f32.mrb[0].mxu0
    %v1326 = vadd.f32 0.0, %v1325
    %v1327 = vpop.f32.mrb[0].mxu0
    %1328 = vmatprep.mubr.bf16.mxu0 0
    %1329 = vmatmul.mubr.bf16.gmra.mrb[0].mxu0 %v263
    %v1330 = vpop.f32.mrb[0].mxu0
    %v1331 = vadd.f32 0.0, %v1330
    %v1332 = vpop.f32.mrb[0].mxu0
    %v1333 = vpop.f32.mrb[0].mxu0
    %v1334 = vadd.f32 0.0, %v1333
    %v1335 = vpop.f32.mrb[0].mxu0
    %1336 = vmatprep.mubr.bf16.mxu0 0
    %1337 = vmatmul.mubr.bf16.gmra.mrb[0].mxu0 %v266
    %v1338 = vpop.f32.mrb[0].mxu0
    %v1339 = vadd.f32 0.0, %v1338
    %v1340 = vpop.f32.mrb[0].mxu0
    %v1341 = vpop.f32.mrb[0].mxu0
    %v1342 = vadd.f32 0.0, %v1341
    %v1343 = vpop.f32.mrb[0].mxu0
    %1344 = vmatprep.mubr.bf16.mxu0 0
    %1345 = vmatmul.mubr.bf16.gmra.mrb[0].mxu0 %v269
    %v1346 = vpop.f32.mrb[0].mxu0
    %v1347 = vadd.f32 0.0, %v1346
    %v1348 = vpop.f32.mrb[0].mxu0
    %v1349 = vpop.f32.mrb[0].mxu0
    %v1350 = vadd.f32 0.0, %v1349
    %v1351 = vpop.f32.mrb[0].mxu0
    %1352 = vmatprep.mubr.bf16.mxu0 0
    %1353 = vmatmul.mubr.bf16.gmra.mrb[0].mxu0 %v272
    %v1354 = vpop.f32.mrb[0].mxu0
    %v1355 = vadd.f32 0.0, %v1354
    %v1356 = vpop.f32.mrb[0].mxu0
    %v1357 = vpop.f32.mrb[0].mxu0
    %v1358 = vadd.f32 0.0, %v1357
    %v1359 = vpop.f32.mrb[0].mxu0
    %1360 = vmatprep.mubr.bf16.mxu0 0
    %1361 = vmatmul.mubr.bf16.gmra.mrb[0].mxu0 %v275
    %v1362 = vpop.f32.mrb[0].mxu0
    %v1363 = vadd.f32 0.0, %v1362
    %v1364 = vpop.f32.mrb[0].mxu0
    %v1365 = vpop.f32.mrb[0].mxu0
    %v1366 = vadd.f32 0.0, %v1365
    %v1367 = vpop.f32.mrb[0].mxu0
    %1368 = vmatprep.mubr.bf16.mxu0 0
    %1369 = vmatmul.mubr.bf16.gmra.mrb[0].mxu0 %v278
    %v1370 = vpop.f32.mrb[0].mxu0
    %v1371 = vadd.f32 0.0, %v1370
    %v1372 = vpop.f32.mrb[0].mxu0
    %v1373 = vpop.f32.mrb[0].mxu0
    %v1374 = vadd.f32 0.0, %v1373
    %v1375 = vpop.f32.mrb[0].mxu0
    %1376 = vmatprep.mubr.bf16.mxu0 0
    %1377 = vmatmul.mubr.bf16.gmra.mrb[0].mxu0 %v281
    %v1378 = vpop.f32.mrb[0].mxu0
    %v1379 = vadd.f32 0.0, %v1378
    %v1380 = vpop.f32.mrb[0].mxu0
    %v1381 = vpop.f32.mrb[0].mxu0
    %v1382 = vadd.f32 0.0, %v1381
    %v1383 = vpop.f32.mrb[0].mxu0
    %1384 = vmatprep.mubr.bf16.mxu0 0
    %1385 = vmatmul.mubr.bf16.gmra.mrb[0].mxu0 %v284
    %v1386 = vpop.f32.mrb[0].mxu0
    %v1387 = vadd.f32 0.0, %v1386
    %v1388 = vpop.f32.mrb[0].mxu0
    %v1389 = vpop.f32.mrb[0].mxu0
    %v1390 = vadd.f32 0.0, %v1389
    %v1391 = vpop.f32.mrb[0].mxu0
    %1392 = vmatprep.mubr.bf16.mxu0 0
    %1393 = vmatmul.mubr.bf16.gmra.mrb[0].mxu0 %v287
    %v1394 = vpop.f32.mrb[0].mxu0
    %v1395 = vadd.f32 0.0, %v1394
    %v1396 = vpop.f32.mrb[0].mxu0
    %v1397 = vpop.f32.mrb[0].mxu0
    %v1398 = vadd.f32 0.0, %v1397
    %v1399 = vpop.f32.mrb[0].mxu0
    %1400 = vmatprep.mubr.bf16.mxu0 0
    %1401 = vmatmul.mubr.bf16.gmra.mrb[0].mxu0 %v290
    %v1402 = vpop.f32.mrb[0].mxu0
    %v1403 = vadd.f32 0.0, %v1402
    %v1404 = vpop.f32.mrb[0].mxu0
    %v1405 = vpop.f32.mrb[0].mxu0
    %v1406 = vadd.f32 0.0, %v1405
    %v1407 = vpop.f32.mrb[0].mxu0
    %1408 = vmatprep.mubr.bf16.mxu0 0
    %1409 = vmatmul.mubr.bf16.gmra.mrb[0].mxu0 %v293
    %v1410 = vpop.f32.mrb[0].mxu0
    %v1411 = vadd.f32 0.0, %v1410
    %v1412 = vpop.f32.mrb[0].mxu0
    %v1413 = vpop.f32.mrb[0].mxu0
    %v1414 = vadd.f32 0.0, %v1413
    %v1415 = vpop.f32.mrb[0].mxu0
    %1416 = vmatprep.mubr.bf16.mxu0 0
    %1417 = vmatmul.mubr.bf16.gmra.mrb[0].mxu0 %v296
    %v1418 = vpop.f32.mrb[0].mxu0
    %v1419 = vadd.f32 0.0, %v1418
    %v1420 = vpop.f32.mrb[0].mxu0
    %v1421 = vpop.f32.mrb[0].mxu0
    %v1422 = vadd.f32 0.0, %v1421
    %v1423 = vpop.f32.mrb[0].mxu0
    %1424 = vmatprep.mubr.bf16.mxu0 0
    %1425 = vmatmul.mubr.bf16.gmra.mrb[0].mxu0 %v299
    %v1426 = vpop.f32.mrb[0].mxu0
    %v1427 = vadd.f32 0.0, %v1426
    %v1428 = vpop.f32.mrb[0].mxu0
    %v1429 = vpop.f32.mrb[0].mxu0
    %v1430 = vadd.f32 0.0, %v1429
    %v1431 = vpop.f32.mrb[0].mxu0
    %1432 = vmatprep.mubr.bf16.mxu0 0
    %1433 = vmatmul.mubr.bf16.gmra.mrb[0].mxu0 %v302
    %v1434 = vpop.f32.mrb[0].mxu0
    %v1435 = vadd.f32 0.0, %v1434
    %v1436 = vpop.f32.mrb[0].mxu0
    %v1437 = vpop.f32.mrb[0].mxu0
    %v1438 = vadd.f32 0.0, %v1437
    %v1439 = vpop.f32.mrb[0].mxu0
    %1440 = vmatprep.mubr.bf16.mxu0 0
    %1441 = vmatmul.mubr.bf16.gmra.mrb[0].mxu0 %v305
    %v1442 = vpop.f32.mrb[0].mxu0
    %v1443 = vadd.f32 0.0, %v1442
    %v1444 = vpop.f32.mrb[0].mxu0
    %v1445 = vpop.f32.mrb[0].mxu0
    %v1446 = vadd.f32 0.0, %v1445
    %v1447 = vpop.f32.mrb[0].mxu0
    %1448 = vmatprep.mubr.bf16.mxu0 0
    %1449 = vmatmul.mubr.bf16.gmra.mrb[0].mxu0 %v308
    %v1450 = vpop.f32.mrb[0].mxu0
    %v1451 = vadd.f32 0.0, %v1450
    %v1452 = vpop.f32.mrb[0].mxu0
    %v1453 = vpop.f32.mrb[0].mxu0
    %v1454 = vadd.f32 0.0, %v1453
    %v1455 = vpop.f32.mrb[0].mxu0
    %1456 = vmatprep.mubr.bf16.mxu0 0
    %1457 = vmatmul.mubr.bf16.gmra.mrb[0].mxu0 %v311
    %v1458 = vpop.f32.mrb[0].mxu0
    %v1459 = vadd.f32 0.0, %v1458
    %v1460 = vpop.f32.mrb[0].mxu0
    %v1461 = vpop.f32.mrb[0].mxu0
    %v1462 = vadd.f32 0.0, %v1461
    %v1463 = vpop.f32.mrb[0].mxu0
    %1464 = vdwg.mxu0
    %v1465 = vmax.f32 %v1307, 0.0
    %v1466 = vmax.f32 %v1310, 0.0
    %v1467 = vmax.f32 %v1315, 0.0
    %v1468 = vmax.f32 %v1318, 0.0
    %v1469 = vmax.f32 %v1323, 0.0
    %v1470 = vmax.f32 %v1326, 0.0
    %v1471 = vmax.f32 %v1331, 0.0
    %v1472 = vmax.f32 %v1334, 0.0
    %v1473 = vmax.f32 %v1339, 0.0
    %v1474 = vmax.f32 %v1342, 0.0
    %v1475 = vmax.f32 %v1347, 0.0
    %v1476 = vmax.f32 %v1350, 0.0
    %v1477 = vmax.f32 %v1355, 0.0
    %v1478 = vmax.f32 %v1358, 0.0
    %v1479 = vmax.f32 %v1363, 0.0
    %v1480 = vmax.f32 %v1366, 0.0
    %v1481 = vmax.f32 %v1371, 0.0
    %v1482 = vmax.f32 %v1374, 0.0
    %v1483 = vmax.f32 %v1379, 0.0
    %v1484 = vmax.f32 %v1382, 0.0
    %v1485 = vmax.f32 %v1387, 0.0
    %v1486 = vmax.f32 %v1390, 0.0
    %v1487 = vmax.f32 %v1395, 0.0
    %v1488 = vmax.f32 %v1398, 0.0
    %v1489 = vmax.f32 %v1403, 0.0
    %v1490 = vmax.f32 %v1406, 0.0
    %v1491 = vmax.f32 %v1411, 0.0
    %v1492 = vmax.f32 %v1414, 0.0
    %v1493 = vmax.f32 %v1419, 0.0
    %v1494 = vmax.f32 %v1422, 0.0
    %v1495 = vmax.f32 %v1427, 0.0
    %v1496 = vmax.f32 %v1430, 0.0
    %v1497 = vmax.f32 %v1435, 0.0
    %v1498 = vmax.f32 %v1438, 0.0
    %v1499 = vmax.f32 %v1443, 0.0
    %v1500 = vmax.f32 %v1446, 0.0
    %v1501 = vmax.f32 %v1451, 0.0
    %v1502 = vmax.f32 %v1454, 0.0
    %v1503 = vmax.f32 %v1459, 0.0
    %v1504 = vmax.f32 %v1462, 0.0
    %v1505 = vpack.c.bf16 %v1466, %v1465
    %v1506 = vpack.c.bf16 %v1468, %v1467
    %v1507 = vpack.c.bf16 %v1470, %v1469
    %v1508 = vpack.c.bf16 %v1472, %v1471
    %v1509 = vpack.c.bf16 %v1474, %v1473
    %v1510 = vpack.c.bf16 %v1476, %v1475
    %v1511 = vpack.c.bf16 %v1478, %v1477
    %v1512 = vpack.c.bf16 %v1480, %v1479
    %v1513 = vpack.c.bf16 %v1482, %v1481
    %v1514 = vpack.c.bf16 %v1484, %v1483
    %v1515 = vpack.c.bf16 %v1486, %v1485
    %v1516 = vpack.c.bf16 %v1488, %v1487
    %v1517 = vpack.c.bf16 %v1490, %v1489
    %v1518 = vpack.c.bf16 %v1492, %v1491
    %v1519 = vpack.c.bf16 %v1494, %v1493
    %v1520 = vpack.c.bf16 %v1496, %v1495
    %v1521 = vpack.c.bf16 %v1498, %v1497
    %v1522 = vpack.c.bf16 %v1500, %v1499
    %v1523 = vpack.c.bf16 %v1502, %v1501
    %v1524 = vpack.c.bf16 %v1504, %v1503
    %1525 = vmatprep.subr.bf16.mxu0 0
    %1526 = vmatpush1.bf16.msra.mxu0 %v1505
    %1527 = vmatprep.subr.bf16.mxu0 0
    %1528 = vmatpush1.bf16.msra.mxu0 %v1506
    %1529 = vmatprep.subr.bf16.mxu0 0
    %1530 = vmatpush1.bf16.msra.mxu0 %v1507
    %1531 = vmatprep.subr.bf16.mxu0 0
    %1532 = vmatpush1.bf16.msra.mxu0 %v1508
    %1533 = vmatprep.subr.bf16.mxu0 0
    %1534 = vmatpush1.bf16.msra.mxu0 %v1509
    %1535 = vmatprep.subr.bf16.mxu0 0
    %1536 = vmatpush1.bf16.msra.mxu0 %v1510
    %1537 = vmatprep.subr.bf16.mxu0 0
    %1538 = vmatpush1.bf16.msra.mxu0 %v1511
    %1539 = vmatprep.subr.bf16.mxu0 0
    %1540 = vmatpush1.bf16.msra.mxu0 %v1512
    %1541 = vmatprep.subr.bf16.mxu0 0
    %1542 = vmatpush1.bf16.msra.mxu0 %v1513
    %1543 = vmatprep.subr.bf16.mxu0 0
    %1544 = vmatpush1.bf16.msra.mxu0 %v1514
    %1545 = vmatprep.subr.bf16.mxu0 0
    %1546 = vmatpush1.bf16.msra.mxu0 %v1515
    %1547 = vmatprep.subr.bf16.mxu0 0
    %1548 = vmatpush1.bf16.msra.mxu0 %v1516
    %1549 = vmatprep.subr.bf16.mxu0 0
    %1550 = vmatpush1.bf16.msra.mxu0 %v1517
    %1551 = vmatprep.subr.bf16.mxu0 0
    %1552 = vmatpush1.bf16.msra.mxu0 %v1518
    %1553 = vmatprep.subr.bf16.mxu0 0
    %1554 = vmatpush1.bf16.msra.mxu0 %v1519
    %1555 = vmatprep.subr.bf16.mxu0 0
    %1556 = vmatpush1.bf16.msra.mxu0 %v1520
    %1557 = vmatprep.mubr.bf16.mxu0 %v727
    %1558 = vmatmul.mubr.bf16.gmra.mrb[0].mxu0 %v726
    %v1559 = vpop.f32.mrb[0].mxu0
    %v1560 = vadd.f32 0.0, %v1559
    %v1561 = vpop.f32.mrb[0].mxu0
    %v1562 = vpop.f32.mrb[0].mxu0
    %v1563 = vadd.f32 0.0, %v1562
    %v1564 = vpop.f32.mrb[0].mxu0
    %1565 = vmatprep.mubr.bf16.mxu0 %v730
    %1566 = vmatmul.mubr.bf16.gmra.mrb[0].mxu0 %v729
    %v1567 = vpop.f32.mrb[0].mxu0
    %v1568 = vadd.f32 0.0, %v1567
    %v1569 = vpop.f32.mrb[0].mxu0
    %v1570 = vpop.f32.mrb[0].mxu0
    %v1571 = vadd.f32 0.0, %v1570
    %v1572 = vpop.f32.mrb[0].mxu0
    %1573 = vmatprep.mubr.bf16.mxu0 %v733
    %1574 = vmatmul.mubr.bf16.gmra.mrb[0].mxu0 %v732
    %v1575 = vpop.f32.mrb[0].mxu0
    %v1576 = vadd.f32 0.0, %v1575
    %v1577 = vpop.f32.mrb[0].mxu0
    %v1578 = vpop.f32.mrb[0].mxu0
    %v1579 = vadd.f32 0.0, %v1578
    %v1580 = vpop.f32.mrb[0].mxu0
    %1581 = vmatprep.mubr.bf16.mxu0 %v736
    %1582 = vmatmul.mubr.bf16.gmra.mrb[0].mxu0 %v735
    %v1583 = vpop.f32.mrb[0].mxu0
    %v1584 = vadd.f32 0.0, %v1583
    %v1585 = vpop.f32.mrb[0].mxu0
    %v1586 = vpop.f32.mrb[0].mxu0
    %v1587 = vadd.f32 0.0, %v1586
    %v1588 = vpop.f32.mrb[0].mxu0
    %1589 = vmatprep.mubr.bf16.mxu0 %v739
    %1590 = vmatmul.mubr.bf16.gmra.mrb[0].mxu0 %v738
    %v1591 = vpop.f32.mrb[0].mxu0
    %v1592 = vadd.f32 0.0, %v1591
    %v1593 = vpop.f32.mrb[0].mxu0
    %v1594 = vpop.f32.mrb[0].mxu0
    %v1595 = vadd.f32 0.0, %v1594
    %v1596 = vpop.f32.mrb[0].mxu0
    %1597 = vmatprep.mubr.bf16.mxu0 %v742
    %1598 = vmatmul.mubr.bf16.gmra.mrb[0].mxu0 %v741
    %v1599 = vpop.f32.mrb[0].mxu0
    %v1600 = vadd.f32 0.0, %v1599
    %v1601 = vpop.f32.mrb[0].mxu0
    %v1602 = vpop.f32.mrb[0].mxu0
    %v1603 = vadd.f32 0.0, %v1602
    %v1604 = vpop.f32.mrb[0].mxu0
    %1605 = vmatprep.mubr.bf16.mxu0 %v745
    %1606 = vmatmul.mubr.bf16.gmra.mrb[0].mxu0 %v744
    %v1607 = vpop.f32.mrb[0].mxu0
    %v1608 = vadd.f32 0.0, %v1607
    %v1609 = vpop.f32.mrb[0].mxu0
    %v1610 = vpop.f32.mrb[0].mxu0
    %v1611 = vadd.f32 0.0, %v1610
    %v1612 = vpop.f32.mrb[0].mxu0
    %1613 = vmatprep.mubr.bf16.mxu0 %v748
    %1614 = vmatmul.mubr.bf16.gmra.mrb[0].mxu0 %v747
    %v1615 = vpop.f32.mrb[0].mxu0
    %v1616 = vadd.f32 0.0, %v1615
    %v1617 = vpop.f32.mrb[0].mxu0
    %v1618 = vpop.f32.mrb[0].mxu0
    %v1619 = vadd.f32 0.0, %v1618
    %v1620 = vpop.f32.mrb[0].mxu0
    %1621 = vmatprep.mubr.bf16.mxu0 %v751
    %1622 = vmatmul.mubr.bf16.gmra.mrb[0].mxu0 %v750
    %v1623 = vpop.f32.mrb[0].mxu0
    %v1624 = vadd.f32 0.0, %v1623
    %v1625 = vpop.f32.mrb[0].mxu0
    %v1626 = vpop.f32.mrb[0].mxu0
    %v1627 = vadd.f32 0.0, %v1626
    %v1628 = vpop.f32.mrb[0].mxu0
    %1629 = vmatprep.mubr.bf16.mxu0 %v754
    %1630 = vmatmul.mubr.bf16.gmra.mrb[0].mxu0 %v753
    %v1631 = vpop.f32.mrb[0].mxu0
    %v1632 = vadd.f32 0.0, %v1631
    %v1633 = vpop.f32.mrb[0].mxu0
    %v1634 = vpop.f32.mrb[0].mxu0
    %v1635 = vadd.f32 0.0, %v1634
    %v1636 = vpop.f32.mrb[0].mxu0
    %1637 = vmatprep.mubr.bf16.mxu0 %v757
    %1638 = vmatmul.mubr.bf16.gmra.mrb[0].mxu0 %v756
    %v1639 = vpop.f32.mrb[0].mxu0
    %v1640 = vadd.f32 0.0, %v1639
    %v1641 = vpop.f32.mrb[0].mxu0
    %v1642 = vpop.f32.mrb[0].mxu0
    %v1643 = vadd.f32 0.0, %v1642
    %v1644 = vpop.f32.mrb[0].mxu0
    %1645 = vmatprep.mubr.bf16.mxu0 %v760
    %1646 = vmatmul.mubr.bf16.gmra.mrb[0].mxu0 %v759
    %v1647 = vpop.f32.mrb[0].mxu0
    %v1648 = vadd.f32 0.0, %v1647
    %v1649 = vpop.f32.mrb[0].mxu0
    %v1650 = vpop.f32.mrb[0].mxu0
    %v1651 = vadd.f32 0.0, %v1650
    %v1652 = vpop.f32.mrb[0].mxu0
    %1653 = vmatprep.mubr.bf16.mxu0 %v763
    %1654 = vmatmul.mubr.bf16.gmra.mrb[0].mxu0 %v762
    %v1655 = vpop.f32.mrb[0].mxu0
    %v1656 = vadd.f32 0.0, %v1655
    %v1657 = vpop.f32.mrb[0].mxu0
    %v1658 = vpop.f32.mrb[0].mxu0
    %v1659 = vadd.f32 0.0, %v1658
    %v1660 = vpop.f32.mrb[0].mxu0
    %1661 = vmatprep.mubr.bf16.mxu0 %v766
    %1662 = vmatmul.mubr.bf16.gmra.mrb[0].mxu0 %v765
    %v1663 = vpop.f32.mrb[0].mxu0
    %v1664 = vadd.f32 0.0, %v1663
    %v1665 = vpop.f32.mrb[0].mxu0
    %v1666 = vpop.f32.mrb[0].mxu0
    %v1667 = vadd.f32 0.0, %v1666
    %v1668 = vpop.f32.mrb[0].mxu0
    %1669 = vmatprep.mubr.bf16.mxu0 %v769
    %1670 = vmatmul.mubr.bf16.gmra.mrb[0].mxu0 %v768
    %v1671 = vpop.f32.mrb[0].mxu0
    %v1672 = vadd.f32 0.0, %v1671
    %v1673 = vpop.f32.mrb[0].mxu0
    %v1674 = vpop.f32.mrb[0].mxu0
    %v1675 = vadd.f32 0.0, %v1674
    %v1676 = vpop.f32.mrb[0].mxu0
    %1677 = vmatprep.mubr.bf16.mxu0 %v772
    %1678 = vmatmul.mubr.bf16.gmra.mrb[0].mxu0 %v771
    %v1679 = vpop.f32.mrb[0].mxu0
    %v1680 = vadd.f32 0.0, %v1679
    %v1681 = vpop.f32.mrb[0].mxu0
    %v1682 = vpop.f32.mrb[0].mxu0
    %v1683 = vadd.f32 0.0, %v1682
    %v1684 = vpop.f32.mrb[0].mxu0
    %1685 = vdwg.mxu0
    %1686 = vmatprep.subr.bf16.mxu0 0
    %1687 = vmatpush1.bf16.msra.mxu0 %v1521
    %1688 = vmatprep.subr.bf16.mxu0 0
    %1689 = vmatpush1.bf16.msra.mxu0 %v1522
    %1690 = vmatprep.subr.bf16.mxu0 0
    %1691 = vmatpush1.bf16.msra.mxu0 %v1523
    %1692 = vmatprep.subr.bf16.mxu0 0
    %1693 = vmatpush1.bf16.msra.mxu0 %v1524
    %1694 = vmatprep.subr.bf16.mxu0 0
    %1695 = vmatpush1.bf16.msra.mxu0 0
    %1696 = vmatprep.subr.bf16.mxu0 0
    %1697 = vmatpush1.bf16.msra.mxu0 0
    %1698 = vmatprep.subr.bf16.mxu0 0
    %1699 = vmatpush1.bf16.msra.mxu0 0
    %1700 = vmatprep.subr.bf16.mxu0 0
    %1701 = vmatpush1.bf16.msra.mxu0 0
    %1702 = vmatprep.subr.bf16.mxu0 0
    %1703 = vmatpush1.bf16.msra.mxu0 0
    %1704 = vmatprep.subr.bf16.mxu0 0
    %1705 = vmatpush1.bf16.msra.mxu0 0
    %1706 = vmatprep.subr.bf16.mxu0 0
    %1707 = vmatpush1.bf16.msra.mxu0 0
    %1708 = vmatprep.subr.bf16.mxu0 0
    %1709 = vmatpush1.bf16.msra.mxu0 0
    %1710 = vmatprep.subr.bf16.mxu0 0
    %1711 = vmatpush1.bf16.msra.mxu0 0
    %1712 = vmatprep.subr.bf16.mxu0 0
    %1713 = vmatpush1.bf16.msra.mxu0 0
    %1714 = vmatprep.subr.bf16.mxu0 0
    %1715 = vmatpush1.bf16.msra.mxu0 0
    %1716 = vmatprep.subr.bf16.mxu0 0
    %1717 = vmatpush1.bf16.msra.mxu0 0
    %1718 = vmatprep.mubr.bf16.mxu0 0
    %1719 = vmatmul.mubr.bf16.gmra.mrb[0].mxu0 %v807
    %v1720 = vpop.f32.mrb[0].mxu0
    %v1721 = vadd.f32 %v1560, %v1720
    %v1722 = vpop.f32.mrb[0].mxu0
    %v1723 = vpop.f32.mrb[0].mxu0
    %v1724 = vadd.f32 %v1563, %v1723
    %v1725 = vpop.f32.mrb[0].mxu0
    %1726 = vmatprep.mubr.bf16.mxu0 0
    %1727 = vmatmul.mubr.bf16.gmra.mrb[0].mxu0 %v810
    %v1728 = vpop.f32.mrb[0].mxu0
    %v1729 = vadd.f32 %v1568, %v1728
    %v1730 = vpop.f32.mrb[0].mxu0
    %v1731 = vpop.f32.mrb[0].mxu0
    %v1732 = vadd.f32 %v1571, %v1731
    %v1733 = vpop.f32.mrb[0].mxu0
    %1734 = vmatprep.mubr.bf16.mxu0 0
    %1735 = vmatmul.mubr.bf16.gmra.mrb[0].mxu0 %v813
    %v1736 = vpop.f32.mrb[0].mxu0
    %v1737 = vadd.f32 %v1576, %v1736
    %v1738 = vpop.f32.mrb[0].mxu0
    %v1739 = vpop.f32.mrb[0].mxu0
    %v1740 = vadd.f32 %v1579, %v1739
    %v1741 = vpop.f32.mrb[0].mxu0
    %1742 = vmatprep.mubr.bf16.mxu0 0
    %1743 = vmatmul.mubr.bf16.gmra.mrb[0].mxu0 %v816
    %v1744 = vpop.f32.mrb[0].mxu0
    %v1745 = vadd.f32 %v1584, %v1744
    %v1746 = vpop.f32.mrb[0].mxu0
    %v1747 = vpop.f32.mrb[0].mxu0
    %v1748 = vadd.f32 %v1587, %v1747
    %v1749 = vpop.f32.mrb[0].mxu0
    %1750 = vmatprep.mubr.bf16.mxu0 0
    %1751 = vmatmul.mubr.bf16.gmra.mrb[0].mxu0 %v819
    %v1752 = vpop.f32.mrb[0].mxu0
    %v1753 = vadd.f32 %v1592, %v1752
    %v1754 = vpop.f32.mrb[0].mxu0
    %v1755 = vpop.f32.mrb[0].mxu0
    %v1756 = vadd.f32 %v1595, %v1755
    %v1757 = vpop.f32.mrb[0].mxu0
    %1758 = vmatprep.mubr.bf16.mxu0 0
    %1759 = vmatmul.mubr.bf16.gmra.mrb[0].mxu0 %v822
    %v1760 = vpop.f32.mrb[0].mxu0
    %v1761 = vadd.f32 %v1600, %v1760
    %v1762 = vpop.f32.mrb[0].mxu0
    %v1763 = vpop.f32.mrb[0].mxu0
    %v1764 = vadd.f32 %v1603, %v1763
    %v1765 = vpop.f32.mrb[0].mxu0
    %1766 = vmatprep.mubr.bf16.mxu0 0
    %1767 = vmatmul.mubr.bf16.gmra.mrb[0].mxu0 %v825
    %v1768 = vpop.f32.mrb[0].mxu0
    %v1769 = vadd.f32 %v1608, %v1768
    %v1770 = vpop.f32.mrb[0].mxu0
    %v1771 = vpop.f32.mrb[0].mxu0
    %v1772 = vadd.f32 %v1611, %v1771
    %v1773 = vpop.f32.mrb[0].mxu0
    %1774 = vmatprep.mubr.bf16.mxu0 0
    %1775 = vmatmul.mubr.bf16.gmra.mrb[0].mxu0 %v828
    %v1776 = vpop.f32.mrb[0].mxu0
    %v1777 = vadd.f32 %v1616, %v1776
    %v1778 = vpop.f32.mrb[0].mxu0
    %v1779 = vpop.f32.mrb[0].mxu0
    %v1780 = vadd.f32 %v1619, %v1779
    %v1781 = vpop.f32.mrb[0].mxu0
    %1782 = vmatprep.mubr.bf16.mxu0 0
    %1783 = vmatmul.mubr.bf16.gmra.mrb[0].mxu0 %v831
    %v1784 = vpop.f32.mrb[0].mxu0
    %v1785 = vadd.f32 %v1624, %v1784
    %v1786 = vpop.f32.mrb[0].mxu0
    %v1787 = vpop.f32.mrb[0].mxu0
    %v1788 = vadd.f32 %v1627, %v1787
    %v1789 = vpop.f32.mrb[0].mxu0
    %1790 = vmatprep.mubr.bf16.mxu0 0
    %1791 = vmatmul.mubr.bf16.gmra.mrb[0].mxu0 %v834
    %v1792 = vpop.f32.mrb[0].mxu0
    %v1793 = vadd.f32 %v1632, %v1792
    %v1794 = vpop.f32.mrb[0].mxu0
    %v1795 = vpop.f32.mrb[0].mxu0
    %v1796 = vadd.f32 %v1635, %v1795
    %v1797 = vpop.f32.mrb[0].mxu0
    %1798 = vmatprep.mubr.bf16.mxu0 0
    %1799 = vmatmul.mubr.bf16.gmra.mrb[0].mxu0 %v837
    %v1800 = vpop.f32.mrb[0].mxu0
    %v1801 = vadd.f32 %v1640, %v1800
    %v1802 = vpop.f32.mrb[0].mxu0
    %v1803 = vpop.f32.mrb[0].mxu0
    %v1804 = vadd.f32 %v1643, %v1803
    %v1805 = vpop.f32.mrb[0].mxu0
    %1806 = vmatprep.mubr.bf16.mxu0 0
    %1807 = vmatmul.mubr.bf16.gmra.mrb[0].mxu0 %v840
    %v1808 = vpop.f32.mrb[0].mxu0
    %v1809 = vadd.f32 %v1648, %v1808
    %v1810 = vpop.f32.mrb[0].mxu0
    %v1811 = vpop.f32.mrb[0].mxu0
    %v1812 = vadd.f32 %v1651, %v1811
    %v1813 = vpop.f32.mrb[0].mxu0
    %1814 = vmatprep.mubr.bf16.mxu0 0
    %1815 = vmatmul.mubr.bf16.gmra.mrb[0].mxu0 %v843
    %v1816 = vpop.f32.mrb[0].mxu0
    %v1817 = vadd.f32 %v1656, %v1816
    %v1818 = vpop.f32.mrb[0].mxu0
    %v1819 = vpop.f32.mrb[0].mxu0
    %v1820 = vadd.f32 %v1659, %v1819
    %v1821 = vpop.f32.mrb[0].mxu0
    %1822 = vmatprep.mubr.bf16.mxu0 0
    %1823 = vmatmul.mubr.bf16.gmra.mrb[0].mxu0 %v846
    %v1824 = vpop.f32.mrb[0].mxu0
    %v1825 = vadd.f32 %v1664, %v1824
    %v1826 = vpop.f32.mrb[0].mxu0
    %v1827 = vpop.f32.mrb[0].mxu0
    %v1828 = vadd.f32 %v1667, %v1827
    %v1829 = vpop.f32.mrb[0].mxu0
    %1830 = vmatprep.mubr.bf16.mxu0 0
    %1831 = vmatmul.mubr.bf16.gmra.mrb[0].mxu0 %v849
    %v1832 = vpop.f32.mrb[0].mxu0
    %v1833 = vadd.f32 %v1672, %v1832
    %v1834 = vpop.f32.mrb[0].mxu0
    %v1835 = vpop.f32.mrb[0].mxu0
    %v1836 = vadd.f32 %v1675, %v1835
    %v1837 = vpop.f32.mrb[0].mxu0
    %1838 = vmatprep.mubr.bf16.mxu0 0
    %1839 = vmatmul.mubr.bf16.gmra.mrb[0].mxu0 %v852
    %v1840 = vpop.f32.mrb[0].mxu0
    %v1841 = vadd.f32 %v1680, %v1840
    %v1842 = vpop.f32.mrb[0].mxu0
    %v1843 = vpop.f32.mrb[0].mxu0
    %v1844 = vadd.f32 %v1683, %v1843
    %v1845 = vpop.f32.mrb[0].mxu0
    %1846 = vdwg.mxu0
    %v1847 = vmax.f32 %v1721, 0.0
    %v1848 = vmax.f32 %v1724, 0.0
    %v1849 = vmax.f32 %v1729, 0.0
    %v1850 = vmax.f32 %v1732, 0.0
    %v1851 = vmax.f32 %v1737, 0.0
    %v1852 = vmax.f32 %v1740, 0.0
    %v1853 = vmax.f32 %v1745, 0.0
    %v1854 = vmax.f32 %v1748, 0.0
    %v1855 = vmax.f32 %v1753, 0.0
    %v1856 = vmax.f32 %v1756, 0.0
    %v1857 = vmax.f32 %v1761, 0.0
    %v1858 = vmax.f32 %v1764, 0.0
    %v1859 = vmax.f32 %v1769, 0.0
    %v1860 = vmax.f32 %v1772, 0.0
    %v1861 = vmax.f32 %v1777, 0.0
    %v1862 = vmax.f32 %v1780, 0.0
    %v1863 = vmax.f32 %v1785, 0.0
    %v1864 = vmax.f32 %v1788, 0.0
    %v1865 = vmax.f32 %v1793, 0.0
    %v1866 = vmax.f32 %v1796, 0.0
    %v1867 = vmax.f32 %v1801, 0.0
    %v1868 = vmax.f32 %v1804, 0.0
    %v1869 = vmax.f32 %v1809, 0.0
    %v1870 = vmax.f32 %v1812, 0.0
    %v1871 = vmax.f32 %v1817, 0.0
    %v1872 = vmax.f32 %v1820, 0.0
    %v1873 = vmax.f32 %v1825, 0.0
    %v1874 = vmax.f32 %v1828, 0.0
    %v1875 = vmax.f32 %v1833, 0.0
    %v1876 = vmax.f32 %v1836, 0.0
    %v1877 = vmax.f32 %v1841, 0.0
    %v1878 = vmax.f32 %v1844, 0.0
    %v1879 = vmax.f32 %v1236, %v1847
    %v1880 = vmax.f32 %v1237, %v1848
    %v1881 = vmax.f32 %v1238, %v1849
    %v1882 = vmax.f32 %v1239, %v1850
    %v1883 = vmax.f32 %v1879, %v1851
    %v1884 = vmax.f32 %v1880, %v1852
    %v1885 = vmax.f32 %v1881, %v1853
    %v1886 = vmax.f32 %v1882, %v1854
    %v1887 = vmax.f32 %v1883, %v1855
    %v1888 = vmax.f32 %v1884, %v1856
    %v1889 = vmax.f32 %v1885, %v1857
    %v1890 = vmax.f32 %v1886, %v1858
    %v1891 = vmax.f32 %v1887, %v1859
    %v1892 = vmax.f32 %v1888, %v1860
    %v1893 = vmax.f32 %v1889, %v1861
    %v1894 = vmax.f32 %v1890, %v1862
    %v1895 = vmax.f32 %v1891, %v1863
    %v1896 = vmax.f32 %v1892, %v1864
    %v1897 = vmax.f32 %v1893, %v1865
    %v1898 = vmax.f32 %v1894, %v1866
    %v1899 = vmax.f32 %v1895, %v1867
    %v1900 = vmax.f32 %v1896, %v1868
    %v1901 = vmax.f32 %v1897, %v1869
    %v1902 = vmax.f32 %v1898, %v1870
    %v1903 = vmax.f32 %v1899, %v1871
    %v1904 = vmax.f32 %v1900, %v1872
    %v1905 = vmax.f32 %v1901, %v1873
    %v1906 = vmax.f32 %v1902, %v1874
    %v1907 = vmax.f32 %v1903, %v1875
    %v1908 = vmax.f32 %v1904, %v1876
    %v1909 = vmax.f32 %v1905, %v1877
    %v1910 = vmax.f32 %v1906, %v1878
    %v1911 = vld [vmem:[%s0 + $0x40] sm:$0xf]
    %v1912 = vld [vmem:[%s0 + $0x44] sm:$0xf]
    %v1913 = vld [vmem:[%s0 + $0x48] sm:$0xf]
    %v1914 = vld [vmem:[%s0 + $0x4c] sm:$0xf]
    %v1915 = vld [vmem:[%s0 + $0x50] sm:$0xf]
    %v1916 = vld [vmem:[%s0 + $0x54] sm:$0xf]
    %v1917 = vld [vmem:[%s0 + $0x58] sm:$0xf]
    %v1918 = vld [vmem:[%s0 + $0x5c] sm:$0xf]
    %v1927 = vunpack.c.l.b16 %v1911
    %v1928 = vunpack.c.l.b16 %v1912
    %v1929 = vunpack.c.l.b16 %v1913
    %v1930 = vunpack.c.l.b16 %v1914
    %v1931 = vunpack.c.l.b16 %v1915
    %v1932 = vunpack.c.l.b16 %v1916
    %v1933 = vunpack.c.l.b16 %v1917
    %v1934 = vunpack.c.l.b16 %v1918
    %v1935 = vpack.c.b16 %v1928, %v1927
    %v1936 = vpack.c.b16 %v1930, %v1929
    %v1937 = vpack.c.b16 %v1932, %v1931
    %v1938 = vpack.c.b16 %v1934, %v1933
    %1943 = vmatprep.subr.bf16.mxu0 0
    %1944 = vmatpush1.bf16.msra.mxu0 %v1935
    %1945 = vmatprep.subr.bf16.mxu0 0
    %1946 = vmatpush1.bf16.msra.mxu0 %v1936
    %1947 = vmatprep.subr.bf16.mxu0 0
    %1948 = vmatpush1.bf16.msra.mxu0 %v1937
    %1949 = vmatprep.subr.bf16.mxu0 0
    %1950 = vmatpush1.bf16.msra.mxu0 %v1938
    %1951 = vmatprep.subr.bf16.mxu0 0
    %1952 = vmatpush1.bf16.msra.mxu0 0
    %1953 = vmatprep.subr.bf16.mxu0 0
    %1954 = vmatpush1.bf16.msra.mxu0 0
    %1955 = vmatprep.subr.bf16.mxu0 0
    %1956 = vmatpush1.bf16.msra.mxu0 0
    %1957 = vmatprep.subr.bf16.mxu0 0
    %1958 = vmatpush1.bf16.msra.mxu0 0
    %1959 = vmatprep.subr.bf16.mxu0 0
    %1960 = vmatpush1.bf16.msra.mxu0 0
    %1961 = vmatprep.subr.bf16.mxu0 0
    %1962 = vmatpush1.bf16.msra.mxu0 0
    %1963 = vmatprep.subr.bf16.mxu0 0
    %1964 = vmatpush1.bf16.msra.mxu0 0
    %1965 = vmatprep.subr.bf16.mxu0 0
    %1966 = vmatpush1.bf16.msra.mxu0 0
    %1967 = vmatprep.subr.bf16.mxu0 0
    %1968 = vmatpush1.bf16.msra.mxu0 0
    %1969 = vmatprep.subr.bf16.mxu0 0
    %1970 = vmatpush1.bf16.msra.mxu0 0
    %1971 = vmatprep.subr.bf16.mxu0 0
    %1972 = vmatpush1.bf16.msra.mxu0 0
    %1973 = vmatprep.subr.bf16.mxu0 0
    %1974 = vmatpush1.bf16.msra.mxu0 0
    %1975 = vmatprep.mubr.bf16.mxu0 0
    %1976 = vmatmul.mubr.bf16.gmra.mrb[0].mxu0 %v254
    %v1977 = vpop.f32.mrb[0].mxu0
    %v1978 = vadd.f32 0.0, %v1977
    %v1979 = vpop.f32.mrb[0].mxu0
    %v1980 = vpop.f32.mrb[0].mxu0
    %v1981 = vadd.f32 0.0, %v1980
    %v1982 = vpop.f32.mrb[0].mxu0
    %1983 = vmatprep.mubr.bf16.mxu0 0
    %1984 = vmatmul.mubr.bf16.gmra.mrb[0].mxu0 %v257
    %v1985 = vpop.f32.mrb[0].mxu0
    %v1986 = vadd.f32 0.0, %v1985
    %v1987 = vpop.f32.mrb[0].mxu0
    %v1988 = vpop.f32.mrb[0].mxu0
    %v1989 = vadd.f32 0.0, %v1988
    %v1990 = vpop.f32.mrb[0].mxu0
    %1991 = vmatprep.mubr.bf16.mxu0 0
    %1992 = vmatmul.mubr.bf16.gmra.mrb[0].mxu0 %v260
    %v1993 = vpop.f32.mrb[0].mxu0
    %v1994 = vadd.f32 0.0, %v1993
    %v1995 = vpop.f32.mrb[0].mxu0
    %v1996 = vpop.f32.mrb[0].mxu0
    %v1997 = vadd.f32 0.0, %v1996
    %v1998 = vpop.f32.mrb[0].mxu0
    %1999 = vmatprep.mubr.bf16.mxu0 0
    %2000 = vmatmul.mubr.bf16.gmra.mrb[0].mxu0 %v263
    %v2001 = vpop.f32.mrb[0].mxu0
    %v2002 = vadd.f32 0.0, %v2001
    %v2003 = vpop.f32.mrb[0].mxu0
    %v2004 = vpop.f32.mrb[0].mxu0
    %v2005 = vadd.f32 0.0, %v2004
    %v2006 = vpop.f32.mrb[0].mxu0
    %2007 = vmatprep.mubr.bf16.mxu0 0
    %2008 = vmatmul.mubr.bf16.gmra.mrb[0].mxu0 %v266
    %v2009 = vpop.f32.mrb[0].mxu0
    %v2010 = vadd.f32 0.0, %v2009
    %v2011 = vpop.f32.mrb[0].mxu0
    %v2012 = vpop.f32.mrb[0].mxu0
    %v2013 = vadd.f32 0.0, %v2012
    %v2014 = vpop.f32.mrb[0].mxu0
    %2015 = vmatprep.mubr.bf16.mxu0 0
    %2016 = vmatmul.mubr.bf16.gmra.mrb[0].mxu0 %v269
    %v2017 = vpop.f32.mrb[0].mxu0
    %v2018 = vadd.f32 0.0, %v2017
    %v2019 = vpop.f32.mrb[0].mxu0
    %v2020 = vpop.f32.mrb[0].mxu0
    %v2021 = vadd.f32 0.0, %v2020
    %v2022 = vpop.f32.mrb[0].mxu0
    %2023 = vmatprep.mubr.bf16.mxu0 0
    %2024 = vmatmul.mubr.bf16.gmra.mrb[0].mxu0 %v272
    %v2025 = vpop.f32.mrb[0].mxu0
    %v2026 = vadd.f32 0.0, %v2025
    %v2027 = vpop.f32.mrb[0].mxu0
    %v2028 = vpop.f32.mrb[0].mxu0
    %v2029 = vadd.f32 0.0, %v2028
    %v2030 = vpop.f32.mrb[0].mxu0
    %2031 = vmatprep.mubr.bf16.mxu0 0
    %2032 = vmatmul.mubr.bf16.gmra.mrb[0].mxu0 %v275
    %v2033 = vpop.f32.mrb[0].mxu0
    %v2034 = vadd.f32 0.0, %v2033
    %v2035 = vpop.f32.mrb[0].mxu0
    %v2036 = vpop.f32.mrb[0].mxu0
    %v2037 = vadd.f32 0.0, %v2036
    %v2038 = vpop.f32.mrb[0].mxu0
    %2039 = vmatprep.mubr.bf16.mxu0 0
    %2040 = vmatmul.mubr.bf16.gmra.mrb[0].mxu0 %v278
    %v2041 = vpop.f32.mrb[0].mxu0
    %v2042 = vadd.f32 0.0, %v2041
    %v2043 = vpop.f32.mrb[0].mxu0
    %v2044 = vpop.f32.mrb[0].mxu0
    %v2045 = vadd.f32 0.0, %v2044
    %v2046 = vpop.f32.mrb[0].mxu0
    %2047 = vmatprep.mubr.bf16.mxu0 0
    %2048 = vmatmul.mubr.bf16.gmra.mrb[0].mxu0 %v281
    %v2049 = vpop.f32.mrb[0].mxu0
    %v2050 = vadd.f32 0.0, %v2049
    %v2051 = vpop.f32.mrb[0].mxu0
    %v2052 = vpop.f32.mrb[0].mxu0
    %v2053 = vadd.f32 0.0, %v2052
    %v2054 = vpop.f32.mrb[0].mxu0
    %2055 = vmatprep.mubr.bf16.mxu0 0
    %2056 = vmatmul.mubr.bf16.gmra.mrb[0].mxu0 %v284
    %v2057 = vpop.f32.mrb[0].mxu0
    %v2058 = vadd.f32 0.0, %v2057
    %v2059 = vpop.f32.mrb[0].mxu0
    %v2060 = vpop.f32.mrb[0].mxu0
    %v2061 = vadd.f32 0.0, %v2060
    %v2062 = vpop.f32.mrb[0].mxu0
    %2063 = vmatprep.mubr.bf16.mxu0 0
    %2064 = vmatmul.mubr.bf16.gmra.mrb[0].mxu0 %v287
    %v2065 = vpop.f32.mrb[0].mxu0
    %v2066 = vadd.f32 0.0, %v2065
    %v2067 = vpop.f32.mrb[0].mxu0
    %v2068 = vpop.f32.mrb[0].mxu0
    %v2069 = vadd.f32 0.0, %v2068
    %v2070 = vpop.f32.mrb[0].mxu0
    %2071 = vmatprep.mubr.bf16.mxu0 0
    %2072 = vmatmul.mubr.bf16.gmra.mrb[0].mxu0 %v290
    %v2073 = vpop.f32.mrb[0].mxu0
    %v2074 = vadd.f32 0.0, %v2073
    %v2075 = vpop.f32.mrb[0].mxu0
    %v2076 = vpop.f32.mrb[0].mxu0
    %v2077 = vadd.f32 0.0, %v2076
    %v2078 = vpop.f32.mrb[0].mxu0
    %2079 = vmatprep.mubr.bf16.mxu0 0
    %2080 = vmatmul.mubr.bf16.gmra.mrb[0].mxu0 %v293
    %v2081 = vpop.f32.mrb[0].mxu0
    %v2082 = vadd.f32 0.0, %v2081
    %v2083 = vpop.f32.mrb[0].mxu0
    %v2084 = vpop.f32.mrb[0].mxu0
    %v2085 = vadd.f32 0.0, %v2084
    %v2086 = vpop.f32.mrb[0].mxu0
    %2087 = vmatprep.mubr.bf16.mxu0 0
    %2088 = vmatmul.mubr.bf16.gmra.mrb[0].mxu0 %v296
    %v2089 = vpop.f32.mrb[0].mxu0
    %v2090 = vadd.f32 0.0, %v2089
    %v2091 = vpop.f32.mrb[0].mxu0
    %v2092 = vpop.f32.mrb[0].mxu0
    %v2093 = vadd.f32 0.0, %v2092
    %v2094 = vpop.f32.mrb[0].mxu0
    %2095 = vmatprep.mubr.bf16.mxu0 0
    %2096 = vmatmul.mubr.bf16.gmra.mrb[0].mxu0 %v299
    %v2097 = vpop.f32.mrb[0].mxu0
    %v2098 = vadd.f32 0.0, %v2097
    %v2099 = vpop.f32.mrb[0].mxu0
    %v2100 = vpop.f32.mrb[0].mxu0
    %v2101 = vadd.f32 0.0, %v2100
    %v2102 = vpop.f32.mrb[0].mxu0
    %2103 = vmatprep.mubr.bf16.mxu0 0
    %2104 = vmatmul.mubr.bf16.gmra.mrb[0].mxu0 %v302
    %v2105 = vpop.f32.mrb[0].mxu0
    %v2106 = vadd.f32 0.0, %v2105
    %v2107 = vpop.f32.mrb[0].mxu0
    %v2108 = vpop.f32.mrb[0].mxu0
    %v2109 = vadd.f32 0.0, %v2108
    %v2110 = vpop.f32.mrb[0].mxu0
    %2111 = vmatprep.mubr.bf16.mxu0 0
    %2112 = vmatmul.mubr.bf16.gmra.mrb[0].mxu0 %v305
    %v2113 = vpop.f32.mrb[0].mxu0
    %v2114 = vadd.f32 0.0, %v2113
    %v2115 = vpop.f32.mrb[0].mxu0
    %v2116 = vpop.f32.mrb[0].mxu0
    %v2117 = vadd.f32 0.0, %v2116
    %v2118 = vpop.f32.mrb[0].mxu0
    %2119 = vmatprep.mubr.bf16.mxu0 0
    %2120 = vmatmul.mubr.bf16.gmra.mrb[0].mxu0 %v308
    %v2121 = vpop.f32.mrb[0].mxu0
    %v2122 = vadd.f32 0.0, %v2121
    %v2123 = vpop.f32.mrb[0].mxu0
    %v2124 = vpop.f32.mrb[0].mxu0
    %v2125 = vadd.f32 0.0, %v2124
    %v2126 = vpop.f32.mrb[0].mxu0
    %2127 = vmatprep.mubr.bf16.mxu0 0
    %2128 = vmatmul.mubr.bf16.gmra.mrb[0].mxu0 %v311
    %v2129 = vpop.f32.mrb[0].mxu0
    %v2130 = vadd.f32 0.0, %v2129
    %v2131 = vpop.f32.mrb[0].mxu0
    %v2132 = vpop.f32.mrb[0].mxu0
    %v2133 = vadd.f32 0.0, %v2132
    %v2134 = vpop.f32.mrb[0].mxu0
    %2135 = vdwg.mxu0
    %v2136 = vmax.f32 %v1978, 0.0
    %v2137 = vmax.f32 %v1981, 0.0
    %v2138 = vmax.f32 %v1986, 0.0
    %v2139 = vmax.f32 %v1989, 0.0
    %v2140 = vmax.f32 %v1994, 0.0
    %v2141 = vmax.f32 %v1997, 0.0
    %v2142 = vmax.f32 %v2002, 0.0
    %v2143 = vmax.f32 %v2005, 0.0
    %v2144 = vmax.f32 %v2010, 0.0
    %v2145 = vmax.f32 %v2013, 0.0
    %v2146 = vmax.f32 %v2018, 0.0
    %v2147 = vmax.f32 %v2021, 0.0
    %v2148 = vmax.f32 %v2026, 0.0
    %v2149 = vmax.f32 %v2029, 0.0
    %v2150 = vmax.f32 %v2034, 0.0
    %v2151 = vmax.f32 %v2037, 0.0
    %v2152 = vmax.f32 %v2042, 0.0
    %v2153 = vmax.f32 %v2045, 0.0
    %v2154 = vmax.f32 %v2050, 0.0
    %v2155 = vmax.f32 %v2053, 0.0
    %v2156 = vmax.f32 %v2058, 0.0
    %v2157 = vmax.f32 %v2061, 0.0
    %v2158 = vmax.f32 %v2066, 0.0
    %v2159 = vmax.f32 %v2069, 0.0
    %v2160 = vmax.f32 %v2074, 0.0
    %v2161 = vmax.f32 %v2077, 0.0
    %v2162 = vmax.f32 %v2082, 0.0
    %v2163 = vmax.f32 %v2085, 0.0
    %v2164 = vmax.f32 %v2090, 0.0
    %v2165 = vmax.f32 %v2093, 0.0
    %v2166 = vmax.f32 %v2098, 0.0
    %v2167 = vmax.f32 %v2101, 0.0
    %v2168 = vmax.f32 %v2106, 0.0
    %v2169 = vmax.f32 %v2109, 0.0
    %v2170 = vmax.f32 %v2114, 0.0
    %v2171 = vmax.f32 %v2117, 0.0
    %v2172 = vmax.f32 %v2122, 0.0
    %v2173 = vmax.f32 %v2125, 0.0
    %v2174 = vmax.f32 %v2130, 0.0
    %v2175 = vmax.f32 %v2133, 0.0
    %v2176 = vpack.c.bf16 %v2137, %v2136
    %v2177 = vpack.c.bf16 %v2139, %v2138
    %v2178 = vpack.c.bf16 %v2141, %v2140
    %v2179 = vpack.c.bf16 %v2143, %v2142
    %v2180 = vpack.c.bf16 %v2145, %v2144
    %v2181 = vpack.c.bf16 %v2147, %v2146
    %v2182 = vpack.c.bf16 %v2149, %v2148
    %v2183 = vpack.c.bf16 %v2151, %v2150
    %v2184 = vpack.c.bf16 %v2153, %v2152
    %v2185 = vpack.c.bf16 %v2155, %v2154
    %v2186 = vpack.c.bf16 %v2157, %v2156
    %v2187 = vpack.c.bf16 %v2159, %v2158
    %v2188 = vpack.c.bf16 %v2161, %v2160
    %v2189 = vpack.c.bf16 %v2163, %v2162
    %v2190 = vpack.c.bf16 %v2165, %v2164
    %v2191 = vpack.c.bf16 %v2167, %v2166
    %v2192 = vpack.c.bf16 %v2169, %v2168
    %v2193 = vpack.c.bf16 %v2171, %v2170
    %v2194 = vpack.c.bf16 %v2173, %v2172
    %v2195 = vpack.c.bf16 %v2175, %v2174
    %2196 = vmatprep.subr.bf16.mxu0 0
    %2197 = vmatpush1.bf16.msra.mxu0 %v2176
    %2198 = vmatprep.subr.bf16.mxu0 0
    %2199 = vmatpush1.bf16.msra.mxu0 %v2177
    %2200 = vmatprep.subr.bf16.mxu0 0
    %2201 = vmatpush1.bf16.msra.mxu0 %v2178
    %2202 = vmatprep.subr.bf16.mxu0 0
    %2203 = vmatpush1.bf16.msra.mxu0 %v2179
    %2204 = vmatprep.subr.bf16.mxu0 0
    %2205 = vmatpush1.bf16.msra.mxu0 %v2180
    %2206 = vmatprep.subr.bf16.mxu0 0
    %2207 = vmatpush1.bf16.msra.mxu0 %v2181
    %2208 = vmatprep.subr.bf16.mxu0 0
    %2209 = vmatpush1.bf16.msra.mxu0 %v2182
    %2210 = vmatprep.subr.bf16.mxu0 0
    %2211 = vmatpush1.bf16.msra.mxu0 %v2183
    %2212 = vmatprep.subr.bf16.mxu0 0
    %2213 = vmatpush1.bf16.msra.mxu0 %v2184
    %2214 = vmatprep.subr.bf16.mxu0 0
    %2215 = vmatpush1.bf16.msra.mxu0 %v2185
    %2216 = vmatprep.subr.bf16.mxu0 0
    %2217 = vmatpush1.bf16.msra.mxu0 %v2186
    %2218 = vmatprep.subr.bf16.mxu0 0
    %2219 = vmatpush1.bf16.msra.mxu0 %v2187
    %2220 = vmatprep.subr.bf16.mxu0 0
    %2221 = vmatpush1.bf16.msra.mxu0 %v2188
    %2222 = vmatprep.subr.bf16.mxu0 0
    %2223 = vmatpush1.bf16.msra.mxu0 %v2189
    %2224 = vmatprep.subr.bf16.mxu0 0
    %2225 = vmatpush1.bf16.msra.mxu0 %v2190
    %2226 = vmatprep.subr.bf16.mxu0 0
    %2227 = vmatpush1.bf16.msra.mxu0 %v2191
    %2228 = vmatprep.mubr.bf16.mxu0 %v727
    %2229 = vmatmul.mubr.bf16.gmra.mrb[0].mxu0 %v726
    %v2230 = vpop.f32.mrb[0].mxu0
    %v2231 = vadd.f32 0.0, %v2230
    %v2232 = vpop.f32.mrb[0].mxu0
    %v2233 = vpop.f32.mrb[0].mxu0
    %v2234 = vadd.f32 0.0, %v2233
    %v2235 = vpop.f32.mrb[0].mxu0
    %2236 = vmatprep.mubr.bf16.mxu0 %v730
    %2237 = vmatmul.mubr.bf16.gmra.mrb[0].mxu0 %v729
    %v2238 = vpop.f32.mrb[0].mxu0
    %v2239 = vadd.f32 0.0, %v2238
    %v2240 = vpop.f32.mrb[0].mxu0
    %v2241 = vpop.f32.mrb[0].mxu0
    %v2242 = vadd.f32 0.0, %v2241
    %v2243 = vpop.f32.mrb[0].mxu0
    %2244 = vmatprep.mubr.bf16.mxu0 %v733
    %2245 = vmatmul.mubr.bf16.gmra.mrb[0].mxu0 %v732
    %v2246 = vpop.f32.mrb[0].mxu0
    %v2247 = vadd.f32 0.0, %v2246
    %v2248 = vpop.f32.mrb[0].mxu0
    %v2249 = vpop.f32.mrb[0].mxu0
    %v2250 = vadd.f32 0.0, %v2249
    %v2251 = vpop.f32.mrb[0].mxu0
    %2252 = vmatprep.mubr.bf16.mxu0 %v736
    %2253 = vmatmul.mubr.bf16.gmra.mrb[0].mxu0 %v735
    %v2254 = vpop.f32.mrb[0].mxu0
    %v2255 = vadd.f32 0.0, %v2254
    %v2256 = vpop.f32.mrb[0].mxu0
    %v2257 = vpop.f32.mrb[0].mxu0
    %v2258 = vadd.f32 0.0, %v2257
    %v2259 = vpop.f32.mrb[0].mxu0
    %2260 = vmatprep.mubr.bf16.mxu0 %v739
    %2261 = vmatmul.mubr.bf16.gmra.mrb[0].mxu0 %v738
    %v2262 = vpop.f32.mrb[0].mxu0
    %v2263 = vadd.f32 0.0, %v2262
    %v2264 = vpop.f32.mrb[0].mxu0
    %v2265 = vpop.f32.mrb[0].mxu0
    %v2266 = vadd.f32 0.0, %v2265
    %v2267 = vpop.f32.mrb[0].mxu0
    %2268 = vmatprep.mubr.bf16.mxu0 %v742
    %2269 = vmatmul.mubr.bf16.gmra.mrb[0].mxu0 %v741
    %v2270 = vpop.f32.mrb[0].mxu0
    %v2271 = vadd.f32 0.0, %v2270
    %v2272 = vpop.f32.mrb[0].mxu0
    %v2273 = vpop.f32.mrb[0].mxu0
    %v2274 = vadd.f32 0.0, %v2273
    %v2275 = vpop.f32.mrb[0].mxu0
    %2276 = vmatprep.mubr.bf16.mxu0 %v745
    %2277 = vmatmul.mubr.bf16.gmra.mrb[0].mxu0 %v744
    %v2278 = vpop.f32.mrb[0].mxu0
    %v2279 = vadd.f32 0.0, %v2278
    %v2280 = vpop.f32.mrb[0].mxu0
    %v2281 = vpop.f32.mrb[0].mxu0
    %v2282 = vadd.f32 0.0, %v2281
    %v2283 = vpop.f32.mrb[0].mxu0
    %2284 = vmatprep.mubr.bf16.mxu0 %v748
    %2285 = vmatmul.mubr.bf16.gmra.mrb[0].mxu0 %v747
    %v2286 = vpop.f32.mrb[0].mxu0
    %v2287 = vadd.f32 0.0, %v2286
    %v2288 = vpop.f32.mrb[0].mxu0
    %v2289 = vpop.f32.mrb[0].mxu0
    %v2290 = vadd.f32 0.0, %v2289
    %v2291 = vpop.f32.mrb[0].mxu0
    %2292 = vmatprep.mubr.bf16.mxu0 %v751
    %2293 = vmatmul.mubr.bf16.gmra.mrb[0].mxu0 %v750
    %v2294 = vpop.f32.mrb[0].mxu0
    %v2295 = vadd.f32 0.0, %v2294
    %v2296 = vpop.f32.mrb[0].mxu0
    %v2297 = vpop.f32.mrb[0].mxu0
    %v2298 = vadd.f32 0.0, %v2297
    %v2299 = vpop.f32.mrb[0].mxu0
    %2300 = vmatprep.mubr.bf16.mxu0 %v754
    %2301 = vmatmul.mubr.bf16.gmra.mrb[0].mxu0 %v753
    %v2302 = vpop.f32.mrb[0].mxu0
    %v2303 = vadd.f32 0.0, %v2302
    %v2304 = vpop.f32.mrb[0].mxu0
    %v2305 = vpop.f32.mrb[0].mxu0
    %v2306 = vadd.f32 0.0, %v2305
    %v2307 = vpop.f32.mrb[0].mxu0
    %2308 = vmatprep.mubr.bf16.mxu0 %v757
    %2309 = vmatmul.mubr.bf16.gmra.mrb[0].mxu0 %v756
    %v2310 = vpop.f32.mrb[0].mxu0
    %v2311 = vadd.f32 0.0, %v2310
    %v2312 = vpop.f32.mrb[0].mxu0
    %v2313 = vpop.f32.mrb[0].mxu0
    %v2314 = vadd.f32 0.0, %v2313
    %v2315 = vpop.f32.mrb[0].mxu0
    %2316 = vmatprep.mubr.bf16.mxu0 %v760
    %2317 = vmatmul.mubr.bf16.gmra.mrb[0].mxu0 %v759
    %v2318 = vpop.f32.mrb[0].mxu0
    %v2319 = vadd.f32 0.0, %v2318
    %v2320 = vpop.f32.mrb[0].mxu0
    %v2321 = vpop.f32.mrb[0].mxu0
    %v2322 = vadd.f32 0.0, %v2321
    %v2323 = vpop.f32.mrb[0].mxu0
    %2324 = vmatprep.mubr.bf16.mxu0 %v763
    %2325 = vmatmul.mubr.bf16.gmra.mrb[0].mxu0 %v762
    %v2326 = vpop.f32.mrb[0].mxu0
    %v2327 = vadd.f32 0.0, %v2326
    %v2328 = vpop.f32.mrb[0].mxu0
    %v2329 = vpop.f32.mrb[0].mxu0
    %v2330 = vadd.f32 0.0, %v2329
    %v2331 = vpop.f32.mrb[0].mxu0
    %2332 = vmatprep.mubr.bf16.mxu0 %v766
    %2333 = vmatmul.mubr.bf16.gmra.mrb[0].mxu0 %v765
    %v2334 = vpop.f32.mrb[0].mxu0
    %v2335 = vadd.f32 0.0, %v2334
    %v2336 = vpop.f32.mrb[0].mxu0
    %v2337 = vpop.f32.mrb[0].mxu0
    %v2338 = vadd.f32 0.0, %v2337
    %v2339 = vpop.f32.mrb[0].mxu0
    %2340 = vmatprep.mubr.bf16.mxu0 %v769
    %2341 = vmatmul.mubr.bf16.gmra.mrb[0].mxu0 %v768
    %v2342 = vpop.f32.mrb[0].mxu0
    %v2343 = vadd.f32 0.0, %v2342
    %v2344 = vpop.f32.mrb[0].mxu0
    %v2345 = vpop.f32.mrb[0].mxu0
    %v2346 = vadd.f32 0.0, %v2345
    %v2347 = vpop.f32.mrb[0].mxu0
    %2348 = vmatprep.mubr.bf16.mxu0 %v772
    %2349 = vmatmul.mubr.bf16.gmra.mrb[0].mxu0 %v771
    %v2350 = vpop.f32.mrb[0].mxu0
    %v2351 = vadd.f32 0.0, %v2350
    %v2352 = vpop.f32.mrb[0].mxu0
    %v2353 = vpop.f32.mrb[0].mxu0
    %v2354 = vadd.f32 0.0, %v2353
    %v2355 = vpop.f32.mrb[0].mxu0
    %2356 = vdwg.mxu0
    %2357 = vmatprep.subr.bf16.mxu0 0
    %2358 = vmatpush1.bf16.msra.mxu0 %v2192
    %2359 = vmatprep.subr.bf16.mxu0 0
    %2360 = vmatpush1.bf16.msra.mxu0 %v2193
    %2361 = vmatprep.subr.bf16.mxu0 0
    %2362 = vmatpush1.bf16.msra.mxu0 %v2194
    %2363 = vmatprep.subr.bf16.mxu0 0
    %2364 = vmatpush1.bf16.msra.mxu0 %v2195
    %2365 = vmatprep.subr.bf16.mxu0 0
    %2366 = vmatpush1.bf16.msra.mxu0 0
    %2367 = vmatprep.subr.bf16.mxu0 0
    %2368 = vmatpush1.bf16.msra.mxu0 0
    %2369 = vmatprep.subr.bf16.mxu0 0
    %2370 = vmatpush1.bf16.msra.mxu0 0
    %2371 = vmatprep.subr.bf16.mxu0 0
    %2372 = vmatpush1.bf16.msra.mxu0 0
    %2373 = vmatprep.subr.bf16.mxu0 0
    %2374 = vmatpush1.bf16.msra.mxu0 0
    %2375 = vmatprep.subr.bf16.mxu0 0
    %2376 = vmatpush1.bf16.msra.mxu0 0
    %2377 = vmatprep.subr.bf16.mxu0 0
    %2378 = vmatpush1.bf16.msra.mxu0 0
    %2379 = vmatprep.subr.bf16.mxu0 0
    %2380 = vmatpush1.bf16.msra.mxu0 0
    %2381 = vmatprep.subr.bf16.mxu0 0
    %2382 = vmatpush1.bf16.msra.mxu0 0
    %2383 = vmatprep.subr.bf16.mxu0 0
    %2384 = vmatpush1.bf16.msra.mxu0 0
    %2385 = vmatprep.subr.bf16.mxu0 0
    %2386 = vmatpush1.bf16.msra.mxu0 0
    %2387 = vmatprep.subr.bf16.mxu0 0
    %2388 = vmatpush1.bf16.msra.mxu0 0
    %2389 = vmatprep.mubr.bf16.mxu0 0
    %2390 = vmatmul.mubr.bf16.gmra.mrb[0].mxu0 %v807
    %v2391 = vpop.f32.mrb[0].mxu0
    %v2392 = vadd.f32 %v2231, %v2391
    %v2393 = vpop.f32.mrb[0].mxu0
    %v2394 = vpop.f32.mrb[0].mxu0
    %v2395 = vadd.f32 %v2234, %v2394
    %v2396 = vpop.f32.mrb[0].mxu0
    %2397 = vmatprep.mubr.bf16.mxu0 0
    %2398 = vmatmul.mubr.bf16.gmra.mrb[0].mxu0 %v810
    %v2399 = vpop.f32.mrb[0].mxu0
    %v2400 = vadd.f32 %v2239, %v2399
    %v2401 = vpop.f32.mrb[0].mxu0
    %v2402 = vpop.f32.mrb[0].mxu0
    %v2403 = vadd.f32 %v2242, %v2402
    %v2404 = vpop.f32.mrb[0].mxu0
    %2405 = vmatprep.mubr.bf16.mxu0 0
    %2406 = vmatmul.mubr.bf16.gmra.mrb[0].mxu0 %v813
    %v2407 = vpop.f32.mrb[0].mxu0
    %v2408 = vadd.f32 %v2247, %v2407
    %v2409 = vpop.f32.mrb[0].mxu0
    %v2410 = vpop.f32.mrb[0].mxu0
    %v2411 = vadd.f32 %v2250, %v2410
    %v2412 = vpop.f32.mrb[0].mxu0
    %2413 = vmatprep.mubr.bf16.mxu0 0
    %2414 = vmatmul.mubr.bf16.gmra.mrb[0].mxu0 %v816
    %v2415 = vpop.f32.mrb[0].mxu0
    %v2416 = vadd.f32 %v2255, %v2415
    %v2417 = vpop.f32.mrb[0].mxu0
    %v2418 = vpop.f32.mrb[0].mxu0
    %v2419 = vadd.f32 %v2258, %v2418
    %v2420 = vpop.f32.mrb[0].mxu0
    %2421 = vmatprep.mubr.bf16.mxu0 0
    %2422 = vmatmul.mubr.bf16.gmra.mrb[0].mxu0 %v819
    %v2423 = vpop.f32.mrb[0].mxu0
    %v2424 = vadd.f32 %v2263, %v2423
    %v2425 = vpop.f32.mrb[0].mxu0
    %v2426 = vpop.f32.mrb[0].mxu0
    %v2427 = vadd.f32 %v2266, %v2426
    %v2428 = vpop.f32.mrb[0].mxu0
    %2429 = vmatprep.mubr.bf16.mxu0 0
    %2430 = vmatmul.mubr.bf16.gmra.mrb[0].mxu0 %v822
    %v2431 = vpop.f32.mrb[0].mxu0
    %v2432 = vadd.f32 %v2271, %v2431
    %v2433 = vpop.f32.mrb[0].mxu0
    %v2434 = vpop.f32.mrb[0].mxu0
    %v2435 = vadd.f32 %v2274, %v2434
    %v2436 = vpop.f32.mrb[0].mxu0
    %2437 = vmatprep.mubr.bf16.mxu0 0
    %2438 = vmatmul.mubr.bf16.gmra.mrb[0].mxu0 %v825
    %v2439 = vpop.f32.mrb[0].mxu0
    %v2440 = vadd.f32 %v2279, %v2439
    %v2441 = vpop.f32.mrb[0].mxu0
    %v2442 = vpop.f32.mrb[0].mxu0
    %v2443 = vadd.f32 %v2282, %v2442
    %v2444 = vpop.f32.mrb[0].mxu0
    %2445 = vmatprep.mubr.bf16.mxu0 0
    %2446 = vmatmul.mubr.bf16.gmra.mrb[0].mxu0 %v828
    %v2447 = vpop.f32.mrb[0].mxu0
    %v2448 = vadd.f32 %v2287, %v2447
    %v2449 = vpop.f32.mrb[0].mxu0
    %v2450 = vpop.f32.mrb[0].mxu0
    %v2451 = vadd.f32 %v2290, %v2450
    %v2452 = vpop.f32.mrb[0].mxu0
    %2453 = vmatprep.mubr.bf16.mxu0 0
    %2454 = vmatmul.mubr.bf16.gmra.mrb[0].mxu0 %v831
    %v2455 = vpop.f32.mrb[0].mxu0
    %v2456 = vadd.f32 %v2295, %v2455
    %v2457 = vpop.f32.mrb[0].mxu0
    %v2458 = vpop.f32.mrb[0].mxu0
    %v2459 = vadd.f32 %v2298, %v2458
    %v2460 = vpop.f32.mrb[0].mxu0
    %2461 = vmatprep.mubr.bf16.mxu0 0
    %2462 = vmatmul.mubr.bf16.gmra.mrb[0].mxu0 %v834
    %v2463 = vpop.f32.mrb[0].mxu0
    %v2464 = vadd.f32 %v2303, %v2463
    %v2465 = vpop.f32.mrb[0].mxu0
    %v2466 = vpop.f32.mrb[0].mxu0
    %v2467 = vadd.f32 %v2306, %v2466
    %v2468 = vpop.f32.mrb[0].mxu0
    %2469 = vmatprep.mubr.bf16.mxu0 0
    %2470 = vmatmul.mubr.bf16.gmra.mrb[0].mxu0 %v837
    %v2471 = vpop.f32.mrb[0].mxu0
    %v2472 = vadd.f32 %v2311, %v2471
    %v2473 = vpop.f32.mrb[0].mxu0
    %v2474 = vpop.f32.mrb[0].mxu0
    %v2475 = vadd.f32 %v2314, %v2474
    %v2476 = vpop.f32.mrb[0].mxu0
    %2477 = vmatprep.mubr.bf16.mxu0 0
    %2478 = vmatmul.mubr.bf16.gmra.mrb[0].mxu0 %v840
    %v2479 = vpop.f32.mrb[0].mxu0
    %v2480 = vadd.f32 %v2319, %v2479
    %v2481 = vpop.f32.mrb[0].mxu0
    %v2482 = vpop.f32.mrb[0].mxu0
    %v2483 = vadd.f32 %v2322, %v2482
    %v2484 = vpop.f32.mrb[0].mxu0
    %2485 = vmatprep.mubr.bf16.mxu0 0
    %2486 = vmatmul.mubr.bf16.gmra.mrb[0].mxu0 %v843
    %v2487 = vpop.f32.mrb[0].mxu0
    %v2488 = vadd.f32 %v2327, %v2487
    %v2489 = vpop.f32.mrb[0].mxu0
    %v2490 = vpop.f32.mrb[0].mxu0
    %v2491 = vadd.f32 %v2330, %v2490
    %v2492 = vpop.f32.mrb[0].mxu0
    %2493 = vmatprep.mubr.bf16.mxu0 0
    %2494 = vmatmul.mubr.bf16.gmra.mrb[0].mxu0 %v846
    %v2495 = vpop.f32.mrb[0].mxu0
    %v2496 = vadd.f32 %v2335, %v2495
    %v2497 = vpop.f32.mrb[0].mxu0
    %v2498 = vpop.f32.mrb[0].mxu0
    %v2499 = vadd.f32 %v2338, %v2498
    %v2500 = vpop.f32.mrb[0].mxu0
    %2501 = vmatprep.mubr.bf16.mxu0 0
    %2502 = vmatmul.mubr.bf16.gmra.mrb[0].mxu0 %v849
    %v2503 = vpop.f32.mrb[0].mxu0
    %v2504 = vadd.f32 %v2343, %v2503
    %v2505 = vpop.f32.mrb[0].mxu0
    %v2506 = vpop.f32.mrb[0].mxu0
    %v2507 = vadd.f32 %v2346, %v2506
    %v2508 = vpop.f32.mrb[0].mxu0
    %2509 = vmatprep.mubr.bf16.mxu0 0
    %2510 = vmatmul.mubr.bf16.gmra.mrb[0].mxu0 %v852
    %v2511 = vpop.f32.mrb[0].mxu0
    %v2512 = vadd.f32 %v2351, %v2511
    %v2513 = vpop.f32.mrb[0].mxu0
    %v2514 = vpop.f32.mrb[0].mxu0
    %v2515 = vadd.f32 %v2354, %v2514
    %v2516 = vpop.f32.mrb[0].mxu0
    %2517 = vdwg.mxu0
    %v2518 = vmax.f32 %v2392, 0.0
    %v2519 = vmax.f32 %v2395, 0.0
    %v2520 = vmax.f32 %v2400, 0.0
    %v2521 = vmax.f32 %v2403, 0.0
    %v2522 = vmax.f32 %v2408, 0.0
    %v2523 = vmax.f32 %v2411, 0.0
    %v2524 = vmax.f32 %v2416, 0.0
    %v2525 = vmax.f32 %v2419, 0.0
    %v2526 = vmax.f32 %v2424, 0.0
    %v2527 = vmax.f32 %v2427, 0.0
    %v2528 = vmax.f32 %v2432, 0.0
    %v2529 = vmax.f32 %v2435, 0.0
    %v2530 = vmax.f32 %v2440, 0.0
    %v2531 = vmax.f32 %v2443, 0.0
    %v2532 = vmax.f32 %v2448, 0.0
    %v2533 = vmax.f32 %v2451, 0.0
    %v2534 = vmax.f32 %v2456, 0.0
    %v2535 = vmax.f32 %v2459, 0.0
    %v2536 = vmax.f32 %v2464, 0.0
    %v2537 = vmax.f32 %v2467, 0.0
    %v2538 = vmax.f32 %v2472, 0.0
    %v2539 = vmax.f32 %v2475, 0.0
    %v2540 = vmax.f32 %v2480, 0.0
    %v2541 = vmax.f32 %v2483, 0.0
    %v2542 = vmax.f32 %v2488, 0.0
    %v2543 = vmax.f32 %v2491, 0.0
    %v2544 = vmax.f32 %v2496, 0.0
    %v2545 = vmax.f32 %v2499, 0.0
    %v2546 = vmax.f32 %v2504, 0.0
    %v2547 = vmax.f32 %v2507, 0.0
    %v2548 = vmax.f32 %v2512, 0.0
    %v2549 = vmax.f32 %v2515, 0.0
    %v2550 = vmax.f32 %v1907, %v2518
    %v2551 = vmax.f32 %v1908, %v2519
    %v2552 = vmax.f32 %v1909, %v2520
    %v2553 = vmax.f32 %v1910, %v2521
    %v2554 = vmax.f32 %v2550, %v2522
    %v2555 = vmax.f32 %v2551, %v2523
    %v2556 = vmax.f32 %v2552, %v2524
    %v2557 = vmax.f32 %v2553, %v2525
    %v2558 = vmax.f32 %v2554, %v2526
    %v2559 = vmax.f32 %v2555, %v2527
    %v2560 = vmax.f32 %v2556, %v2528
    %v2561 = vmax.f32 %v2557, %v2529
    %v2562 = vmax.f32 %v2558, %v2530
    %v2563 = vmax.f32 %v2559, %v2531
    %v2564 = vmax.f32 %v2560, %v2532
    %v2565 = vmax.f32 %v2561, %v2533
    %v2566 = vmax.f32 %v2562, %v2534
    %v2567 = vmax.f32 %v2563, %v2535
    %v2568 = vmax.f32 %v2564, %v2536
    %v2569 = vmax.f32 %v2565, %v2537
    %v2570 = vmax.f32 %v2566, %v2538
    %v2571 = vmax.f32 %v2567, %v2539
    %v2572 = vmax.f32 %v2568, %v2540
    %v2573 = vmax.f32 %v2569, %v2541
    %v2574 = vmax.f32 %v2570, %v2542
    %v2575 = vmax.f32 %v2571, %v2543
    %v2576 = vmax.f32 %v2572, %v2544
    %v2577 = vmax.f32 %v2573, %v2545
    %v2578 = vmax.f32 %v2574, %v2546
    %v2579 = vmax.f32 %v2575, %v2547
    %v2580 = vmax.f32 %v2576, %v2548
    %v2581 = vmax.f32 %v2577, %v2549
    %v2582 = vld [vmem:[%s0 + $0x60] sm:$0xf]
    %v2583 = vld [vmem:[%s0 + $0x64] sm:$0xf]
    %v2584 = vld [vmem:[%s0 + $0x68] sm:$0xf]
    %v2585 = vld [vmem:[%s0 + $0x6c] sm:$0xf]
    %v2586 = vld [vmem:[%s0 + $0x70] sm:$0xf]
    %v2587 = vld [vmem:[%s0 + $0x74] sm:$0xf]
    %v2588 = vld [vmem:[%s0 + $0x78] sm:$0xf]
    %v2589 = vld [vmem:[%s0 + $0x7c] sm:$0xf]
    %v2598 = vunpack.c.l.b16 %v2582
    %v2599 = vunpack.c.l.b16 %v2583
    %v2600 = vunpack.c.l.b16 %v2584
    %v2601 = vunpack.c.l.b16 %v2585
    %v2602 = vunpack.c.l.b16 %v2586
    %v2603 = vunpack.c.l.b16 %v2587
    %v2604 = vunpack.c.l.b16 %v2588
    %v2605 = vunpack.c.l.b16 %v2589
    %v2606 = vpack.c.b16 %v2599, %v2598
    %v2607 = vpack.c.b16 %v2601, %v2600
    %v2608 = vpack.c.b16 %v2603, %v2602
    %v2609 = vpack.c.b16 %v2605, %v2604
    %2614 = vmatprep.subr.bf16.mxu0 0
    %2615 = vmatpush1.bf16.msra.mxu0 %v2606
    %2616 = vmatprep.subr.bf16.mxu0 0
    %2617 = vmatpush1.bf16.msra.mxu0 %v2607
    %2618 = vmatprep.subr.bf16.mxu0 0
    %2619 = vmatpush1.bf16.msra.mxu0 %v2608
    %2620 = vmatprep.subr.bf16.mxu0 0
    %2621 = vmatpush1.bf16.msra.mxu0 %v2609
    %2622 = vmatprep.subr.bf16.mxu0 0
    %2623 = vmatpush1.bf16.msra.mxu0 0
    %2624 = vmatprep.subr.bf16.mxu0 0
    %2625 = vmatpush1.bf16.msra.mxu0 0
    %2626 = vmatprep.subr.bf16.mxu0 0
    %2627 = vmatpush1.bf16.msra.mxu0 0
    %2628 = vmatprep.subr.bf16.mxu0 0
    %2629 = vmatpush1.bf16.msra.mxu0 0
    %2630 = vmatprep.subr.bf16.mxu0 0
    %2631 = vmatpush1.bf16.msra.mxu0 0
    %2632 = vmatprep.subr.bf16.mxu0 0
    %2633 = vmatpush1.bf16.msra.mxu0 0
    %2634 = vmatprep.subr.bf16.mxu0 0
    %2635 = vmatpush1.bf16.msra.mxu0 0
    %2636 = vmatprep.subr.bf16.mxu0 0
    %2637 = vmatpush1.bf16.msra.mxu0 0
    %2638 = vmatprep.subr.bf16.mxu0 0
    %2639 = vmatpush1.bf16.msra.mxu0 0
    %2640 = vmatprep.subr.bf16.mxu0 0
    %2641 = vmatpush1.bf16.msra.mxu0 0
    %2642 = vmatprep.subr.bf16.mxu0 0
    %2643 = vmatpush1.bf16.msra.mxu0 0
    %2644 = vmatprep.subr.bf16.mxu0 0
    %2645 = vmatpush1.bf16.msra.mxu0 0
    %2646 = vmatprep.mubr.bf16.mxu0 0
    %2647 = vmatmul.mubr.bf16.gmra.mrb[0].mxu0 %v254
    %v2648 = vpop.f32.mrb[0].mxu0
    %v2649 = vadd.f32 0.0, %v2648
    %v2650 = vpop.f32.mrb[0].mxu0
    %v2651 = vpop.f32.mrb[0].mxu0
    %v2652 = vadd.f32 0.0, %v2651
    %v2653 = vpop.f32.mrb[0].mxu0
    %2654 = vmatprep.mubr.bf16.mxu0 0
    %2655 = vmatmul.mubr.bf16.gmra.mrb[0].mxu0 %v257
    %v2656 = vpop.f32.mrb[0].mxu0
    %v2657 = vadd.f32 0.0, %v2656
    %v2658 = vpop.f32.mrb[0].mxu0
    %v2659 = vpop.f32.mrb[0].mxu0
    %v2660 = vadd.f32 0.0, %v2659
    %v2661 = vpop.f32.mrb[0].mxu0
    %2662 = vmatprep.mubr.bf16.mxu0 0
    %2663 = vmatmul.mubr.bf16.gmra.mrb[0].mxu0 %v260
    %v2664 = vpop.f32.mrb[0].mxu0
    %v2665 = vadd.f32 0.0, %v2664
    %v2666 = vpop.f32.mrb[0].mxu0
    %v2667 = vpop.f32.mrb[0].mxu0
    %v2668 = vadd.f32 0.0, %v2667
    %v2669 = vpop.f32.mrb[0].mxu0
    %2670 = vmatprep.mubr.bf16.mxu0 0
    %2671 = vmatmul.mubr.bf16.gmra.mrb[0].mxu0 %v263
    %v2672 = vpop.f32.mrb[0].mxu0
    %v2673 = vadd.f32 0.0, %v2672
    %v2674 = vpop.f32.mrb[0].mxu0
    %v2675 = vpop.f32.mrb[0].mxu0
    %v2676 = vadd.f32 0.0, %v2675
    %v2677 = vpop.f32.mrb[0].mxu0
    %2678 = vmatprep.mubr.bf16.mxu0 0
    %2679 = vmatmul.mubr.bf16.gmra.mrb[0].mxu0 %v266
    %v2680 = vpop.f32.mrb[0].mxu0
    %v2681 = vadd.f32 0.0, %v2680
    %v2682 = vpop.f32.mrb[0].mxu0
    %v2683 = vpop.f32.mrb[0].mxu0
    %v2684 = vadd.f32 0.0, %v2683
    %v2685 = vpop.f32.mrb[0].mxu0
    %2686 = vmatprep.mubr.bf16.mxu0 0
    %2687 = vmatmul.mubr.bf16.gmra.mrb[0].mxu0 %v269
    %v2688 = vpop.f32.mrb[0].mxu0
    %v2689 = vadd.f32 0.0, %v2688
    %v2690 = vpop.f32.mrb[0].mxu0
    %v2691 = vpop.f32.mrb[0].mxu0
    %v2692 = vadd.f32 0.0, %v2691
    %v2693 = vpop.f32.mrb[0].mxu0
    %2694 = vmatprep.mubr.bf16.mxu0 0
    %2695 = vmatmul.mubr.bf16.gmra.mrb[0].mxu0 %v272
    %v2696 = vpop.f32.mrb[0].mxu0
    %v2697 = vadd.f32 0.0, %v2696
    %v2698 = vpop.f32.mrb[0].mxu0
    %v2699 = vpop.f32.mrb[0].mxu0
    %v2700 = vadd.f32 0.0, %v2699
    %v2701 = vpop.f32.mrb[0].mxu0
    %2702 = vmatprep.mubr.bf16.mxu0 0
    %2703 = vmatmul.mubr.bf16.gmra.mrb[0].mxu0 %v275
    %v2704 = vpop.f32.mrb[0].mxu0
    %v2705 = vadd.f32 0.0, %v2704
    %v2706 = vpop.f32.mrb[0].mxu0
    %v2707 = vpop.f32.mrb[0].mxu0
    %v2708 = vadd.f32 0.0, %v2707
    %v2709 = vpop.f32.mrb[0].mxu0
    %2710 = vmatprep.mubr.bf16.mxu0 0
    %2711 = vmatmul.mubr.bf16.gmra.mrb[0].mxu0 %v278
    %v2712 = vpop.f32.mrb[0].mxu0
    %v2713 = vadd.f32 0.0, %v2712
    %v2714 = vpop.f32.mrb[0].mxu0
    %v2715 = vpop.f32.mrb[0].mxu0
    %v2716 = vadd.f32 0.0, %v2715
    %v2717 = vpop.f32.mrb[0].mxu0
    %2718 = vmatprep.mubr.bf16.mxu0 0
    %2719 = vmatmul.mubr.bf16.gmra.mrb[0].mxu0 %v281
    %v2720 = vpop.f32.mrb[0].mxu0
    %v2721 = vadd.f32 0.0, %v2720
    %v2722 = vpop.f32.mrb[0].mxu0
    %v2723 = vpop.f32.mrb[0].mxu0
    %v2724 = vadd.f32 0.0, %v2723
    %v2725 = vpop.f32.mrb[0].mxu0
    %2726 = vmatprep.mubr.bf16.mxu0 0
    %2727 = vmatmul.mubr.bf16.gmra.mrb[0].mxu0 %v284
    %v2728 = vpop.f32.mrb[0].mxu0
    %v2729 = vadd.f32 0.0, %v2728
    %v2730 = vpop.f32.mrb[0].mxu0
    %v2731 = vpop.f32.mrb[0].mxu0
    %v2732 = vadd.f32 0.0, %v2731
    %v2733 = vpop.f32.mrb[0].mxu0
    %2734 = vmatprep.mubr.bf16.mxu0 0
    %2735 = vmatmul.mubr.bf16.gmra.mrb[0].mxu0 %v287
    %v2736 = vpop.f32.mrb[0].mxu0
    %v2737 = vadd.f32 0.0, %v2736
    %v2738 = vpop.f32.mrb[0].mxu0
    %v2739 = vpop.f32.mrb[0].mxu0
    %v2740 = vadd.f32 0.0, %v2739
    %v2741 = vpop.f32.mrb[0].mxu0
    %2742 = vmatprep.mubr.bf16.mxu0 0
    %2743 = vmatmul.mubr.bf16.gmra.mrb[0].mxu0 %v290
    %v2744 = vpop.f32.mrb[0].mxu0
    %v2745 = vadd.f32 0.0, %v2744
    %v2746 = vpop.f32.mrb[0].mxu0
    %v2747 = vpop.f32.mrb[0].mxu0
    %v2748 = vadd.f32 0.0, %v2747
    %v2749 = vpop.f32.mrb[0].mxu0
    %2750 = vmatprep.mubr.bf16.mxu0 0
    %2751 = vmatmul.mubr.bf16.gmra.mrb[0].mxu0 %v293
    %v2752 = vpop.f32.mrb[0].mxu0
    %v2753 = vadd.f32 0.0, %v2752
    %v2754 = vpop.f32.mrb[0].mxu0
    %v2755 = vpop.f32.mrb[0].mxu0
    %v2756 = vadd.f32 0.0, %v2755
    %v2757 = vpop.f32.mrb[0].mxu0
    %2758 = vmatprep.mubr.bf16.mxu0 0
    %2759 = vmatmul.mubr.bf16.gmra.mrb[0].mxu0 %v296
    %v2760 = vpop.f32.mrb[0].mxu0
    %v2761 = vadd.f32 0.0, %v2760
    %v2762 = vpop.f32.mrb[0].mxu0
    %v2763 = vpop.f32.mrb[0].mxu0
    %v2764 = vadd.f32 0.0, %v2763
    %v2765 = vpop.f32.mrb[0].mxu0
    %2766 = vmatprep.mubr.bf16.mxu0 0
    %2767 = vmatmul.mubr.bf16.gmra.mrb[0].mxu0 %v299
    %v2768 = vpop.f32.mrb[0].mxu0
    %v2769 = vadd.f32 0.0, %v2768
    %v2770 = vpop.f32.mrb[0].mxu0
    %v2771 = vpop.f32.mrb[0].mxu0
    %v2772 = vadd.f32 0.0, %v2771
    %v2773 = vpop.f32.mrb[0].mxu0
    %2774 = vmatprep.mubr.bf16.mxu0 0
    %2775 = vmatmul.mubr.bf16.gmra.mrb[0].mxu0 %v302
    %v2776 = vpop.f32.mrb[0].mxu0
    %v2777 = vadd.f32 0.0, %v2776
    %v2778 = vpop.f32.mrb[0].mxu0
    %v2779 = vpop.f32.mrb[0].mxu0
    %v2780 = vadd.f32 0.0, %v2779
    %v2781 = vpop.f32.mrb[0].mxu0
    %2782 = vmatprep.mubr.bf16.mxu0 0
    %2783 = vmatmul.mubr.bf16.gmra.mrb[0].mxu0 %v305
    %v2784 = vpop.f32.mrb[0].mxu0
    %v2785 = vadd.f32 0.0, %v2784
    %v2786 = vpop.f32.mrb[0].mxu0
    %v2787 = vpop.f32.mrb[0].mxu0
    %v2788 = vadd.f32 0.0, %v2787
    %v2789 = vpop.f32.mrb[0].mxu0
    %2790 = vmatprep.mubr.bf16.mxu0 0
    %2791 = vmatmul.mubr.bf16.gmra.mrb[0].mxu0 %v308
    %v2792 = vpop.f32.mrb[0].mxu0
    %v2793 = vadd.f32 0.0, %v2792
    %v2794 = vpop.f32.mrb[0].mxu0
    %v2795 = vpop.f32.mrb[0].mxu0
    %v2796 = vadd.f32 0.0, %v2795
    %v2797 = vpop.f32.mrb[0].mxu0
    %2798 = vmatprep.mubr.bf16.mxu0 0
    %2799 = vmatmul.mubr.bf16.gmra.mrb[0].mxu0 %v311
    %v2800 = vpop.f32.mrb[0].mxu0
    %v2801 = vadd.f32 0.0, %v2800
    %v2802 = vpop.f32.mrb[0].mxu0
    %v2803 = vpop.f32.mrb[0].mxu0
    %v2804 = vadd.f32 0.0, %v2803
    %v2805 = vpop.f32.mrb[0].mxu0
    %2806 = vdwg.mxu0
    %v2807 = vmax.f32 %v2649, 0.0
    %v2808 = vmax.f32 %v2652, 0.0
    %v2809 = vmax.f32 %v2657, 0.0
    %v2810 = vmax.f32 %v2660, 0.0
    %v2811 = vmax.f32 %v2665, 0.0
    %v2812 = vmax.f32 %v2668, 0.0
    %v2813 = vmax.f32 %v2673, 0.0
    %v2814 = vmax.f32 %v2676, 0.0
    %v2815 = vmax.f32 %v2681, 0.0
    %v2816 = vmax.f32 %v2684, 0.0
    %v2817 = vmax.f32 %v2689, 0.0
    %v2818 = vmax.f32 %v2692, 0.0
    %v2819 = vmax.f32 %v2697, 0.0
    %v2820 = vmax.f32 %v2700, 0.0
    %v2821 = vmax.f32 %v2705, 0.0
    %v2822 = vmax.f32 %v2708, 0.0
    %v2823 = vmax.f32 %v2713, 0.0
    %v2824 = vmax.f32 %v2716, 0.0
    %v2825 = vmax.f32 %v2721, 0.0
    %v2826 = vmax.f32 %v2724, 0.0
    %v2827 = vmax.f32 %v2729, 0.0
    %v2828 = vmax.f32 %v2732, 0.0
    %v2829 = vmax.f32 %v2737, 0.0
    %v2830 = vmax.f32 %v2740, 0.0
    %v2831 = vmax.f32 %v2745, 0.0
    %v2832 = vmax.f32 %v2748, 0.0
    %v2833 = vmax.f32 %v2753, 0.0
    %v2834 = vmax.f32 %v2756, 0.0
    %v2835 = vmax.f32 %v2761, 0.0
    %v2836 = vmax.f32 %v2764, 0.0
    %v2837 = vmax.f32 %v2769, 0.0
    %v2838 = vmax.f32 %v2772, 0.0
    %v2839 = vmax.f32 %v2777, 0.0
    %v2840 = vmax.f32 %v2780, 0.0
    %v2841 = vmax.f32 %v2785, 0.0
    %v2842 = vmax.f32 %v2788, 0.0
    %v2843 = vmax.f32 %v2793, 0.0
    %v2844 = vmax.f32 %v2796, 0.0
    %v2845 = vmax.f32 %v2801, 0.0
    %v2846 = vmax.f32 %v2804, 0.0
    %v2847 = vpack.c.bf16 %v2808, %v2807
    %v2848 = vpack.c.bf16 %v2810, %v2809
    %v2849 = vpack.c.bf16 %v2812, %v2811
    %v2850 = vpack.c.bf16 %v2814, %v2813
    %v2851 = vpack.c.bf16 %v2816, %v2815
    %v2852 = vpack.c.bf16 %v2818, %v2817
    %v2853 = vpack.c.bf16 %v2820, %v2819
    %v2854 = vpack.c.bf16 %v2822, %v2821
    %v2855 = vpack.c.bf16 %v2824, %v2823
    %v2856 = vpack.c.bf16 %v2826, %v2825
    %v2857 = vpack.c.bf16 %v2828, %v2827
    %v2858 = vpack.c.bf16 %v2830, %v2829
    %v2859 = vpack.c.bf16 %v2832, %v2831
    %v2860 = vpack.c.bf16 %v2834, %v2833
    %v2861 = vpack.c.bf16 %v2836, %v2835
    %v2862 = vpack.c.bf16 %v2838, %v2837
    %v2863 = vpack.c.bf16 %v2840, %v2839
    %v2864 = vpack.c.bf16 %v2842, %v2841
    %v2865 = vpack.c.bf16 %v2844, %v2843
    %v2866 = vpack.c.bf16 %v2846, %v2845
    %2867 = vmatprep.subr.bf16.mxu0 0
    %2868 = vmatpush1.bf16.msra.mxu0 %v2847
    %2869 = vmatprep.subr.bf16.mxu0 0
    %2870 = vmatpush1.bf16.msra.mxu0 %v2848
    %2871 = vmatprep.subr.bf16.mxu0 0
    %2872 = vmatpush1.bf16.msra.mxu0 %v2849
    %2873 = vmatprep.subr.bf16.mxu0 0
    %2874 = vmatpush1.bf16.msra.mxu0 %v2850
    %2875 = vmatprep.subr.bf16.mxu0 0
    %2876 = vmatpush1.bf16.msra.mxu0 %v2851
    %2877 = vmatprep.subr.bf16.mxu0 0
    %2878 = vmatpush1.bf16.msra.mxu0 %v2852
    %2879 = vmatprep.subr.bf16.mxu0 0
    %2880 = vmatpush1.bf16.msra.mxu0 %v2853
    %2881 = vmatprep.subr.bf16.mxu0 0
    %2882 = vmatpush1.bf16.msra.mxu0 %v2854
    %2883 = vmatprep.subr.bf16.mxu0 0
    %2884 = vmatpush1.bf16.msra.mxu0 %v2855
    %2885 = vmatprep.subr.bf16.mxu0 0
    %2886 = vmatpush1.bf16.msra.mxu0 %v2856
    %2887 = vmatprep.subr.bf16.mxu0 0
    %2888 = vmatpush1.bf16.msra.mxu0 %v2857
    %2889 = vmatprep.subr.bf16.mxu0 0
    %2890 = vmatpush1.bf16.msra.mxu0 %v2858
    %2891 = vmatprep.subr.bf16.mxu0 0
    %2892 = vmatpush1.bf16.msra.mxu0 %v2859
    %2893 = vmatprep.subr.bf16.mxu0 0
    %2894 = vmatpush1.bf16.msra.mxu0 %v2860
    %2895 = vmatprep.subr.bf16.mxu0 0
    %2896 = vmatpush1.bf16.msra.mxu0 %v2861
    %2897 = vmatprep.subr.bf16.mxu0 0
    %2898 = vmatpush1.bf16.msra.mxu0 %v2862
    %2899 = vmatprep.mubr.bf16.mxu0 %v727
    %2900 = vmatmul.mubr.bf16.gmra.mrb[0].mxu0 %v726
    %v2901 = vpop.f32.mrb[0].mxu0
    %v2902 = vadd.f32 0.0, %v2901
    %v2903 = vpop.f32.mrb[0].mxu0
    %v2904 = vpop.f32.mrb[0].mxu0
    %v2905 = vadd.f32 0.0, %v2904
    %v2906 = vpop.f32.mrb[0].mxu0
    %2907 = vmatprep.mubr.bf16.mxu0 %v730
    %2908 = vmatmul.mubr.bf16.gmra.mrb[0].mxu0 %v729
    %v2909 = vpop.f32.mrb[0].mxu0
    %v2910 = vadd.f32 0.0, %v2909
    %v2911 = vpop.f32.mrb[0].mxu0
    %v2912 = vpop.f32.mrb[0].mxu0
    %v2913 = vadd.f32 0.0, %v2912
    %v2914 = vpop.f32.mrb[0].mxu0
    %2915 = vmatprep.mubr.bf16.mxu0 %v733
    %2916 = vmatmul.mubr.bf16.gmra.mrb[0].mxu0 %v732
    %v2917 = vpop.f32.mrb[0].mxu0
    %v2918 = vadd.f32 0.0, %v2917
    %v2919 = vpop.f32.mrb[0].mxu0
    %v2920 = vpop.f32.mrb[0].mxu0
    %v2921 = vadd.f32 0.0, %v2920
    %v2922 = vpop.f32.mrb[0].mxu0
    %2923 = vmatprep.mubr.bf16.mxu0 %v736
    %2924 = vmatmul.mubr.bf16.gmra.mrb[0].mxu0 %v735
    %v2925 = vpop.f32.mrb[0].mxu0
    %v2926 = vadd.f32 0.0, %v2925
    %v2927 = vpop.f32.mrb[0].mxu0
    %v2928 = vpop.f32.mrb[0].mxu0
    %v2929 = vadd.f32 0.0, %v2928
    %v2930 = vpop.f32.mrb[0].mxu0
    %2931 = vmatprep.mubr.bf16.mxu0 %v739
    %2932 = vmatmul.mubr.bf16.gmra.mrb[0].mxu0 %v738
    %v2933 = vpop.f32.mrb[0].mxu0
    %v2934 = vadd.f32 0.0, %v2933
    %v2935 = vpop.f32.mrb[0].mxu0
    %v2936 = vpop.f32.mrb[0].mxu0
    %v2937 = vadd.f32 0.0, %v2936
    %v2938 = vpop.f32.mrb[0].mxu0
    %2939 = vmatprep.mubr.bf16.mxu0 %v742
    %2940 = vmatmul.mubr.bf16.gmra.mrb[0].mxu0 %v741
    %v2941 = vpop.f32.mrb[0].mxu0
    %v2942 = vadd.f32 0.0, %v2941
    %v2943 = vpop.f32.mrb[0].mxu0
    %v2944 = vpop.f32.mrb[0].mxu0
    %v2945 = vadd.f32 0.0, %v2944
    %v2946 = vpop.f32.mrb[0].mxu0
    %2947 = vmatprep.mubr.bf16.mxu0 %v745
    %2948 = vmatmul.mubr.bf16.gmra.mrb[0].mxu0 %v744
    %v2949 = vpop.f32.mrb[0].mxu0
    %v2950 = vadd.f32 0.0, %v2949
    %v2951 = vpop.f32.mrb[0].mxu0
    %v2952 = vpop.f32.mrb[0].mxu0
    %v2953 = vadd.f32 0.0, %v2952
    %v2954 = vpop.f32.mrb[0].mxu0
    %2955 = vmatprep.mubr.bf16.mxu0 %v748
    %2956 = vmatmul.mubr.bf16.gmra.mrb[0].mxu0 %v747
    %v2957 = vpop.f32.mrb[0].mxu0
    %v2958 = vadd.f32 0.0, %v2957
    %v2959 = vpop.f32.mrb[0].mxu0
    %v2960 = vpop.f32.mrb[0].mxu0
    %v2961 = vadd.f32 0.0, %v2960
    %v2962 = vpop.f32.mrb[0].mxu0
    %2963 = vmatprep.mubr.bf16.mxu0 %v751
    %2964 = vmatmul.mubr.bf16.gmra.mrb[0].mxu0 %v750
    %v2965 = vpop.f32.mrb[0].mxu0
    %v2966 = vadd.f32 0.0, %v2965
    %v2967 = vpop.f32.mrb[0].mxu0
    %v2968 = vpop.f32.mrb[0].mxu0
    %v2969 = vadd.f32 0.0, %v2968
    %v2970 = vpop.f32.mrb[0].mxu0
    %2971 = vmatprep.mubr.bf16.mxu0 %v754
    %2972 = vmatmul.mubr.bf16.gmra.mrb[0].mxu0 %v753
    %v2973 = vpop.f32.mrb[0].mxu0
    %v2974 = vadd.f32 0.0, %v2973
    %v2975 = vpop.f32.mrb[0].mxu0
    %v2976 = vpop.f32.mrb[0].mxu0
    %v2977 = vadd.f32 0.0, %v2976
    %v2978 = vpop.f32.mrb[0].mxu0
    %2979 = vmatprep.mubr.bf16.mxu0 %v757
    %2980 = vmatmul.mubr.bf16.gmra.mrb[0].mxu0 %v756
    %v2981 = vpop.f32.mrb[0].mxu0
    %v2982 = vadd.f32 0.0, %v2981
    %v2983 = vpop.f32.mrb[0].mxu0
    %v2984 = vpop.f32.mrb[0].mxu0
    %v2985 = vadd.f32 0.0, %v2984
    %v2986 = vpop.f32.mrb[0].mxu0
    %2987 = vmatprep.mubr.bf16.mxu0 %v760
    %2988 = vmatmul.mubr.bf16.gmra.mrb[0].mxu0 %v759
    %v2989 = vpop.f32.mrb[0].mxu0
    %v2990 = vadd.f32 0.0, %v2989
    %v2991 = vpop.f32.mrb[0].mxu0
    %v2992 = vpop.f32.mrb[0].mxu0
    %v2993 = vadd.f32 0.0, %v2992
    %v2994 = vpop.f32.mrb[0].mxu0
    %2995 = vmatprep.mubr.bf16.mxu0 %v763
    %2996 = vmatmul.mubr.bf16.gmra.mrb[0].mxu0 %v762
    %v2997 = vpop.f32.mrb[0].mxu0
    %v2998 = vadd.f32 0.0, %v2997
    %v2999 = vpop.f32.mrb[0].mxu0
    %v3000 = vpop.f32.mrb[0].mxu0
    %v3001 = vadd.f32 0.0, %v3000
    %v3002 = vpop.f32.mrb[0].mxu0
    %3003 = vmatprep.mubr.bf16.mxu0 %v766
    %3004 = vmatmul.mubr.bf16.gmra.mrb[0].mxu0 %v765
    %v3005 = vpop.f32.mrb[0].mxu0
    %v3006 = vadd.f32 0.0, %v3005
    %v3007 = vpop.f32.mrb[0].mxu0
    %v3008 = vpop.f32.mrb[0].mxu0
    %v3009 = vadd.f32 0.0, %v3008
    %v3010 = vpop.f32.mrb[0].mxu0
    %3011 = vmatprep.mubr.bf16.mxu0 %v769
    %3012 = vmatmul.mubr.bf16.gmra.mrb[0].mxu0 %v768
    %v3013 = vpop.f32.mrb[0].mxu0
    %v3014 = vadd.f32 0.0, %v3013
    %v3015 = vpop.f32.mrb[0].mxu0
    %v3016 = vpop.f32.mrb[0].mxu0
    %v3017 = vadd.f32 0.0, %v3016
    %v3018 = vpop.f32.mrb[0].mxu0
    %3019 = vmatprep.mubr.bf16.mxu0 %v772
    %3020 = vmatmul.mubr.bf16.gmra.mrb[0].mxu0 %v771
    %v3021 = vpop.f32.mrb[0].mxu0
    %v3022 = vadd.f32 0.0, %v3021
    %v3023 = vpop.f32.mrb[0].mxu0
    %v3024 = vpop.f32.mrb[0].mxu0
    %v3025 = vadd.f32 0.0, %v3024
    %v3026 = vpop.f32.mrb[0].mxu0
    %3027 = vdwg.mxu0
    %3028 = vmatprep.subr.bf16.mxu0 0
    %3029 = vmatpush1.bf16.msra.mxu0 %v2863
    %3030 = vmatprep.subr.bf16.mxu0 0
    %3031 = vmatpush1.bf16.msra.mxu0 %v2864
    %3032 = vmatprep.subr.bf16.mxu0 0
    %3033 = vmatpush1.bf16.msra.mxu0 %v2865
    %3034 = vmatprep.subr.bf16.mxu0 0
    %3035 = vmatpush1.bf16.msra.mxu0 %v2866
    %3036 = vmatprep.subr.bf16.mxu0 0
    %3037 = vmatpush1.bf16.msra.mxu0 0
    %3038 = vmatprep.subr.bf16.mxu0 0
    %3039 = vmatpush1.bf16.msra.mxu0 0
    %3040 = vmatprep.subr.bf16.mxu0 0
    %3041 = vmatpush1.bf16.msra.mxu0 0
    %3042 = vmatprep.subr.bf16.mxu0 0
    %3043 = vmatpush1.bf16.msra.mxu0 0
    %3044 = vmatprep.subr.bf16.mxu0 0
    %3045 = vmatpush1.bf16.msra.mxu0 0
    %3046 = vmatprep.subr.bf16.mxu0 0
    %3047 = vmatpush1.bf16.msra.mxu0 0
    %3048 = vmatprep.subr.bf16.mxu0 0
    %3049 = vmatpush1.bf16.msra.mxu0 0
    %3050 = vmatprep.subr.bf16.mxu0 0
    %3051 = vmatpush1.bf16.msra.mxu0 0
    %3052 = vmatprep.subr.bf16.mxu0 0
    %3053 = vmatpush1.bf16.msra.mxu0 0
    %3054 = vmatprep.subr.bf16.mxu0 0
    %3055 = vmatpush1.bf16.msra.mxu0 0
    %3056 = vmatprep.subr.bf16.mxu0 0
    %3057 = vmatpush1.bf16.msra.mxu0 0
    %3058 = vmatprep.subr.bf16.mxu0 0
    %3059 = vmatpush1.bf16.msra.mxu0 0
    %3060 = vmatprep.mubr.bf16.mxu0 0
    %3061 = vmatmul.mubr.bf16.gmra.mrb[0].mxu0 %v807
    %v3062 = vpop.f32.mrb[0].mxu0
    %v3063 = vadd.f32 %v2902, %v3062
    %v3064 = vpop.f32.mrb[0].mxu0
    %v3065 = vpop.f32.mrb[0].mxu0
    %v3066 = vadd.f32 %v2905, %v3065
    %v3067 = vpop.f32.mrb[0].mxu0
    %3068 = vmatprep.mubr.bf16.mxu0 0
    %3069 = vmatmul.mubr.bf16.gmra.mrb[0].mxu0 %v810
    %v3070 = vpop.f32.mrb[0].mxu0
    %v3071 = vadd.f32 %v2910, %v3070
    %v3072 = vpop.f32.mrb[0].mxu0
    %v3073 = vpop.f32.mrb[0].mxu0
    %v3074 = vadd.f32 %v2913, %v3073
    %v3075 = vpop.f32.mrb[0].mxu0
    %3076 = vmatprep.mubr.bf16.mxu0 0
    %3077 = vmatmul.mubr.bf16.gmra.mrb[0].mxu0 %v813
    %v3078 = vpop.f32.mrb[0].mxu0
    %v3079 = vadd.f32 %v2918, %v3078
    %v3080 = vpop.f32.mrb[0].mxu0
    %v3081 = vpop.f32.mrb[0].mxu0
    %v3082 = vadd.f32 %v2921, %v3081
    %v3083 = vpop.f32.mrb[0].mxu0
    %3084 = vmatprep.mubr.bf16.mxu0 0
    %3085 = vmatmul.mubr.bf16.gmra.mrb[0].mxu0 %v816
    %v3086 = vpop.f32.mrb[0].mxu0
    %v3087 = vadd.f32 %v2926, %v3086
    %v3088 = vpop.f32.mrb[0].mxu0
    %v3089 = vpop.f32.mrb[0].mxu0
    %v3090 = vadd.f32 %v2929, %v3089
    %v3091 = vpop.f32.mrb[0].mxu0
    %3092 = vmatprep.mubr.bf16.mxu0 0
    %3093 = vmatmul.mubr.bf16.gmra.mrb[0].mxu0 %v819
    %v3094 = vpop.f32.mrb[0].mxu0
    %v3095 = vadd.f32 %v2934, %v3094
    %v3096 = vpop.f32.mrb[0].mxu0
    %v3097 = vpop.f32.mrb[0].mxu0
    %v3098 = vadd.f32 %v2937, %v3097
    %v3099 = vpop.f32.mrb[0].mxu0
    %3100 = vmatprep.mubr.bf16.mxu0 0
    %3101 = vmatmul.mubr.bf16.gmra.mrb[0].mxu0 %v822
    %v3102 = vpop.f32.mrb[0].mxu0
    %v3103 = vadd.f32 %v2942, %v3102
    %v3104 = vpop.f32.mrb[0].mxu0
    %v3105 = vpop.f32.mrb[0].mxu0
    %v3106 = vadd.f32 %v2945, %v3105
    %v3107 = vpop.f32.mrb[0].mxu0
    %3108 = vmatprep.mubr.bf16.mxu0 0
    %3109 = vmatmul.mubr.bf16.gmra.mrb[0].mxu0 %v825
    %v3110 = vpop.f32.mrb[0].mxu0
    %v3111 = vadd.f32 %v2950, %v3110
    %v3112 = vpop.f32.mrb[0].mxu0
    %v3113 = vpop.f32.mrb[0].mxu0
    %v3114 = vadd.f32 %v2953, %v3113
    %v3115 = vpop.f32.mrb[0].mxu0
    %3116 = vmatprep.mubr.bf16.mxu0 0
    %3117 = vmatmul.mubr.bf16.gmra.mrb[0].mxu0 %v828
    %v3118 = vpop.f32.mrb[0].mxu0
    %v3119 = vadd.f32 %v2958, %v3118
    %v3120 = vpop.f32.mrb[0].mxu0
    %v3121 = vpop.f32.mrb[0].mxu0
    %v3122 = vadd.f32 %v2961, %v3121
    %v3123 = vpop.f32.mrb[0].mxu0
    %3124 = vmatprep.mubr.bf16.mxu0 0
    %3125 = vmatmul.mubr.bf16.gmra.mrb[0].mxu0 %v831
    %v3126 = vpop.f32.mrb[0].mxu0
    %v3127 = vadd.f32 %v2966, %v3126
    %v3128 = vpop.f32.mrb[0].mxu0
    %v3129 = vpop.f32.mrb[0].mxu0
    %v3130 = vadd.f32 %v2969, %v3129
    %v3131 = vpop.f32.mrb[0].mxu0
    %3132 = vmatprep.mubr.bf16.mxu0 0
    %3133 = vmatmul.mubr.bf16.gmra.mrb[0].mxu0 %v834
    %v3134 = vpop.f32.mrb[0].mxu0
    %v3135 = vadd.f32 %v2974, %v3134
    %v3136 = vpop.f32.mrb[0].mxu0
    %v3137 = vpop.f32.mrb[0].mxu0
    %v3138 = vadd.f32 %v2977, %v3137
    %v3139 = vpop.f32.mrb[0].mxu0
    %3140 = vmatprep.mubr.bf16.mxu0 0
    %3141 = vmatmul.mubr.bf16.gmra.mrb[0].mxu0 %v837
    %v3142 = vpop.f32.mrb[0].mxu0
    %v3143 = vadd.f32 %v2982, %v3142
    %v3144 = vpop.f32.mrb[0].mxu0
    %v3145 = vpop.f32.mrb[0].mxu0
    %v3146 = vadd.f32 %v2985, %v3145
    %v3147 = vpop.f32.mrb[0].mxu0
    %3148 = vmatprep.mubr.bf16.mxu0 0
    %3149 = vmatmul.mubr.bf16.gmra.mrb[0].mxu0 %v840
    %v3150 = vpop.f32.mrb[0].mxu0
    %v3151 = vadd.f32 %v2990, %v3150
    %v3152 = vpop.f32.mrb[0].mxu0
    %v3153 = vpop.f32.mrb[0].mxu0
    %v3154 = vadd.f32 %v2993, %v3153
    %v3155 = vpop.f32.mrb[0].mxu0
    %3156 = vmatprep.mubr.bf16.mxu0 0
    %3157 = vmatmul.mubr.bf16.gmra.mrb[0].mxu0 %v843
    %v3158 = vpop.f32.mrb[0].mxu0
    %v3159 = vadd.f32 %v2998, %v3158
    %v3160 = vpop.f32.mrb[0].mxu0
    %v3161 = vpop.f32.mrb[0].mxu0
    %v3162 = vadd.f32 %v3001, %v3161
    %v3163 = vpop.f32.mrb[0].mxu0
    %3164 = vmatprep.mubr.bf16.mxu0 0
    %3165 = vmatmul.mubr.bf16.gmra.mrb[0].mxu0 %v846
    %v3166 = vpop.f32.mrb[0].mxu0
    %v3167 = vadd.f32 %v3006, %v3166
    %v3168 = vpop.f32.mrb[0].mxu0
    %v3169 = vpop.f32.mrb[0].mxu0
    %v3170 = vadd.f32 %v3009, %v3169
    %v3171 = vpop.f32.mrb[0].mxu0
    %3172 = vmatprep.mubr.bf16.mxu0 0
    %3173 = vmatmul.mubr.bf16.gmra.mrb[0].mxu0 %v849
    %v3174 = vpop.f32.mrb[0].mxu0
    %v3175 = vadd.f32 %v3014, %v3174
    %v3176 = vpop.f32.mrb[0].mxu0
    %v3177 = vpop.f32.mrb[0].mxu0
    %v3178 = vadd.f32 %v3017, %v3177
    %v3179 = vpop.f32.mrb[0].mxu0
    %3180 = vmatprep.mubr.bf16.mxu0 0
    %3181 = vmatmul.mubr.bf16.gmra.mrb[0].mxu0 %v852
    %v3182 = vpop.f32.mrb[0].mxu0
    %v3183 = vadd.f32 %v3022, %v3182
    %v3184 = vpop.f32.mrb[0].mxu0
    %v3185 = vpop.f32.mrb[0].mxu0
    %v3186 = vadd.f32 %v3025, %v3185
    %v3187 = vpop.f32.mrb[0].mxu0
    %3188 = vdwg.mxu0
    %v3189 = vmax.f32 %v3063, 0.0
    %v3190 = vmax.f32 %v3066, 0.0
    %v3191 = vmax.f32 %v3071, 0.0
    %v3192 = vmax.f32 %v3074, 0.0
    %v3193 = vmax.f32 %v3079, 0.0
    %v3194 = vmax.f32 %v3082, 0.0
    %v3195 = vmax.f32 %v3087, 0.0
    %v3196 = vmax.f32 %v3090, 0.0
    %v3197 = vmax.f32 %v3095, 0.0
    %v3198 = vmax.f32 %v3098, 0.0
    %v3199 = vmax.f32 %v3103, 0.0
    %v3200 = vmax.f32 %v3106, 0.0
    %v3201 = vmax.f32 %v3111, 0.0
    %v3202 = vmax.f32 %v3114, 0.0
    %v3203 = vmax.f32 %v3119, 0.0
    %v3204 = vmax.f32 %v3122, 0.0
    %v3205 = vmax.f32 %v3127, 0.0
    %v3206 = vmax.f32 %v3130, 0.0
    %v3207 = vmax.f32 %v3135, 0.0
    %v3208 = vmax.f32 %v3138, 0.0
    %v3209 = vmax.f32 %v3143, 0.0
    %v3210 = vmax.f32 %v3146, 0.0
    %v3211 = vmax.f32 %v3151, 0.0
    %v3212 = vmax.f32 %v3154, 0.0
    %v3213 = vmax.f32 %v3159, 0.0
    %v3214 = vmax.f32 %v3162, 0.0
    %v3215 = vmax.f32 %v3167, 0.0
    %v3216 = vmax.f32 %v3170, 0.0
    %v3217 = vmax.f32 %v3175, 0.0
    %v3218 = vmax.f32 %v3178, 0.0
    %v3219 = vmax.f32 %v3183, 0.0
    %v3220 = vmax.f32 %v3186, 0.0
    %v3221 = vmax.f32 %v2578, %v3189
    %v3222 = vmax.f32 %v2579, %v3190
    %v3223 = vmax.f32 %v2580, %v3191
    %v3224 = vmax.f32 %v2581, %v3192
    %v3225 = vmax.f32 %v3221, %v3193
    %v3226 = vmax.f32 %v3222, %v3194
    %v3227 = vmax.f32 %v3223, %v3195
    %v3228 = vmax.f32 %v3224, %v3196
    %v3229 = vmax.f32 %v3225, %v3197
    %v3230 = vmax.f32 %v3226, %v3198
    %v3231 = vmax.f32 %v3227, %v3199
    %v3232 = vmax.f32 %v3228, %v3200
    %v3233 = vmax.f32 %v3229, %v3201
    %v3234 = vmax.f32 %v3230, %v3202
    %v3235 = vmax.f32 %v3231, %v3203
    %v3236 = vmax.f32 %v3232, %v3204
    %v3237 = vmax.f32 %v3233, %v3205
    %v3238 = vmax.f32 %v3234, %v3206
    %v3239 = vmax.f32 %v3235, %v3207
    %v3240 = vmax.f32 %v3236, %v3208
    %v3241 = vmax.f32 %v3237, %v3209
    %v3242 = vmax.f32 %v3238, %v3210
    %v3243 = vmax.f32 %v3239, %v3211
    %v3244 = vmax.f32 %v3240, %v3212
    %v3245 = vmax.f32 %v3241, %v3213
    %v3246 = vmax.f32 %v3242, %v3214
    %v3247 = vmax.f32 %v3243, %v3215
    %v3248 = vmax.f32 %v3244, %v3216
    %v3249 = vmax.f32 %v3245, %v3217
    %v3250 = vmax.f32 %v3246, %v3218
    %v3251 = vmax.f32 %v3247, %v3219
    %v3252 = vmax.f32 %v3248, %v3220
    %v3253 = vld [vmem:[%s0 + $0x80] sm:$0xf]
    %v3254 = vld [vmem:[%s0 + $0x84] sm:$0xf]
    %v3255 = vld [vmem:[%s0 + $0x88] sm:$0xf]
    %v3256 = vld [vmem:[%s0 + $0x8c] sm:$0xf]
    %v3257 = vld [vmem:[%s0 + $0x90] sm:$0xf]
    %v3258 = vld [vmem:[%s0 + $0x94] sm:$0xf]
    %v3259 = vld [vmem:[%s0 + $0x98] sm:$0xf]
    %v3260 = vld [vmem:[%s0 + $0x9c] sm:$0xf]
    %v3269 = vunpack.c.l.b16 %v3253
    %v3270 = vunpack.c.l.b16 %v3254
    %v3271 = vunpack.c.l.b16 %v3255
    %v3272 = vunpack.c.l.b16 %v3256
    %v3273 = vunpack.c.l.b16 %v3257
    %v3274 = vunpack.c.l.b16 %v3258
    %v3275 = vunpack.c.l.b16 %v3259
    %v3276 = vunpack.c.l.b16 %v3260
    %v3277 = vpack.c.b16 %v3270, %v3269
    %v3278 = vpack.c.b16 %v3272, %v3271
    %v3279 = vpack.c.b16 %v3274, %v3273
    %v3280 = vpack.c.b16 %v3276, %v3275
    %3285 = vmatprep.subr.bf16.mxu0 0
    %3286 = vmatpush1.bf16.msra.mxu0 %v3277
    %3287 = vmatprep.subr.bf16.mxu0 0
    %3288 = vmatpush1.bf16.msra.mxu0 %v3278
    %3289 = vmatprep.subr.bf16.mxu0 0
    %3290 = vmatpush1.bf16.msra.mxu0 %v3279
    %3291 = vmatprep.subr.bf16.mxu0 0
    %3292 = vmatpush1.bf16.msra.mxu0 %v3280
    %3293 = vmatprep.subr.bf16.mxu0 0
    %3294 = vmatpush1.bf16.msra.mxu0 0
    %3295 = vmatprep.subr.bf16.mxu0 0
    %3296 = vmatpush1.bf16.msra.mxu0 0
    %3297 = vmatprep.subr.bf16.mxu0 0
    %3298 = vmatpush1.bf16.msra.mxu0 0
    %3299 = vmatprep.subr.bf16.mxu0 0
    %3300 = vmatpush1.bf16.msra.mxu0 0
    %3301 = vmatprep.subr.bf16.mxu0 0
    %3302 = vmatpush1.bf16.msra.mxu0 0
    %3303 = vmatprep.subr.bf16.mxu0 0
    %3304 = vmatpush1.bf16.msra.mxu0 0
    %3305 = vmatprep.subr.bf16.mxu0 0
    %3306 = vmatpush1.bf16.msra.mxu0 0
    %3307 = vmatprep.subr.bf16.mxu0 0
    %3308 = vmatpush1.bf16.msra.mxu0 0
    %3309 = vmatprep.subr.bf16.mxu0 0
    %3310 = vmatpush1.bf16.msra.mxu0 0
    %3311 = vmatprep.subr.bf16.mxu0 0
    %3312 = vmatpush1.bf16.msra.mxu0 0
    %3313 = vmatprep.subr.bf16.mxu0 0
    %3314 = vmatpush1.bf16.msra.mxu0 0
    %3315 = vmatprep.subr.bf16.mxu0 0
    %3316 = vmatpush1.bf16.msra.mxu0 0
    %3317 = vmatprep.mubr.bf16.mxu0 0
    %3318 = vmatmul.mubr.bf16.gmra.mrb[0].mxu0 %v254
    %v3319 = vpop.f32.mrb[0].mxu0
    %v3320 = vadd.f32 0.0, %v3319
    %v3321 = vpop.f32.mrb[0].mxu0
    %v3322 = vpop.f32.mrb[0].mxu0
    %v3323 = vadd.f32 0.0, %v3322
    %v3324 = vpop.f32.mrb[0].mxu0
    %3325 = vmatprep.mubr.bf16.mxu0 0
    %3326 = vmatmul.mubr.bf16.gmra.mrb[0].mxu0 %v257
    %v3327 = vpop.f32.mrb[0].mxu0
    %v3328 = vadd.f32 0.0, %v3327
    %v3329 = vpop.f32.mrb[0].mxu0
    %v3330 = vpop.f32.mrb[0].mxu0
    %v3331 = vadd.f32 0.0, %v3330
    %v3332 = vpop.f32.mrb[0].mxu0
    %3333 = vmatprep.mubr.bf16.mxu0 0
    %3334 = vmatmul.mubr.bf16.gmra.mrb[0].mxu0 %v260
    %v3335 = vpop.f32.mrb[0].mxu0
    %v3336 = vadd.f32 0.0, %v3335
    %v3337 = vpop.f32.mrb[0].mxu0
    %v3338 = vpop.f32.mrb[0].mxu0
    %v3339 = vadd.f32 0.0, %v3338
    %v3340 = vpop.f32.mrb[0].mxu0
    %3341 = vmatprep.mubr.bf16.mxu0 0
    %3342 = vmatmul.mubr.bf16.gmra.mrb[0].mxu0 %v263
    %v3343 = vpop.f32.mrb[0].mxu0
    %v3344 = vadd.f32 0.0, %v3343
    %v3345 = vpop.f32.mrb[0].mxu0
    %v3346 = vpop.f32.mrb[0].mxu0
    %v3347 = vadd.f32 0.0, %v3346
    %v3348 = vpop.f32.mrb[0].mxu0
    %3349 = vmatprep.mubr.bf16.mxu0 0
    %3350 = vmatmul.mubr.bf16.gmra.mrb[0].mxu0 %v266
    %v3351 = vpop.f32.mrb[0].mxu0
    %v3352 = vadd.f32 0.0, %v3351
    %v3353 = vpop.f32.mrb[0].mxu0
    %v3354 = vpop.f32.mrb[0].mxu0
    %v3355 = vadd.f32 0.0, %v3354
    %v3356 = vpop.f32.mrb[0].mxu0
    %3357 = vmatprep.mubr.bf16.mxu0 0
    %3358 = vmatmul.mubr.bf16.gmra.mrb[0].mxu0 %v269
    %v3359 = vpop.f32.mrb[0].mxu0
    %v3360 = vadd.f32 0.0, %v3359
    %v3361 = vpop.f32.mrb[0].mxu0
    %v3362 = vpop.f32.mrb[0].mxu0
    %v3363 = vadd.f32 0.0, %v3362
    %v3364 = vpop.f32.mrb[0].mxu0
    %3365 = vmatprep.mubr.bf16.mxu0 0
    %3366 = vmatmul.mubr.bf16.gmra.mrb[0].mxu0 %v272
    %v3367 = vpop.f32.mrb[0].mxu0
    %v3368 = vadd.f32 0.0, %v3367
    %v3369 = vpop.f32.mrb[0].mxu0
    %v3370 = vpop.f32.mrb[0].mxu0
    %v3371 = vadd.f32 0.0, %v3370
    %v3372 = vpop.f32.mrb[0].mxu0
    %3373 = vmatprep.mubr.bf16.mxu0 0
    %3374 = vmatmul.mubr.bf16.gmra.mrb[0].mxu0 %v275
    %v3375 = vpop.f32.mrb[0].mxu0
    %v3376 = vadd.f32 0.0, %v3375
    %v3377 = vpop.f32.mrb[0].mxu0
    %v3378 = vpop.f32.mrb[0].mxu0
    %v3379 = vadd.f32 0.0, %v3378
    %v3380 = vpop.f32.mrb[0].mxu0
    %3381 = vmatprep.mubr.bf16.mxu0 0
    %3382 = vmatmul.mubr.bf16.gmra.mrb[0].mxu0 %v278
    %v3383 = vpop.f32.mrb[0].mxu0
    %v3384 = vadd.f32 0.0, %v3383
    %v3385 = vpop.f32.mrb[0].mxu0
    %v3386 = vpop.f32.mrb[0].mxu0
    %v3387 = vadd.f32 0.0, %v3386
    %v3388 = vpop.f32.mrb[0].mxu0
    %3389 = vmatprep.mubr.bf16.mxu0 0
    %3390 = vmatmul.mubr.bf16.gmra.mrb[0].mxu0 %v281
    %v3391 = vpop.f32.mrb[0].mxu0
    %v3392 = vadd.f32 0.0, %v3391
    %v3393 = vpop.f32.mrb[0].mxu0
    %v3394 = vpop.f32.mrb[0].mxu0
    %v3395 = vadd.f32 0.0, %v3394
    %v3396 = vpop.f32.mrb[0].mxu0
    %3397 = vmatprep.mubr.bf16.mxu0 0
    %3398 = vmatmul.mubr.bf16.gmra.mrb[0].mxu0 %v284
    %v3399 = vpop.f32.mrb[0].mxu0
    %v3400 = vadd.f32 0.0, %v3399
    %v3401 = vpop.f32.mrb[0].mxu0
    %v3402 = vpop.f32.mrb[0].mxu0
    %v3403 = vadd.f32 0.0, %v3402
    %v3404 = vpop.f32.mrb[0].mxu0
    %3405 = vmatprep.mubr.bf16.mxu0 0
    %3406 = vmatmul.mubr.bf16.gmra.mrb[0].mxu0 %v287
    %v3407 = vpop.f32.mrb[0].mxu0
    %v3408 = vadd.f32 0.0, %v3407
    %v3409 = vpop.f32.mrb[0].mxu0
    %v3410 = vpop.f32.mrb[0].mxu0
    %v3411 = vadd.f32 0.0, %v3410
    %v3412 = vpop.f32.mrb[0].mxu0
    %3413 = vmatprep.mubr.bf16.mxu0 0
    %3414 = vmatmul.mubr.bf16.gmra.mrb[0].mxu0 %v290
    %v3415 = vpop.f32.mrb[0].mxu0
    %v3416 = vadd.f32 0.0, %v3415
    %v3417 = vpop.f32.mrb[0].mxu0
    %v3418 = vpop.f32.mrb[0].mxu0
    %v3419 = vadd.f32 0.0, %v3418
    %v3420 = vpop.f32.mrb[0].mxu0
    %3421 = vmatprep.mubr.bf16.mxu0 0
    %3422 = vmatmul.mubr.bf16.gmra.mrb[0].mxu0 %v293
    %v3423 = vpop.f32.mrb[0].mxu0
    %v3424 = vadd.f32 0.0, %v3423
    %v3425 = vpop.f32.mrb[0].mxu0
    %v3426 = vpop.f32.mrb[0].mxu0
    %v3427 = vadd.f32 0.0, %v3426
    %v3428 = vpop.f32.mrb[0].mxu0
    %3429 = vmatprep.mubr.bf16.mxu0 0
    %3430 = vmatmul.mubr.bf16.gmra.mrb[0].mxu0 %v296
    %v3431 = vpop.f32.mrb[0].mxu0
    %v3432 = vadd.f32 0.0, %v3431
    %v3433 = vpop.f32.mrb[0].mxu0
    %v3434 = vpop.f32.mrb[0].mxu0
    %v3435 = vadd.f32 0.0, %v3434
    %v3436 = vpop.f32.mrb[0].mxu0
    %3437 = vmatprep.mubr.bf16.mxu0 0
    %3438 = vmatmul.mubr.bf16.gmra.mrb[0].mxu0 %v299
    %v3439 = vpop.f32.mrb[0].mxu0
    %v3440 = vadd.f32 0.0, %v3439
    %v3441 = vpop.f32.mrb[0].mxu0
    %v3442 = vpop.f32.mrb[0].mxu0
    %v3443 = vadd.f32 0.0, %v3442
    %v3444 = vpop.f32.mrb[0].mxu0
    %3445 = vmatprep.mubr.bf16.mxu0 0
    %3446 = vmatmul.mubr.bf16.gmra.mrb[0].mxu0 %v302
    %v3447 = vpop.f32.mrb[0].mxu0
    %v3448 = vadd.f32 0.0, %v3447
    %v3449 = vpop.f32.mrb[0].mxu0
    %v3450 = vpop.f32.mrb[0].mxu0
    %v3451 = vadd.f32 0.0, %v3450
    %v3452 = vpop.f32.mrb[0].mxu0
    %3453 = vmatprep.mubr.bf16.mxu0 0
    %3454 = vmatmul.mubr.bf16.gmra.mrb[0].mxu0 %v305
    %v3455 = vpop.f32.mrb[0].mxu0
    %v3456 = vadd.f32 0.0, %v3455
    %v3457 = vpop.f32.mrb[0].mxu0
    %v3458 = vpop.f32.mrb[0].mxu0
    %v3459 = vadd.f32 0.0, %v3458
    %v3460 = vpop.f32.mrb[0].mxu0
    %3461 = vmatprep.mubr.bf16.mxu0 0
    %3462 = vmatmul.mubr.bf16.gmra.mrb[0].mxu0 %v308
    %v3463 = vpop.f32.mrb[0].mxu0
    %v3464 = vadd.f32 0.0, %v3463
    %v3465 = vpop.f32.mrb[0].mxu0
    %v3466 = vpop.f32.mrb[0].mxu0
    %v3467 = vadd.f32 0.0, %v3466
    %v3468 = vpop.f32.mrb[0].mxu0
    %3469 = vmatprep.mubr.bf16.mxu0 0
    %3470 = vmatmul.mubr.bf16.gmra.mrb[0].mxu0 %v311
    %v3471 = vpop.f32.mrb[0].mxu0
    %v3472 = vadd.f32 0.0, %v3471
    %v3473 = vpop.f32.mrb[0].mxu0
    %v3474 = vpop.f32.mrb[0].mxu0
    %v3475 = vadd.f32 0.0, %v3474
    %v3476 = vpop.f32.mrb[0].mxu0
    %3477 = vdwg.mxu0
    %v3478 = vmax.f32 %v3320, 0.0
    %v3479 = vmax.f32 %v3323, 0.0
    %v3480 = vmax.f32 %v3328, 0.0
    %v3481 = vmax.f32 %v3331, 0.0
    %v3482 = vmax.f32 %v3336, 0.0
    %v3483 = vmax.f32 %v3339, 0.0
    %v3484 = vmax.f32 %v3344, 0.0
    %v3485 = vmax.f32 %v3347, 0.0
    %v3486 = vmax.f32 %v3352, 0.0
    %v3487 = vmax.f32 %v3355, 0.0
    %v3488 = vmax.f32 %v3360, 0.0
    %v3489 = vmax.f32 %v3363, 0.0
    %v3490 = vmax.f32 %v3368, 0.0
    %v3491 = vmax.f32 %v3371, 0.0
    %v3492 = vmax.f32 %v3376, 0.0
    %v3493 = vmax.f32 %v3379, 0.0
    %v3494 = vmax.f32 %v3384, 0.0
    %v3495 = vmax.f32 %v3387, 0.0
    %v3496 = vmax.f32 %v3392, 0.0
    %v3497 = vmax.f32 %v3395, 0.0
    %v3498 = vmax.f32 %v3400, 0.0
    %v3499 = vmax.f32 %v3403, 0.0
    %v3500 = vmax.f32 %v3408, 0.0
    %v3501 = vmax.f32 %v3411, 0.0
    %v3502 = vmax.f32 %v3416, 0.0
    %v3503 = vmax.f32 %v3419, 0.0
    %v3504 = vmax.f32 %v3424, 0.0
    %v3505 = vmax.f32 %v3427, 0.0
    %v3506 = vmax.f32 %v3432, 0.0
    %v3507 = vmax.f32 %v3435, 0.0
    %v3508 = vmax.f32 %v3440, 0.0
    %v3509 = vmax.f32 %v3443, 0.0
    %v3510 = vmax.f32 %v3448, 0.0
    %v3511 = vmax.f32 %v3451, 0.0
    %v3512 = vmax.f32 %v3456, 0.0
    %v3513 = vmax.f32 %v3459, 0.0
    %v3514 = vmax.f32 %v3464, 0.0
    %v3515 = vmax.f32 %v3467, 0.0
    %v3516 = vmax.f32 %v3472, 0.0
    %v3517 = vmax.f32 %v3475, 0.0
    %v3518 = vpack.c.bf16 %v3479, %v3478
    %v3519 = vpack.c.bf16 %v3481, %v3480
    %v3520 = vpack.c.bf16 %v3483, %v3482
    %v3521 = vpack.c.bf16 %v3485, %v3484
    %v3522 = vpack.c.bf16 %v3487, %v3486
    %v3523 = vpack.c.bf16 %v3489, %v3488
    %v3524 = vpack.c.bf16 %v3491, %v3490
    %v3525 = vpack.c.bf16 %v3493, %v3492
    %v3526 = vpack.c.bf16 %v3495, %v3494
    %v3527 = vpack.c.bf16 %v3497, %v3496
    %v3528 = vpack.c.bf16 %v3499, %v3498
    %v3529 = vpack.c.bf16 %v3501, %v3500
    %v3530 = vpack.c.bf16 %v3503, %v3502
    %v3531 = vpack.c.bf16 %v3505, %v3504
    %v3532 = vpack.c.bf16 %v3507, %v3506
    %v3533 = vpack.c.bf16 %v3509, %v3508
    %v3534 = vpack.c.bf16 %v3511, %v3510
    %v3535 = vpack.c.bf16 %v3513, %v3512
    %v3536 = vpack.c.bf16 %v3515, %v3514
    %v3537 = vpack.c.bf16 %v3517, %v3516
    %3538 = vmatprep.subr.bf16.mxu0 0
    %3539 = vmatpush1.bf16.msra.mxu0 %v3518
    %3540 = vmatprep.subr.bf16.mxu0 0
    %3541 = vmatpush1.bf16.msra.mxu0 %v3519
    %3542 = vmatprep.subr.bf16.mxu0 0
    %3543 = vmatpush1.bf16.msra.mxu0 %v3520
    %3544 = vmatprep.subr.bf16.mxu0 0
    %3545 = vmatpush1.bf16.msra.mxu0 %v3521
    %3546 = vmatprep.subr.bf16.mxu0 0
    %3547 = vmatpush1.bf16.msra.mxu0 %v3522
    %3548 = vmatprep.subr.bf16.mxu0 0
    %3549 = vmatpush1.bf16.msra.mxu0 %v3523
    %3550 = vmatprep.subr.bf16.mxu0 0
    %3551 = vmatpush1.bf16.msra.mxu0 %v3524
    %3552 = vmatprep.subr.bf16.mxu0 0
    %3553 = vmatpush1.bf16.msra.mxu0 %v3525
    %3554 = vmatprep.subr.bf16.mxu0 0
    %3555 = vmatpush1.bf16.msra.mxu0 %v3526
    %3556 = vmatprep.subr.bf16.mxu0 0
    %3557 = vmatpush1.bf16.msra.mxu0 %v3527
    %3558 = vmatprep.subr.bf16.mxu0 0
    %3559 = vmatpush1.bf16.msra.mxu0 %v3528
    %3560 = vmatprep.subr.bf16.mxu0 0
    %3561 = vmatpush1.bf16.msra.mxu0 %v3529
    %3562 = vmatprep.subr.bf16.mxu0 0
    %3563 = vmatpush1.bf16.msra.mxu0 %v3530
    %3564 = vmatprep.subr.bf16.mxu0 0
    %3565 = vmatpush1.bf16.msra.mxu0 %v3531
    %3566 = vmatprep.subr.bf16.mxu0 0
    %3567 = vmatpush1.bf16.msra.mxu0 %v3532
    %3568 = vmatprep.subr.bf16.mxu0 0
    %3569 = vmatpush1.bf16.msra.mxu0 %v3533
    %3570 = vmatprep.mubr.bf16.mxu0 %v727
    %3571 = vmatmul.mubr.bf16.gmra.mrb[0].mxu0 %v726
    %v3572 = vpop.f32.mrb[0].mxu0
    %v3573 = vadd.f32 0.0, %v3572
    %v3574 = vpop.f32.mrb[0].mxu0
    %v3575 = vpop.f32.mrb[0].mxu0
    %v3576 = vadd.f32 0.0, %v3575
    %v3577 = vpop.f32.mrb[0].mxu0
    %3578 = vmatprep.mubr.bf16.mxu0 %v730
    %3579 = vmatmul.mubr.bf16.gmra.mrb[0].mxu0 %v729
    %v3580 = vpop.f32.mrb[0].mxu0
    %v3581 = vadd.f32 0.0, %v3580
    %v3582 = vpop.f32.mrb[0].mxu0
    %v3583 = vpop.f32.mrb[0].mxu0
    %v3584 = vadd.f32 0.0, %v3583
    %v3585 = vpop.f32.mrb[0].mxu0
    %3586 = vmatprep.mubr.bf16.mxu0 %v733
    %3587 = vmatmul.mubr.bf16.gmra.mrb[0].mxu0 %v732
    %v3588 = vpop.f32.mrb[0].mxu0
    %v3589 = vadd.f32 0.0, %v3588
    %v3590 = vpop.f32.mrb[0].mxu0
    %v3591 = vpop.f32.mrb[0].mxu0
    %v3592 = vadd.f32 0.0, %v3591
    %v3593 = vpop.f32.mrb[0].mxu0
    %3594 = vmatprep.mubr.bf16.mxu0 %v736
    %3595 = vmatmul.mubr.bf16.gmra.mrb[0].mxu0 %v735
    %v3596 = vpop.f32.mrb[0].mxu0
    %v3597 = vadd.f32 0.0, %v3596
    %v3598 = vpop.f32.mrb[0].mxu0
    %v3599 = vpop.f32.mrb[0].mxu0
    %v3600 = vadd.f32 0.0, %v3599
    %v3601 = vpop.f32.mrb[0].mxu0
    %3602 = vmatprep.mubr.bf16.mxu0 %v739
    %3603 = vmatmul.mubr.bf16.gmra.mrb[0].mxu0 %v738
    %v3604 = vpop.f32.mrb[0].mxu0
    %v3605 = vadd.f32 0.0, %v3604
    %v3606 = vpop.f32.mrb[0].mxu0
    %v3607 = vpop.f32.mrb[0].mxu0
    %v3608 = vadd.f32 0.0, %v3607
    %v3609 = vpop.f32.mrb[0].mxu0
    %3610 = vmatprep.mubr.bf16.mxu0 %v742
    %3611 = vmatmul.mubr.bf16.gmra.mrb[0].mxu0 %v741
    %v3612 = vpop.f32.mrb[0].mxu0
    %v3613 = vadd.f32 0.0, %v3612
    %v3614 = vpop.f32.mrb[0].mxu0
    %v3615 = vpop.f32.mrb[0].mxu0
    %v3616 = vadd.f32 0.0, %v3615
    %v3617 = vpop.f32.mrb[0].mxu0
    %3618 = vmatprep.mubr.bf16.mxu0 %v745
    %3619 = vmatmul.mubr.bf16.gmra.mrb[0].mxu0 %v744
    %v3620 = vpop.f32.mrb[0].mxu0
    %v3621 = vadd.f32 0.0, %v3620
    %v3622 = vpop.f32.mrb[0].mxu0
    %v3623 = vpop.f32.mrb[0].mxu0
    %v3624 = vadd.f32 0.0, %v3623
    %v3625 = vpop.f32.mrb[0].mxu0
    %3626 = vmatprep.mubr.bf16.mxu0 %v748
    %3627 = vmatmul.mubr.bf16.gmra.mrb[0].mxu0 %v747
    %v3628 = vpop.f32.mrb[0].mxu0
    %v3629 = vadd.f32 0.0, %v3628
    %v3630 = vpop.f32.mrb[0].mxu0
    %v3631 = vpop.f32.mrb[0].mxu0
    %v3632 = vadd.f32 0.0, %v3631
    %v3633 = vpop.f32.mrb[0].mxu0
    %3634 = vmatprep.mubr.bf16.mxu0 %v751
    %3635 = vmatmul.mubr.bf16.gmra.mrb[0].mxu0 %v750
    %v3636 = vpop.f32.mrb[0].mxu0
    %v3637 = vadd.f32 0.0, %v3636
    %v3638 = vpop.f32.mrb[0].mxu0
    %v3639 = vpop.f32.mrb[0].mxu0
    %v3640 = vadd.f32 0.0, %v3639
    %v3641 = vpop.f32.mrb[0].mxu0
    %3642 = vmatprep.mubr.bf16.mxu0 %v754
    %3643 = vmatmul.mubr.bf16.gmra.mrb[0].mxu0 %v753
    %v3644 = vpop.f32.mrb[0].mxu0
    %v3645 = vadd.f32 0.0, %v3644
    %v3646 = vpop.f32.mrb[0].mxu0
    %v3647 = vpop.f32.mrb[0].mxu0
    %v3648 = vadd.f32 0.0, %v3647
    %v3649 = vpop.f32.mrb[0].mxu0
    %3650 = vmatprep.mubr.bf16.mxu0 %v757
    %3651 = vmatmul.mubr.bf16.gmra.mrb[0].mxu0 %v756
    %v3652 = vpop.f32.mrb[0].mxu0
    %v3653 = vadd.f32 0.0, %v3652
    %v3654 = vpop.f32.mrb[0].mxu0
    %v3655 = vpop.f32.mrb[0].mxu0
    %v3656 = vadd.f32 0.0, %v3655
    %v3657 = vpop.f32.mrb[0].mxu0
    %3658 = vmatprep.mubr.bf16.mxu0 %v760
    %3659 = vmatmul.mubr.bf16.gmra.mrb[0].mxu0 %v759
    %v3660 = vpop.f32.mrb[0].mxu0
    %v3661 = vadd.f32 0.0, %v3660
    %v3662 = vpop.f32.mrb[0].mxu0
    %v3663 = vpop.f32.mrb[0].mxu0
    %v3664 = vadd.f32 0.0, %v3663
    %v3665 = vpop.f32.mrb[0].mxu0
    %3666 = vmatprep.mubr.bf16.mxu0 %v763
    %3667 = vmatmul.mubr.bf16.gmra.mrb[0].mxu0 %v762
    %v3668 = vpop.f32.mrb[0].mxu0
    %v3669 = vadd.f32 0.0, %v3668
    %v3670 = vpop.f32.mrb[0].mxu0
    %v3671 = vpop.f32.mrb[0].mxu0
    %v3672 = vadd.f32 0.0, %v3671
    %v3673 = vpop.f32.mrb[0].mxu0
    %3674 = vmatprep.mubr.bf16.mxu0 %v766
    %3675 = vmatmul.mubr.bf16.gmra.mrb[0].mxu0 %v765
    %v3676 = vpop.f32.mrb[0].mxu0
    %v3677 = vadd.f32 0.0, %v3676
    %v3678 = vpop.f32.mrb[0].mxu0
    %v3679 = vpop.f32.mrb[0].mxu0
    %v3680 = vadd.f32 0.0, %v3679
    %v3681 = vpop.f32.mrb[0].mxu0
    %3682 = vmatprep.mubr.bf16.mxu0 %v769
    %3683 = vmatmul.mubr.bf16.gmra.mrb[0].mxu0 %v768
    %v3684 = vpop.f32.mrb[0].mxu0
    %v3685 = vadd.f32 0.0, %v3684
    %v3686 = vpop.f32.mrb[0].mxu0
    %v3687 = vpop.f32.mrb[0].mxu0
    %v3688 = vadd.f32 0.0, %v3687
    %v3689 = vpop.f32.mrb[0].mxu0
    %3690 = vmatprep.mubr.bf16.mxu0 %v772
    %3691 = vmatmul.mubr.bf16.gmra.mrb[0].mxu0 %v771
    %v3692 = vpop.f32.mrb[0].mxu0
    %v3693 = vadd.f32 0.0, %v3692
    %v3694 = vpop.f32.mrb[0].mxu0
    %v3695 = vpop.f32.mrb[0].mxu0
    %v3696 = vadd.f32 0.0, %v3695
    %v3697 = vpop.f32.mrb[0].mxu0
    %3698 = vdwg.mxu0
    %3699 = vmatprep.subr.bf16.mxu0 0
    %3700 = vmatpush1.bf16.msra.mxu0 %v3534
    %3701 = vmatprep.subr.bf16.mxu0 0
    %3702 = vmatpush1.bf16.msra.mxu0 %v3535
    %3703 = vmatprep.subr.bf16.mxu0 0
    %3704 = vmatpush1.bf16.msra.mxu0 %v3536
    %3705 = vmatprep.subr.bf16.mxu0 0
    %3706 = vmatpush1.bf16.msra.mxu0 %v3537
    %3707 = vmatprep.subr.bf16.mxu0 0
    %3708 = vmatpush1.bf16.msra.mxu0 0
    %3709 = vmatprep.subr.bf16.mxu0 0
    %3710 = vmatpush1.bf16.msra.mxu0 0
    %3711 = vmatprep.subr.bf16.mxu0 0
    %3712 = vmatpush1.bf16.msra.mxu0 0
    %3713 = vmatprep.subr.bf16.mxu0 0
    %3714 = vmatpush1.bf16.msra.mxu0 0
    %3715 = vmatprep.subr.bf16.mxu0 0
    %3716 = vmatpush1.bf16.msra.mxu0 0
    %3717 = vmatprep.subr.bf16.mxu0 0
    %3718 = vmatpush1.bf16.msra.mxu0 0
    %3719 = vmatprep.subr.bf16.mxu0 0
    %3720 = vmatpush1.bf16.msra.mxu0 0
    %3721 = vmatprep.subr.bf16.mxu0 0
    %3722 = vmatpush1.bf16.msra.mxu0 0
    %3723 = vmatprep.subr.bf16.mxu0 0
    %3724 = vmatpush1.bf16.msra.mxu0 0
    %3725 = vmatprep.subr.bf16.mxu0 0
    %3726 = vmatpush1.bf16.msra.mxu0 0
    %3727 = vmatprep.subr.bf16.mxu0 0
    %3728 = vmatpush1.bf16.msra.mxu0 0
    %3729 = vmatprep.subr.bf16.mxu0 0
    %3730 = vmatpush1.bf16.msra.mxu0 0
    %3731 = vmatprep.mubr.bf16.mxu0 0
    %3732 = vmatmul.mubr.bf16.gmra.mrb[0].mxu0 %v807
    %v3733 = vpop.f32.mrb[0].mxu0
    %v3734 = vadd.f32 %v3573, %v3733
    %v3735 = vpop.f32.mrb[0].mxu0
    %v3736 = vpop.f32.mrb[0].mxu0
    %v3737 = vadd.f32 %v3576, %v3736
    %v3738 = vpop.f32.mrb[0].mxu0
    %3739 = vmatprep.mubr.bf16.mxu0 0
    %3740 = vmatmul.mubr.bf16.gmra.mrb[0].mxu0 %v810
    %v3741 = vpop.f32.mrb[0].mxu0
    %v3742 = vadd.f32 %v3581, %v3741
    %v3743 = vpop.f32.mrb[0].mxu0
    %v3744 = vpop.f32.mrb[0].mxu0
    %v3745 = vadd.f32 %v3584, %v3744
    %v3746 = vpop.f32.mrb[0].mxu0
    %3747 = vmatprep.mubr.bf16.mxu0 0
    %3748 = vmatmul.mubr.bf16.gmra.mrb[0].mxu0 %v813
    %v3749 = vpop.f32.mrb[0].mxu0
    %v3750 = vadd.f32 %v3589, %v3749
    %v3751 = vpop.f32.mrb[0].mxu0
    %v3752 = vpop.f32.mrb[0].mxu0
    %v3753 = vadd.f32 %v3592, %v3752
    %v3754 = vpop.f32.mrb[0].mxu0
    %3755 = vmatprep.mubr.bf16.mxu0 0
    %3756 = vmatmul.mubr.bf16.gmra.mrb[0].mxu0 %v816
    %v3757 = vpop.f32.mrb[0].mxu0
    %v3758 = vadd.f32 %v3597, %v3757
    %v3759 = vpop.f32.mrb[0].mxu0
    %v3760 = vpop.f32.mrb[0].mxu0
    %v3761 = vadd.f32 %v3600, %v3760
    %v3762 = vpop.f32.mrb[0].mxu0
    %3763 = vmatprep.mubr.bf16.mxu0 0
    %3764 = vmatmul.mubr.bf16.gmra.mrb[0].mxu0 %v819
    %v3765 = vpop.f32.mrb[0].mxu0
    %v3766 = vadd.f32 %v3605, %v3765
    %v3767 = vpop.f32.mrb[0].mxu0
    %v3768 = vpop.f32.mrb[0].mxu0
    %v3769 = vadd.f32 %v3608, %v3768
    %v3770 = vpop.f32.mrb[0].mxu0
    %3771 = vmatprep.mubr.bf16.mxu0 0
    %3772 = vmatmul.mubr.bf16.gmra.mrb[0].mxu0 %v822
    %v3773 = vpop.f32.mrb[0].mxu0
    %v3774 = vadd.f32 %v3613, %v3773
    %v3775 = vpop.f32.mrb[0].mxu0
    %v3776 = vpop.f32.mrb[0].mxu0
    %v3777 = vadd.f32 %v3616, %v3776
    %v3778 = vpop.f32.mrb[0].mxu0
    %3779 = vmatprep.mubr.bf16.mxu0 0
    %3780 = vmatmul.mubr.bf16.gmra.mrb[0].mxu0 %v825
    %v3781 = vpop.f32.mrb[0].mxu0
    %v3782 = vadd.f32 %v3621, %v3781
    %v3783 = vpop.f32.mrb[0].mxu0
    %v3784 = vpop.f32.mrb[0].mxu0
    %v3785 = vadd.f32 %v3624, %v3784
    %v3786 = vpop.f32.mrb[0].mxu0
    %3787 = vmatprep.mubr.bf16.mxu0 0
    %3788 = vmatmul.mubr.bf16.gmra.mrb[0].mxu0 %v828
    %v3789 = vpop.f32.mrb[0].mxu0
    %v3790 = vadd.f32 %v3629, %v3789
    %v3791 = vpop.f32.mrb[0].mxu0
    %v3792 = vpop.f32.mrb[0].mxu0
    %v3793 = vadd.f32 %v3632, %v3792
    %v3794 = vpop.f32.mrb[0].mxu0
    %3795 = vmatprep.mubr.bf16.mxu0 0
    %3796 = vmatmul.mubr.bf16.gmra.mrb[0].mxu0 %v831
    %v3797 = vpop.f32.mrb[0].mxu0
    %v3798 = vadd.f32 %v3637, %v3797
    %v3799 = vpop.f32.mrb[0].mxu0
    %v3800 = vpop.f32.mrb[0].mxu0
    %v3801 = vadd.f32 %v3640, %v3800
    %v3802 = vpop.f32.mrb[0].mxu0
    %3803 = vmatprep.mubr.bf16.mxu0 0
    %3804 = vmatmul.mubr.bf16.gmra.mrb[0].mxu0 %v834
    %v3805 = vpop.f32.mrb[0].mxu0
    %v3806 = vadd.f32 %v3645, %v3805
    %v3807 = vpop.f32.mrb[0].mxu0
    %v3808 = vpop.f32.mrb[0].mxu0
    %v3809 = vadd.f32 %v3648, %v3808
    %v3810 = vpop.f32.mrb[0].mxu0
    %3811 = vmatprep.mubr.bf16.mxu0 0
    %3812 = vmatmul.mubr.bf16.gmra.mrb[0].mxu0 %v837
    %v3813 = vpop.f32.mrb[0].mxu0
    %v3814 = vadd.f32 %v3653, %v3813
    %v3815 = vpop.f32.mrb[0].mxu0
    %v3816 = vpop.f32.mrb[0].mxu0
    %v3817 = vadd.f32 %v3656, %v3816
    %v3818 = vpop.f32.mrb[0].mxu0
    %3819 = vmatprep.mubr.bf16.mxu0 0
    %3820 = vmatmul.mubr.bf16.gmra.mrb[0].mxu0 %v840
    %v3821 = vpop.f32.mrb[0].mxu0
    %v3822 = vadd.f32 %v3661, %v3821
    %v3823 = vpop.f32.mrb[0].mxu0
    %v3824 = vpop.f32.mrb[0].mxu0
    %v3825 = vadd.f32 %v3664, %v3824
    %v3826 = vpop.f32.mrb[0].mxu0
    %3827 = vmatprep.mubr.bf16.mxu0 0
    %3828 = vmatmul.mubr.bf16.gmra.mrb[0].mxu0 %v843
    %v3829 = vpop.f32.mrb[0].mxu0
    %v3830 = vadd.f32 %v3669, %v3829
    %v3831 = vpop.f32.mrb[0].mxu0
    %v3832 = vpop.f32.mrb[0].mxu0
    %v3833 = vadd.f32 %v3672, %v3832
    %v3834 = vpop.f32.mrb[0].mxu0
    %3835 = vmatprep.mubr.bf16.mxu0 0
    %3836 = vmatmul.mubr.bf16.gmra.mrb[0].mxu0 %v846
    %v3837 = vpop.f32.mrb[0].mxu0
    %v3838 = vadd.f32 %v3677, %v3837
    %v3839 = vpop.f32.mrb[0].mxu0
    %v3840 = vpop.f32.mrb[0].mxu0
    %v3841 = vadd.f32 %v3680, %v3840
    %v3842 = vpop.f32.mrb[0].mxu0
    %3843 = vmatprep.mubr.bf16.mxu0 0
    %3844 = vmatmul.mubr.bf16.gmra.mrb[0].mxu0 %v849
    %v3845 = vpop.f32.mrb[0].mxu0
    %v3846 = vadd.f32 %v3685, %v3845
    %v3847 = vpop.f32.mrb[0].mxu0
    %v3848 = vpop.f32.mrb[0].mxu0
    %v3849 = vadd.f32 %v3688, %v3848
    %v3850 = vpop.f32.mrb[0].mxu0
    %3851 = vmatprep.mubr.bf16.mxu0 0
    %3852 = vmatmul.mubr.bf16.gmra.mrb[0].mxu0 %v852
    %v3853 = vpop.f32.mrb[0].mxu0
    %v3854 = vadd.f32 %v3693, %v3853
    %v3855 = vpop.f32.mrb[0].mxu0
    %v3856 = vpop.f32.mrb[0].mxu0
    %v3857 = vadd.f32 %v3696, %v3856
    %v3858 = vpop.f32.mrb[0].mxu0
    %3859 = vdwg.mxu0
    %v3860 = vmax.f32 %v3734, 0.0
    %v3861 = vmax.f32 %v3737, 0.0
    %v3862 = vmax.f32 %v3742, 0.0
    %v3863 = vmax.f32 %v3745, 0.0
    %v3864 = vmax.f32 %v3750, 0.0
    %v3865 = vmax.f32 %v3753, 0.0
    %v3866 = vmax.f32 %v3758, 0.0
    %v3867 = vmax.f32 %v3761, 0.0
    %v3868 = vmax.f32 %v3766, 0.0
    %v3869 = vmax.f32 %v3769, 0.0
    %v3870 = vmax.f32 %v3774, 0.0
    %v3871 = vmax.f32 %v3777, 0.0
    %v3872 = vmax.f32 %v3782, 0.0
    %v3873 = vmax.f32 %v3785, 0.0
    %v3874 = vmax.f32 %v3790, 0.0
    %v3875 = vmax.f32 %v3793, 0.0
    %v3876 = vmax.f32 %v3798, 0.0
    %v3877 = vmax.f32 %v3801, 0.0
    %v3878 = vmax.f32 %v3806, 0.0
    %v3879 = vmax.f32 %v3809, 0.0
    %v3880 = vmax.f32 %v3814, 0.0
    %v3881 = vmax.f32 %v3817, 0.0
    %v3882 = vmax.f32 %v3822, 0.0
    %v3883 = vmax.f32 %v3825, 0.0
    %v3884 = vmax.f32 %v3830, 0.0
    %v3885 = vmax.f32 %v3833, 0.0
    %v3886 = vmax.f32 %v3838, 0.0
    %v3887 = vmax.f32 %v3841, 0.0
    %v3888 = vmax.f32 %v3846, 0.0
    %v3889 = vmax.f32 %v3849, 0.0
    %v3890 = vmax.f32 %v3854, 0.0
    %v3891 = vmax.f32 %v3857, 0.0
    %v3892 = vmax.f32 %v3249, %v3860
    %v3893 = vmax.f32 %v3250, %v3861
    %v3894 = vmax.f32 %v3251, %v3862
    %v3895 = vmax.f32 %v3252, %v3863
    %v3896 = vmax.f32 %v3892, %v3864
    %v3897 = vmax.f32 %v3893, %v3865
    %v3898 = vmax.f32 %v3894, %v3866
    %v3899 = vmax.f32 %v3895, %v3867
    %v3900 = vmax.f32 %v3896, %v3868
    %v3901 = vmax.f32 %v3897, %v3869
    %v3902 = vmax.f32 %v3898, %v3870
    %v3903 = vmax.f32 %v3899, %v3871
    %v3904 = vmax.f32 %v3900, %v3872
    %v3905 = vmax.f32 %v3901, %v3873
    %v3906 = vmax.f32 %v3902, %v3874
    %v3907 = vmax.f32 %v3903, %v3875
    %v3908 = vmax.f32 %v3904, %v3876
    %v3909 = vmax.f32 %v3905, %v3877
    %v3910 = vmax.f32 %v3906, %v3878
    %v3911 = vmax.f32 %v3907, %v3879
    %v3912 = vmax.f32 %v3908, %v3880
    %v3913 = vmax.f32 %v3909, %v3881
    %v3914 = vmax.f32 %v3910, %v3882
    %v3915 = vmax.f32 %v3911, %v3883
    %v3916 = vmax.f32 %v3912, %v3884
    %v3917 = vmax.f32 %v3913, %v3885
    %v3918 = vmax.f32 %v3914, %v3886
    %v3919 = vmax.f32 %v3915, %v3887
    %v3920 = vmax.f32 %v3916, %v3888
    %v3921 = vmax.f32 %v3917, %v3889
    %v3922 = vmax.f32 %v3918, %v3890
    %v3923 = vmax.f32 %v3919, %v3891
    %v3924 = vld [vmem:[%s0 + $0xa0] sm:$0xf]
    %v3925 = vld [vmem:[%s0 + $0xa4] sm:$0xf]
    %v3926 = vld [vmem:[%s0 + $0xa8] sm:$0xf]
    %v3927 = vld [vmem:[%s0 + $0xac] sm:$0xf]
    %v3928 = vld [vmem:[%s0 + $0xb0] sm:$0xf]
    %v3929 = vld [vmem:[%s0 + $0xb4] sm:$0xf]
    %v3930 = vld [vmem:[%s0 + $0xb8] sm:$0xf]
    %v3931 = vld [vmem:[%s0 + $0xbc] sm:$0xf]
    %v3940 = vunpack.c.l.b16 %v3924
    %v3941 = vunpack.c.l.b16 %v3925
    %v3942 = vunpack.c.l.b16 %v3926
    %v3943 = vunpack.c.l.b16 %v3927
    %v3944 = vunpack.c.l.b16 %v3928
    %v3945 = vunpack.c.l.b16 %v3929
    %v3946 = vunpack.c.l.b16 %v3930
    %v3947 = vunpack.c.l.b16 %v3931
    %v3948 = vpack.c.b16 %v3941, %v3940
    %v3949 = vpack.c.b16 %v3943, %v3942
    %v3950 = vpack.c.b16 %v3945, %v3944
    %v3951 = vpack.c.b16 %v3947, %v3946
    %3956 = vmatprep.subr.bf16.mxu0 0
    %3957 = vmatpush1.bf16.msra.mxu0 %v3948
    %3958 = vmatprep.subr.bf16.mxu0 0
    %3959 = vmatpush1.bf16.msra.mxu0 %v3949
    %3960 = vmatprep.subr.bf16.mxu0 0
    %3961 = vmatpush1.bf16.msra.mxu0 %v3950
    %3962 = vmatprep.subr.bf16.mxu0 0
    %3963 = vmatpush1.bf16.msra.mxu0 %v3951
    %3964 = vmatprep.subr.bf16.mxu0 0
    %3965 = vmatpush1.bf16.msra.mxu0 0
    %3966 = vmatprep.subr.bf16.mxu0 0
    %3967 = vmatpush1.bf16.msra.mxu0 0
    %3968 = vmatprep.subr.bf16.mxu0 0
    %3969 = vmatpush1.bf16.msra.mxu0 0
    %3970 = vmatprep.subr.bf16.mxu0 0
    %3971 = vmatpush1.bf16.msra.mxu0 0
    %3972 = vmatprep.subr.bf16.mxu0 0
    %3973 = vmatpush1.bf16.msra.mxu0 0
    %3974 = vmatprep.subr.bf16.mxu0 0
    %3975 = vmatpush1.bf16.msra.mxu0 0
    %3976 = vmatprep.subr.bf16.mxu0 0
    %3977 = vmatpush1.bf16.msra.mxu0 0
    %3978 = vmatprep.subr.bf16.mxu0 0
    %3979 = vmatpush1.bf16.msra.mxu0 0
    %3980 = vmatprep.subr.bf16.mxu0 0
    %3981 = vmatpush1.bf16.msra.mxu0 0
    %3982 = vmatprep.subr.bf16.mxu0 0
    %3983 = vmatpush1.bf16.msra.mxu0 0
    %3984 = vmatprep.subr.bf16.mxu0 0
    %3985 = vmatpush1.bf16.msra.mxu0 0
    %3986 = vmatprep.subr.bf16.mxu0 0
    %3987 = vmatpush1.bf16.msra.mxu0 0
    %3988 = vmatprep.mubr.bf16.mxu0 0
    %3989 = vmatmul.mubr.bf16.gmra.mrb[0].mxu0 %v254
    %v3990 = vpop.f32.mrb[0].mxu0
    %v3991 = vadd.f32 0.0, %v3990
    %v3992 = vpop.f32.mrb[0].mxu0
    %v3993 = vpop.f32.mrb[0].mxu0
    %v3994 = vadd.f32 0.0, %v3993
    %v3995 = vpop.f32.mrb[0].mxu0
    %3996 = vmatprep.mubr.bf16.mxu0 0
    %3997 = vmatmul.mubr.bf16.gmra.mrb[0].mxu0 %v257
    %v3998 = vpop.f32.mrb[0].mxu0
    %v3999 = vadd.f32 0.0, %v3998
    %v4000 = vpop.f32.mrb[0].mxu0
    %v4001 = vpop.f32.mrb[0].mxu0
    %v4002 = vadd.f32 0.0, %v4001
    %v4003 = vpop.f32.mrb[0].mxu0
    %4004 = vmatprep.mubr.bf16.mxu0 0
    %4005 = vmatmul.mubr.bf16.gmra.mrb[0].mxu0 %v260
    %v4006 = vpop.f32.mrb[0].mxu0
    %v4007 = vadd.f32 0.0, %v4006
    %v4008 = vpop.f32.mrb[0].mxu0
    %v4009 = vpop.f32.mrb[0].mxu0
    %v4010 = vadd.f32 0.0, %v4009
    %v4011 = vpop.f32.mrb[0].mxu0
    %4012 = vmatprep.mubr.bf16.mxu0 0
    %4013 = vmatmul.mubr.bf16.gmra.mrb[0].mxu0 %v263
    %v4014 = vpop.f32.mrb[0].mxu0
    %v4015 = vadd.f32 0.0, %v4014
    %v4016 = vpop.f32.mrb[0].mxu0
    %v4017 = vpop.f32.mrb[0].mxu0
    %v4018 = vadd.f32 0.0, %v4017
    %v4019 = vpop.f32.mrb[0].mxu0
    %4020 = vmatprep.mubr.bf16.mxu0 0
    %4021 = vmatmul.mubr.bf16.gmra.mrb[0].mxu0 %v266
    %v4022 = vpop.f32.mrb[0].mxu0
    %v4023 = vadd.f32 0.0, %v4022
    %v4024 = vpop.f32.mrb[0].mxu0
    %v4025 = vpop.f32.mrb[0].mxu0
    %v4026 = vadd.f32 0.0, %v4025
    %v4027 = vpop.f32.mrb[0].mxu0
    %4028 = vmatprep.mubr.bf16.mxu0 0
    %4029 = vmatmul.mubr.bf16.gmra.mrb[0].mxu0 %v269
    %v4030 = vpop.f32.mrb[0].mxu0
    %v4031 = vadd.f32 0.0, %v4030
    %v4032 = vpop.f32.mrb[0].mxu0
    %v4033 = vpop.f32.mrb[0].mxu0
    %v4034 = vadd.f32 0.0, %v4033
    %v4035 = vpop.f32.mrb[0].mxu0
    %4036 = vmatprep.mubr.bf16.mxu0 0
    %4037 = vmatmul.mubr.bf16.gmra.mrb[0].mxu0 %v272
    %v4038 = vpop.f32.mrb[0].mxu0
    %v4039 = vadd.f32 0.0, %v4038
    %v4040 = vpop.f32.mrb[0].mxu0
    %v4041 = vpop.f32.mrb[0].mxu0
    %v4042 = vadd.f32 0.0, %v4041
    %v4043 = vpop.f32.mrb[0].mxu0
    %4044 = vmatprep.mubr.bf16.mxu0 0
    %4045 = vmatmul.mubr.bf16.gmra.mrb[0].mxu0 %v275
    %v4046 = vpop.f32.mrb[0].mxu0
    %v4047 = vadd.f32 0.0, %v4046
    %v4048 = vpop.f32.mrb[0].mxu0
    %v4049 = vpop.f32.mrb[0].mxu0
    %v4050 = vadd.f32 0.0, %v4049
    %v4051 = vpop.f32.mrb[0].mxu0
    %4052 = vmatprep.mubr.bf16.mxu0 0
    %4053 = vmatmul.mubr.bf16.gmra.mrb[0].mxu0 %v278
    %v4054 = vpop.f32.mrb[0].mxu0
    %v4055 = vadd.f32 0.0, %v4054
    %v4056 = vpop.f32.mrb[0].mxu0
    %v4057 = vpop.f32.mrb[0].mxu0
    %v4058 = vadd.f32 0.0, %v4057
    %v4059 = vpop.f32.mrb[0].mxu0
    %4060 = vmatprep.mubr.bf16.mxu0 0
    %4061 = vmatmul.mubr.bf16.gmra.mrb[0].mxu0 %v281
    %v4062 = vpop.f32.mrb[0].mxu0
    %v4063 = vadd.f32 0.0, %v4062
    %v4064 = vpop.f32.mrb[0].mxu0
    %v4065 = vpop.f32.mrb[0].mxu0
    %v4066 = vadd.f32 0.0, %v4065
    %v4067 = vpop.f32.mrb[0].mxu0
    %4068 = vmatprep.mubr.bf16.mxu0 0
    %4069 = vmatmul.mubr.bf16.gmra.mrb[0].mxu0 %v284
    %v4070 = vpop.f32.mrb[0].mxu0
    %v4071 = vadd.f32 0.0, %v4070
    %v4072 = vpop.f32.mrb[0].mxu0
    %v4073 = vpop.f32.mrb[0].mxu0
    %v4074 = vadd.f32 0.0, %v4073
    %v4075 = vpop.f32.mrb[0].mxu0
    %4076 = vmatprep.mubr.bf16.mxu0 0
    %4077 = vmatmul.mubr.bf16.gmra.mrb[0].mxu0 %v287
    %v4078 = vpop.f32.mrb[0].mxu0
    %v4079 = vadd.f32 0.0, %v4078
    %v4080 = vpop.f32.mrb[0].mxu0
    %v4081 = vpop.f32.mrb[0].mxu0
    %v4082 = vadd.f32 0.0, %v4081
    %v4083 = vpop.f32.mrb[0].mxu0
    %4084 = vmatprep.mubr.bf16.mxu0 0
    %4085 = vmatmul.mubr.bf16.gmra.mrb[0].mxu0 %v290
    %v4086 = vpop.f32.mrb[0].mxu0
    %v4087 = vadd.f32 0.0, %v4086
    %v4088 = vpop.f32.mrb[0].mxu0
    %v4089 = vpop.f32.mrb[0].mxu0
    %v4090 = vadd.f32 0.0, %v4089
    %v4091 = vpop.f32.mrb[0].mxu0
    %4092 = vmatprep.mubr.bf16.mxu0 0
    %4093 = vmatmul.mubr.bf16.gmra.mrb[0].mxu0 %v293
    %v4094 = vpop.f32.mrb[0].mxu0
    %v4095 = vadd.f32 0.0, %v4094
    %v4096 = vpop.f32.mrb[0].mxu0
    %v4097 = vpop.f32.mrb[0].mxu0
    %v4098 = vadd.f32 0.0, %v4097
    %v4099 = vpop.f32.mrb[0].mxu0
    %4100 = vmatprep.mubr.bf16.mxu0 0
    %4101 = vmatmul.mubr.bf16.gmra.mrb[0].mxu0 %v296
    %v4102 = vpop.f32.mrb[0].mxu0
    %v4103 = vadd.f32 0.0, %v4102
    %v4104 = vpop.f32.mrb[0].mxu0
    %v4105 = vpop.f32.mrb[0].mxu0
    %v4106 = vadd.f32 0.0, %v4105
    %v4107 = vpop.f32.mrb[0].mxu0
    %4108 = vmatprep.mubr.bf16.mxu0 0
    %4109 = vmatmul.mubr.bf16.gmra.mrb[0].mxu0 %v299
    %v4110 = vpop.f32.mrb[0].mxu0
    %v4111 = vadd.f32 0.0, %v4110
    %v4112 = vpop.f32.mrb[0].mxu0
    %v4113 = vpop.f32.mrb[0].mxu0
    %v4114 = vadd.f32 0.0, %v4113
    %v4115 = vpop.f32.mrb[0].mxu0
    %4116 = vmatprep.mubr.bf16.mxu0 0
    %4117 = vmatmul.mubr.bf16.gmra.mrb[0].mxu0 %v302
    %v4118 = vpop.f32.mrb[0].mxu0
    %v4119 = vadd.f32 0.0, %v4118
    %v4120 = vpop.f32.mrb[0].mxu0
    %v4121 = vpop.f32.mrb[0].mxu0
    %v4122 = vadd.f32 0.0, %v4121
    %v4123 = vpop.f32.mrb[0].mxu0
    %4124 = vmatprep.mubr.bf16.mxu0 0
    %4125 = vmatmul.mubr.bf16.gmra.mrb[0].mxu0 %v305
    %v4126 = vpop.f32.mrb[0].mxu0
    %v4127 = vadd.f32 0.0, %v4126
    %v4128 = vpop.f32.mrb[0].mxu0
    %v4129 = vpop.f32.mrb[0].mxu0
    %v4130 = vadd.f32 0.0, %v4129
    %v4131 = vpop.f32.mrb[0].mxu0
    %4132 = vmatprep.mubr.bf16.mxu0 0
    %4133 = vmatmul.mubr.bf16.gmra.mrb[0].mxu0 %v308
    %v4134 = vpop.f32.mrb[0].mxu0
    %v4135 = vadd.f32 0.0, %v4134
    %v4136 = vpop.f32.mrb[0].mxu0
    %v4137 = vpop.f32.mrb[0].mxu0
    %v4138 = vadd.f32 0.0, %v4137
    %v4139 = vpop.f32.mrb[0].mxu0
    %4140 = vmatprep.mubr.bf16.mxu0 0
    %4141 = vmatmul.mubr.bf16.gmra.mrb[0].mxu0 %v311
    %v4142 = vpop.f32.mrb[0].mxu0
    %v4143 = vadd.f32 0.0, %v4142
    %v4144 = vpop.f32.mrb[0].mxu0
    %v4145 = vpop.f32.mrb[0].mxu0
    %v4146 = vadd.f32 0.0, %v4145
    %v4147 = vpop.f32.mrb[0].mxu0
    %4148 = vdwg.mxu0
    %v4149 = vmax.f32 %v3991, 0.0
    %v4150 = vmax.f32 %v3994, 0.0
    %v4151 = vmax.f32 %v3999, 0.0
    %v4152 = vmax.f32 %v4002, 0.0
    %v4153 = vmax.f32 %v4007, 0.0
    %v4154 = vmax.f32 %v4010, 0.0
    %v4155 = vmax.f32 %v4015, 0.0
    %v4156 = vmax.f32 %v4018, 0.0
    %v4157 = vmax.f32 %v4023, 0.0
    %v4158 = vmax.f32 %v4026, 0.0
    %v4159 = vmax.f32 %v4031, 0.0
    %v4160 = vmax.f32 %v4034, 0.0
    %v4161 = vmax.f32 %v4039, 0.0
    %v4162 = vmax.f32 %v4042, 0.0
    %v4163 = vmax.f32 %v4047, 0.0
    %v4164 = vmax.f32 %v4050, 0.0
    %v4165 = vmax.f32 %v4055, 0.0
    %v4166 = vmax.f32 %v4058, 0.0
    %v4167 = vmax.f32 %v4063, 0.0
    %v4168 = vmax.f32 %v4066, 0.0
    %v4169 = vmax.f32 %v4071, 0.0
    %v4170 = vmax.f32 %v4074, 0.0
    %v4171 = vmax.f32 %v4079, 0.0
    %v4172 = vmax.f32 %v4082, 0.0
    %v4173 = vmax.f32 %v4087, 0.0
    %v4174 = vmax.f32 %v4090, 0.0
    %v4175 = vmax.f32 %v4095, 0.0
    %v4176 = vmax.f32 %v4098, 0.0
    %v4177 = vmax.f32 %v4103, 0.0
    %v4178 = vmax.f32 %v4106, 0.0
    %v4179 = vmax.f32 %v4111, 0.0
    %v4180 = vmax.f32 %v4114, 0.0
    %v4181 = vmax.f32 %v4119, 0.0
    %v4182 = vmax.f32 %v4122, 0.0
    %v4183 = vmax.f32 %v4127, 0.0
    %v4184 = vmax.f32 %v4130, 0.0
    %v4185 = vmax.f32 %v4135, 0.0
    %v4186 = vmax.f32 %v4138, 0.0
    %v4187 = vmax.f32 %v4143, 0.0
    %v4188 = vmax.f32 %v4146, 0.0
    %v4189 = vpack.c.bf16 %v4150, %v4149
    %v4190 = vpack.c.bf16 %v4152, %v4151
    %v4191 = vpack.c.bf16 %v4154, %v4153
    %v4192 = vpack.c.bf16 %v4156, %v4155
    %v4193 = vpack.c.bf16 %v4158, %v4157
    %v4194 = vpack.c.bf16 %v4160, %v4159
    %v4195 = vpack.c.bf16 %v4162, %v4161
    %v4196 = vpack.c.bf16 %v4164, %v4163
    %v4197 = vpack.c.bf16 %v4166, %v4165
    %v4198 = vpack.c.bf16 %v4168, %v4167
    %v4199 = vpack.c.bf16 %v4170, %v4169
    %v4200 = vpack.c.bf16 %v4172, %v4171
    %v4201 = vpack.c.bf16 %v4174, %v4173
    %v4202 = vpack.c.bf16 %v4176, %v4175
    %v4203 = vpack.c.bf16 %v4178, %v4177
    %v4204 = vpack.c.bf16 %v4180, %v4179
    %v4205 = vpack.c.bf16 %v4182, %v4181
    %v4206 = vpack.c.bf16 %v4184, %v4183
    %v4207 = vpack.c.bf16 %v4186, %v4185
    %v4208 = vpack.c.bf16 %v4188, %v4187
    %4209 = vmatprep.subr.bf16.mxu0 0
    %4210 = vmatpush1.bf16.msra.mxu0 %v4189
    %4211 = vmatprep.subr.bf16.mxu0 0
    %4212 = vmatpush1.bf16.msra.mxu0 %v4190
    %4213 = vmatprep.subr.bf16.mxu0 0
    %4214 = vmatpush1.bf16.msra.mxu0 %v4191
    %4215 = vmatprep.subr.bf16.mxu0 0
    %4216 = vmatpush1.bf16.msra.mxu0 %v4192
    %4217 = vmatprep.subr.bf16.mxu0 0
    %4218 = vmatpush1.bf16.msra.mxu0 %v4193
    %4219 = vmatprep.subr.bf16.mxu0 0
    %4220 = vmatpush1.bf16.msra.mxu0 %v4194
    %4221 = vmatprep.subr.bf16.mxu0 0
    %4222 = vmatpush1.bf16.msra.mxu0 %v4195
    %4223 = vmatprep.subr.bf16.mxu0 0
    %4224 = vmatpush1.bf16.msra.mxu0 %v4196
    %4225 = vmatprep.subr.bf16.mxu0 0
    %4226 = vmatpush1.bf16.msra.mxu0 %v4197
    %4227 = vmatprep.subr.bf16.mxu0 0
    %4228 = vmatpush1.bf16.msra.mxu0 %v4198
    %4229 = vmatprep.subr.bf16.mxu0 0
    %4230 = vmatpush1.bf16.msra.mxu0 %v4199
    %4231 = vmatprep.subr.bf16.mxu0 0
    %4232 = vmatpush1.bf16.msra.mxu0 %v4200
    %4233 = vmatprep.subr.bf16.mxu0 0
    %4234 = vmatpush1.bf16.msra.mxu0 %v4201
    %4235 = vmatprep.subr.bf16.mxu0 0
    %4236 = vmatpush1.bf16.msra.mxu0 %v4202
    %4237 = vmatprep.subr.bf16.mxu0 0
    %4238 = vmatpush1.bf16.msra.mxu0 %v4203
    %4239 = vmatprep.subr.bf16.mxu0 0
    %4240 = vmatpush1.bf16.msra.mxu0 %v4204
    %4241 = vmatprep.mubr.bf16.mxu0 %v727
    %4242 = vmatmul.mubr.bf16.gmra.mrb[0].mxu0 %v726
    %v4243 = vpop.f32.mrb[0].mxu0
    %v4244 = vadd.f32 0.0, %v4243
    %v4245 = vpop.f32.mrb[0].mxu0
    %v4246 = vpop.f32.mrb[0].mxu0
    %v4247 = vadd.f32 0.0, %v4246
    %v4248 = vpop.f32.mrb[0].mxu0
    %4249 = vmatprep.mubr.bf16.mxu0 %v730
    %4250 = vmatmul.mubr.bf16.gmra.mrb[0].mxu0 %v729
    %v4251 = vpop.f32.mrb[0].mxu0
    %v4252 = vadd.f32 0.0, %v4251
    %v4253 = vpop.f32.mrb[0].mxu0
    %v4254 = vpop.f32.mrb[0].mxu0
    %v4255 = vadd.f32 0.0, %v4254
    %v4256 = vpop.f32.mrb[0].mxu0
    %4257 = vmatprep.mubr.bf16.mxu0 %v733
    %4258 = vmatmul.mubr.bf16.gmra.mrb[0].mxu0 %v732
    %v4259 = vpop.f32.mrb[0].mxu0
    %v4260 = vadd.f32 0.0, %v4259
    %v4261 = vpop.f32.mrb[0].mxu0
    %v4262 = vpop.f32.mrb[0].mxu0
    %v4263 = vadd.f32 0.0, %v4262
    %v4264 = vpop.f32.mrb[0].mxu0
    %4265 = vmatprep.mubr.bf16.mxu0 %v736
    %4266 = vmatmul.mubr.bf16.gmra.mrb[0].mxu0 %v735
    %v4267 = vpop.f32.mrb[0].mxu0
    %v4268 = vadd.f32 0.0, %v4267
    %v4269 = vpop.f32.mrb[0].mxu0
    %v4270 = vpop.f32.mrb[0].mxu0
    %v4271 = vadd.f32 0.0, %v4270
    %v4272 = vpop.f32.mrb[0].mxu0
    %4273 = vmatprep.mubr.bf16.mxu0 %v739
    %4274 = vmatmul.mubr.bf16.gmra.mrb[0].mxu0 %v738
    %v4275 = vpop.f32.mrb[0].mxu0
    %v4276 = vadd.f32 0.0, %v4275
    %v4277 = vpop.f32.mrb[0].mxu0
    %v4278 = vpop.f32.mrb[0].mxu0
    %v4279 = vadd.f32 0.0, %v4278
    %v4280 = vpop.f32.mrb[0].mxu0
    %4281 = vmatprep.mubr.bf16.mxu0 %v742
    %4282 = vmatmul.mubr.bf16.gmra.mrb[0].mxu0 %v741
    %v4283 = vpop.f32.mrb[0].mxu0
    %v4284 = vadd.f32 0.0, %v4283
    %v4285 = vpop.f32.mrb[0].mxu0
    %v4286 = vpop.f32.mrb[0].mxu0
    %v4287 = vadd.f32 0.0, %v4286
    %v4288 = vpop.f32.mrb[0].mxu0
    %4289 = vmatprep.mubr.bf16.mxu0 %v745
    %4290 = vmatmul.mubr.bf16.gmra.mrb[0].mxu0 %v744
    %v4291 = vpop.f32.mrb[0].mxu0
    %v4292 = vadd.f32 0.0, %v4291
    %v4293 = vpop.f32.mrb[0].mxu0
    %v4294 = vpop.f32.mrb[0].mxu0
    %v4295 = vadd.f32 0.0, %v4294
    %v4296 = vpop.f32.mrb[0].mxu0
    %4297 = vmatprep.mubr.bf16.mxu0 %v748
    %4298 = vmatmul.mubr.bf16.gmra.mrb[0].mxu0 %v747
    %v4299 = vpop.f32.mrb[0].mxu0
    %v4300 = vadd.f32 0.0, %v4299
    %v4301 = vpop.f32.mrb[0].mxu0
    %v4302 = vpop.f32.mrb[0].mxu0
    %v4303 = vadd.f32 0.0, %v4302
    %v4304 = vpop.f32.mrb[0].mxu0
    %4305 = vmatprep.mubr.bf16.mxu0 %v751
    %4306 = vmatmul.mubr.bf16.gmra.mrb[0].mxu0 %v750
    %v4307 = vpop.f32.mrb[0].mxu0
    %v4308 = vadd.f32 0.0, %v4307
    %v4309 = vpop.f32.mrb[0].mxu0
    %v4310 = vpop.f32.mrb[0].mxu0
    %v4311 = vadd.f32 0.0, %v4310
    %v4312 = vpop.f32.mrb[0].mxu0
    %4313 = vmatprep.mubr.bf16.mxu0 %v754
    %4314 = vmatmul.mubr.bf16.gmra.mrb[0].mxu0 %v753
    %v4315 = vpop.f32.mrb[0].mxu0
    %v4316 = vadd.f32 0.0, %v4315
    %v4317 = vpop.f32.mrb[0].mxu0
    %v4318 = vpop.f32.mrb[0].mxu0
    %v4319 = vadd.f32 0.0, %v4318
    %v4320 = vpop.f32.mrb[0].mxu0
    %4321 = vmatprep.mubr.bf16.mxu0 %v757
    %4322 = vmatmul.mubr.bf16.gmra.mrb[0].mxu0 %v756
    %v4323 = vpop.f32.mrb[0].mxu0
    %v4324 = vadd.f32 0.0, %v4323
    %v4325 = vpop.f32.mrb[0].mxu0
    %v4326 = vpop.f32.mrb[0].mxu0
    %v4327 = vadd.f32 0.0, %v4326
    %v4328 = vpop.f32.mrb[0].mxu0
    %4329 = vmatprep.mubr.bf16.mxu0 %v760
    %4330 = vmatmul.mubr.bf16.gmra.mrb[0].mxu0 %v759
    %v4331 = vpop.f32.mrb[0].mxu0
    %v4332 = vadd.f32 0.0, %v4331
    %v4333 = vpop.f32.mrb[0].mxu0
    %v4334 = vpop.f32.mrb[0].mxu0
    %v4335 = vadd.f32 0.0, %v4334
    %v4336 = vpop.f32.mrb[0].mxu0
    %4337 = vmatprep.mubr.bf16.mxu0 %v763
    %4338 = vmatmul.mubr.bf16.gmra.mrb[0].mxu0 %v762
    %v4339 = vpop.f32.mrb[0].mxu0
    %v4340 = vadd.f32 0.0, %v4339
    %v4341 = vpop.f32.mrb[0].mxu0
    %v4342 = vpop.f32.mrb[0].mxu0
    %v4343 = vadd.f32 0.0, %v4342
    %v4344 = vpop.f32.mrb[0].mxu0
    %4345 = vmatprep.mubr.bf16.mxu0 %v766
    %4346 = vmatmul.mubr.bf16.gmra.mrb[0].mxu0 %v765
    %v4347 = vpop.f32.mrb[0].mxu0
    %v4348 = vadd.f32 0.0, %v4347
    %v4349 = vpop.f32.mrb[0].mxu0
    %v4350 = vpop.f32.mrb[0].mxu0
    %v4351 = vadd.f32 0.0, %v4350
    %v4352 = vpop.f32.mrb[0].mxu0
    %4353 = vmatprep.mubr.bf16.mxu0 %v769
    %4354 = vmatmul.mubr.bf16.gmra.mrb[0].mxu0 %v768
    %v4355 = vpop.f32.mrb[0].mxu0
    %v4356 = vadd.f32 0.0, %v4355
    %v4357 = vpop.f32.mrb[0].mxu0
    %v4358 = vpop.f32.mrb[0].mxu0
    %v4359 = vadd.f32 0.0, %v4358
    %v4360 = vpop.f32.mrb[0].mxu0
    %4361 = vmatprep.mubr.bf16.mxu0 %v772
    %4362 = vmatmul.mubr.bf16.gmra.mrb[0].mxu0 %v771
    %v4363 = vpop.f32.mrb[0].mxu0
    %v4364 = vadd.f32 0.0, %v4363
    %v4365 = vpop.f32.mrb[0].mxu0
    %v4366 = vpop.f32.mrb[0].mxu0
    %v4367 = vadd.f32 0.0, %v4366
    %v4368 = vpop.f32.mrb[0].mxu0
    %4369 = vdwg.mxu0
    %4370 = vmatprep.subr.bf16.mxu0 0
    %4371 = vmatpush1.bf16.msra.mxu0 %v4205
    %4372 = vmatprep.subr.bf16.mxu0 0
    %4373 = vmatpush1.bf16.msra.mxu0 %v4206
    %4374 = vmatprep.subr.bf16.mxu0 0
    %4375 = vmatpush1.bf16.msra.mxu0 %v4207
    %4376 = vmatprep.subr.bf16.mxu0 0
    %4377 = vmatpush1.bf16.msra.mxu0 %v4208
    %4378 = vmatprep.subr.bf16.mxu0 0
    %4379 = vmatpush1.bf16.msra.mxu0 0
    %4380 = vmatprep.subr.bf16.mxu0 0
    %4381 = vmatpush1.bf16.msra.mxu0 0
    %4382 = vmatprep.subr.bf16.mxu0 0
    %4383 = vmatpush1.bf16.msra.mxu0 0
    %4384 = vmatprep.subr.bf16.mxu0 0
    %4385 = vmatpush1.bf16.msra.mxu0 0
    %4386 = vmatprep.subr.bf16.mxu0 0
    %4387 = vmatpush1.bf16.msra.mxu0 0
    %4388 = vmatprep.subr.bf16.mxu0 0
    %4389 = vmatpush1.bf16.msra.mxu0 0
    %4390 = vmatprep.subr.bf16.mxu0 0
    %4391 = vmatpush1.bf16.msra.mxu0 0
    %4392 = vmatprep.subr.bf16.mxu0 0
    %4393 = vmatpush1.bf16.msra.mxu0 0
    %4394 = vmatprep.subr.bf16.mxu0 0
    %4395 = vmatpush1.bf16.msra.mxu0 0
    %4396 = vmatprep.subr.bf16.mxu0 0
    %4397 = vmatpush1.bf16.msra.mxu0 0
    %4398 = vmatprep.subr.bf16.mxu0 0
    %4399 = vmatpush1.bf16.msra.mxu0 0
    %4400 = vmatprep.subr.bf16.mxu0 0
    %4401 = vmatpush1.bf16.msra.mxu0 0
    %4402 = vmatprep.mubr.bf16.mxu0 0
    %4403 = vmatmul.mubr.bf16.gmra.mrb[0].mxu0 %v807
    %v4404 = vpop.f32.mrb[0].mxu0
    %v4405 = vadd.f32 %v4244, %v4404
    %v4406 = vpop.f32.mrb[0].mxu0
    %v4407 = vpop.f32.mrb[0].mxu0
    %v4408 = vadd.f32 %v4247, %v4407
    %v4409 = vpop.f32.mrb[0].mxu0
    %4410 = vmatprep.mubr.bf16.mxu0 0
    %4411 = vmatmul.mubr.bf16.gmra.mrb[0].mxu0 %v810
    %v4412 = vpop.f32.mrb[0].mxu0
    %v4413 = vadd.f32 %v4252, %v4412
    %v4414 = vpop.f32.mrb[0].mxu0
    %v4415 = vpop.f32.mrb[0].mxu0
    %v4416 = vadd.f32 %v4255, %v4415
    %v4417 = vpop.f32.mrb[0].mxu0
    %4418 = vmatprep.mubr.bf16.mxu0 0
    %4419 = vmatmul.mubr.bf16.gmra.mrb[0].mxu0 %v813
    %v4420 = vpop.f32.mrb[0].mxu0
    %v4421 = vadd.f32 %v4260, %v4420
    %v4422 = vpop.f32.mrb[0].mxu0
    %v4423 = vpop.f32.mrb[0].mxu0
    %v4424 = vadd.f32 %v4263, %v4423
    %v4425 = vpop.f32.mrb[0].mxu0
    %4426 = vmatprep.mubr.bf16.mxu0 0
    %4427 = vmatmul.mubr.bf16.gmra.mrb[0].mxu0 %v816
    %v4428 = vpop.f32.mrb[0].mxu0
    %v4429 = vadd.f32 %v4268, %v4428
    %v4430 = vpop.f32.mrb[0].mxu0
    %v4431 = vpop.f32.mrb[0].mxu0
    %v4432 = vadd.f32 %v4271, %v4431
    %v4433 = vpop.f32.mrb[0].mxu0
    %4434 = vmatprep.mubr.bf16.mxu0 0
    %4435 = vmatmul.mubr.bf16.gmra.mrb[0].mxu0 %v819
    %v4436 = vpop.f32.mrb[0].mxu0
    %v4437 = vadd.f32 %v4276, %v4436
    %v4438 = vpop.f32.mrb[0].mxu0
    %v4439 = vpop.f32.mrb[0].mxu0
    %v4440 = vadd.f32 %v4279, %v4439
    %v4441 = vpop.f32.mrb[0].mxu0
    %4442 = vmatprep.mubr.bf16.mxu0 0
    %4443 = vmatmul.mubr.bf16.gmra.mrb[0].mxu0 %v822
    %v4444 = vpop.f32.mrb[0].mxu0
    %v4445 = vadd.f32 %v4284, %v4444
    %v4446 = vpop.f32.mrb[0].mxu0
    %v4447 = vpop.f32.mrb[0].mxu0
    %v4448 = vadd.f32 %v4287, %v4447
    %v4449 = vpop.f32.mrb[0].mxu0
    %4450 = vmatprep.mubr.bf16.mxu0 0
    %4451 = vmatmul.mubr.bf16.gmra.mrb[0].mxu0 %v825
    %v4452 = vpop.f32.mrb[0].mxu0
    %v4453 = vadd.f32 %v4292, %v4452
    %v4454 = vpop.f32.mrb[0].mxu0
    %v4455 = vpop.f32.mrb[0].mxu0
    %v4456 = vadd.f32 %v4295, %v4455
    %v4457 = vpop.f32.mrb[0].mxu0
    %4458 = vmatprep.mubr.bf16.mxu0 0
    %4459 = vmatmul.mubr.bf16.gmra.mrb[0].mxu0 %v828
    %v4460 = vpop.f32.mrb[0].mxu0
    %v4461 = vadd.f32 %v4300, %v4460
    %v4462 = vpop.f32.mrb[0].mxu0
    %v4463 = vpop.f32.mrb[0].mxu0
    %v4464 = vadd.f32 %v4303, %v4463
    %v4465 = vpop.f32.mrb[0].mxu0
    %4466 = vmatprep.mubr.bf16.mxu0 0
    %4467 = vmatmul.mubr.bf16.gmra.mrb[0].mxu0 %v831
    %v4468 = vpop.f32.mrb[0].mxu0
    %v4469 = vadd.f32 %v4308, %v4468
    %v4470 = vpop.f32.mrb[0].mxu0
    %v4471 = vpop.f32.mrb[0].mxu0
    %v4472 = vadd.f32 %v4311, %v4471
    %v4473 = vpop.f32.mrb[0].mxu0
    %4474 = vmatprep.mubr.bf16.mxu0 0
    %4475 = vmatmul.mubr.bf16.gmra.mrb[0].mxu0 %v834
    %v4476 = vpop.f32.mrb[0].mxu0
    %v4477 = vadd.f32 %v4316, %v4476
    %v4478 = vpop.f32.mrb[0].mxu0
    %v4479 = vpop.f32.mrb[0].mxu0
    %v4480 = vadd.f32 %v4319, %v4479
    %v4481 = vpop.f32.mrb[0].mxu0
    %4482 = vmatprep.mubr.bf16.mxu0 0
    %4483 = vmatmul.mubr.bf16.gmra.mrb[0].mxu0 %v837
    %v4484 = vpop.f32.mrb[0].mxu0
    %v4485 = vadd.f32 %v4324, %v4484
    %v4486 = vpop.f32.mrb[0].mxu0
    %v4487 = vpop.f32.mrb[0].mxu0
    %v4488 = vadd.f32 %v4327, %v4487
    %v4489 = vpop.f32.mrb[0].mxu0
    %4490 = vmatprep.mubr.bf16.mxu0 0
    %4491 = vmatmul.mubr.bf16.gmra.mrb[0].mxu0 %v840
    %v4492 = vpop.f32.mrb[0].mxu0
    %v4493 = vadd.f32 %v4332, %v4492
    %v4494 = vpop.f32.mrb[0].mxu0
    %v4495 = vpop.f32.mrb[0].mxu0
    %v4496 = vadd.f32 %v4335, %v4495
    %v4497 = vpop.f32.mrb[0].mxu0
    %4498 = vmatprep.mubr.bf16.mxu0 0
    %4499 = vmatmul.mubr.bf16.gmra.mrb[0].mxu0 %v843
    %v4500 = vpop.f32.mrb[0].mxu0
    %v4501 = vadd.f32 %v4340, %v4500
    %v4502 = vpop.f32.mrb[0].mxu0
    %v4503 = vpop.f32.mrb[0].mxu0
    %v4504 = vadd.f32 %v4343, %v4503
    %v4505 = vpop.f32.mrb[0].mxu0
    %4506 = vmatprep.mubr.bf16.mxu0 0
    %4507 = vmatmul.mubr.bf16.gmra.mrb[0].mxu0 %v846
    %v4508 = vpop.f32.mrb[0].mxu0
    %v4509 = vadd.f32 %v4348, %v4508
    %v4510 = vpop.f32.mrb[0].mxu0
    %v4511 = vpop.f32.mrb[0].mxu0
    %v4512 = vadd.f32 %v4351, %v4511
    %v4513 = vpop.f32.mrb[0].mxu0
    %4514 = vmatprep.mubr.bf16.mxu0 0
    %4515 = vmatmul.mubr.bf16.gmra.mrb[0].mxu0 %v849
    %v4516 = vpop.f32.mrb[0].mxu0
    %v4517 = vadd.f32 %v4356, %v4516
    %v4518 = vpop.f32.mrb[0].mxu0
    %v4519 = vpop.f32.mrb[0].mxu0
    %v4520 = vadd.f32 %v4359, %v4519
    %v4521 = vpop.f32.mrb[0].mxu0
    %4522 = vmatprep.mubr.bf16.mxu0 0
    %4523 = vmatmul.mubr.bf16.gmra.mrb[0].mxu0 %v852
    %v4524 = vpop.f32.mrb[0].mxu0
    %v4525 = vadd.f32 %v4364, %v4524
    %v4526 = vpop.f32.mrb[0].mxu0
    %v4527 = vpop.f32.mrb[0].mxu0
    %v4528 = vadd.f32 %v4367, %v4527
    %v4529 = vpop.f32.mrb[0].mxu0
    %4530 = vdwg.mxu0
    %v4531 = vmax.f32 %v4405, 0.0
    %v4532 = vmax.f32 %v4408, 0.0
    %v4533 = vmax.f32 %v4413, 0.0
    %v4534 = vmax.f32 %v4416, 0.0
    %v4535 = vmax.f32 %v4421, 0.0
    %v4536 = vmax.f32 %v4424, 0.0
    %v4537 = vmax.f32 %v4429, 0.0
    %v4538 = vmax.f32 %v4432, 0.0
    %v4539 = vmax.f32 %v4437, 0.0
    %v4540 = vmax.f32 %v4440, 0.0
    %v4541 = vmax.f32 %v4445, 0.0
    %v4542 = vmax.f32 %v4448, 0.0
    %v4543 = vmax.f32 %v4453, 0.0
    %v4544 = vmax.f32 %v4456, 0.0
    %v4545 = vmax.f32 %v4461, 0.0
    %v4546 = vmax.f32 %v4464, 0.0
    %v4547 = vmax.f32 %v4469, 0.0
    %v4548 = vmax.f32 %v4472, 0.0
    %v4549 = vmax.f32 %v4477, 0.0
    %v4550 = vmax.f32 %v4480, 0.0
    %v4551 = vmax.f32 %v4485, 0.0
    %v4552 = vmax.f32 %v4488, 0.0
    %v4553 = vmax.f32 %v4493, 0.0
    %v4554 = vmax.f32 %v4496, 0.0
    %v4555 = vmax.f32 %v4501, 0.0
    %v4556 = vmax.f32 %v4504, 0.0
    %v4557 = vmax.f32 %v4509, 0.0
    %v4558 = vmax.f32 %v4512, 0.0
    %v4559 = vmax.f32 %v4517, 0.0
    %v4560 = vmax.f32 %v4520, 0.0
    %v4561 = vmax.f32 %v4525, 0.0
    %v4562 = vmax.f32 %v4528, 0.0
    %v4563 = vmax.f32 %v3920, %v4531
    %v4564 = vmax.f32 %v3921, %v4532
    %v4565 = vmax.f32 %v3922, %v4533
    %v4566 = vmax.f32 %v3923, %v4534
    %v4567 = vmax.f32 %v4563, %v4535
    %v4568 = vmax.f32 %v4564, %v4536
    %v4569 = vmax.f32 %v4565, %v4537
    %v4570 = vmax.f32 %v4566, %v4538
    %v4571 = vmax.f32 %v4567, %v4539
    %v4572 = vmax.f32 %v4568, %v4540
    %v4573 = vmax.f32 %v4569, %v4541
    %v4574 = vmax.f32 %v4570, %v4542
    %v4575 = vmax.f32 %v4571, %v4543
    %v4576 = vmax.f32 %v4572, %v4544
    %v4577 = vmax.f32 %v4573, %v4545
    %v4578 = vmax.f32 %v4574, %v4546
    %v4579 = vmax.f32 %v4575, %v4547
    %v4580 = vmax.f32 %v4576, %v4548
    %v4581 = vmax.f32 %v4577, %v4549
    %v4582 = vmax.f32 %v4578, %v4550
    %v4583 = vmax.f32 %v4579, %v4551
    %v4584 = vmax.f32 %v4580, %v4552
    %v4585 = vmax.f32 %v4581, %v4553
    %v4586 = vmax.f32 %v4582, %v4554
    %v4587 = vmax.f32 %v4583, %v4555
    %v4588 = vmax.f32 %v4584, %v4556
    %v4589 = vmax.f32 %v4585, %v4557
    %v4590 = vmax.f32 %v4586, %v4558
    %v4591 = vmax.f32 %v4587, %v4559
    %v4592 = vmax.f32 %v4588, %v4560
    %v4593 = vmax.f32 %v4589, %v4561
    %v4594 = vmax.f32 %v4590, %v4562
    %v4595 = vld [vmem:[%s0 + $0xc0] sm:$0xf]
    %v4596 = vld [vmem:[%s0 + $0xc4] sm:$0xf]
    %v4597 = vld [vmem:[%s0 + $0xc8] sm:$0xf]
    %v4598 = vld [vmem:[%s0 + $0xcc] sm:$0xf]
    %v4599 = vld [vmem:[%s0 + $0xd0] sm:$0xf]
    %v4600 = vld [vmem:[%s0 + $0xd4] sm:$0xf]
    %v4601 = vld [vmem:[%s0 + $0xd8] sm:$0xf]
    %v4602 = vld [vmem:[%s0 + $0xdc] sm:$0xf]
    %v4611 = vunpack.c.l.b16 %v4595
    %v4612 = vunpack.c.l.b16 %v4596
    %v4613 = vunpack.c.l.b16 %v4597
    %v4614 = vunpack.c.l.b16 %v4598
    %v4615 = vunpack.c.l.b16 %v4599
    %v4616 = vunpack.c.l.b16 %v4600
    %v4617 = vunpack.c.l.b16 %v4601
    %v4618 = vunpack.c.l.b16 %v4602
    %v4619 = vpack.c.b16 %v4612, %v4611
    %v4620 = vpack.c.b16 %v4614, %v4613
    %v4621 = vpack.c.b16 %v4616, %v4615
    %v4622 = vpack.c.b16 %v4618, %v4617
    %4627 = vmatprep.subr.bf16.mxu0 0
    %4628 = vmatpush1.bf16.msra.mxu0 %v4619
    %4629 = vmatprep.subr.bf16.mxu0 0
    %4630 = vmatpush1.bf16.msra.mxu0 %v4620
    %4631 = vmatprep.subr.bf16.mxu0 0
    %4632 = vmatpush1.bf16.msra.mxu0 %v4621
    %4633 = vmatprep.subr.bf16.mxu0 0
    %4634 = vmatpush1.bf16.msra.mxu0 %v4622
    %4635 = vmatprep.subr.bf16.mxu0 0
    %4636 = vmatpush1.bf16.msra.mxu0 0
    %4637 = vmatprep.subr.bf16.mxu0 0
    %4638 = vmatpush1.bf16.msra.mxu0 0
    %4639 = vmatprep.subr.bf16.mxu0 0
    %4640 = vmatpush1.bf16.msra.mxu0 0
    %4641 = vmatprep.subr.bf16.mxu0 0
    %4642 = vmatpush1.bf16.msra.mxu0 0
    %4643 = vmatprep.subr.bf16.mxu0 0
    %4644 = vmatpush1.bf16.msra.mxu0 0
    %4645 = vmatprep.subr.bf16.mxu0 0
    %4646 = vmatpush1.bf16.msra.mxu0 0
    %4647 = vmatprep.subr.bf16.mxu0 0
    %4648 = vmatpush1.bf16.msra.mxu0 0
    %4649 = vmatprep.subr.bf16.mxu0 0
    %4650 = vmatpush1.bf16.msra.mxu0 0
    %4651 = vmatprep.subr.bf16.mxu0 0
    %4652 = vmatpush1.bf16.msra.mxu0 0
    %4653 = vmatprep.subr.bf16.mxu0 0
    %4654 = vmatpush1.bf16.msra.mxu0 0
    %4655 = vmatprep.subr.bf16.mxu0 0
    %4656 = vmatpush1.bf16.msra.mxu0 0
    %4657 = vmatprep.subr.bf16.mxu0 0
    %4658 = vmatpush1.bf16.msra.mxu0 0
    %4659 = vmatprep.mubr.bf16.mxu0 0
    %4660 = vmatmul.mubr.bf16.gmra.mrb[0].mxu0 %v254
    %v4661 = vpop.f32.mrb[0].mxu0
    %v4662 = vadd.f32 0.0, %v4661
    %v4663 = vpop.f32.mrb[0].mxu0
    %v4664 = vpop.f32.mrb[0].mxu0
    %v4665 = vadd.f32 0.0, %v4664
    %v4666 = vpop.f32.mrb[0].mxu0
    %4667 = vmatprep.mubr.bf16.mxu0 0
    %4668 = vmatmul.mubr.bf16.gmra.mrb[0].mxu0 %v257
    %v4669 = vpop.f32.mrb[0].mxu0
    %v4670 = vadd.f32 0.0, %v4669
    %v4671 = vpop.f32.mrb[0].mxu0
    %v4672 = vpop.f32.mrb[0].mxu0
    %v4673 = vadd.f32 0.0, %v4672
    %v4674 = vpop.f32.mrb[0].mxu0
    %4675 = vmatprep.mubr.bf16.mxu0 0
    %4676 = vmatmul.mubr.bf16.gmra.mrb[0].mxu0 %v260
    %v4677 = vpop.f32.mrb[0].mxu0
    %v4678 = vadd.f32 0.0, %v4677
    %v4679 = vpop.f32.mrb[0].mxu0
    %v4680 = vpop.f32.mrb[0].mxu0
    %v4681 = vadd.f32 0.0, %v4680
    %v4682 = vpop.f32.mrb[0].mxu0
    %4683 = vmatprep.mubr.bf16.mxu0 0
    %4684 = vmatmul.mubr.bf16.gmra.mrb[0].mxu0 %v263
    %v4685 = vpop.f32.mrb[0].mxu0
    %v4686 = vadd.f32 0.0, %v4685
    %v4687 = vpop.f32.mrb[0].mxu0
    %v4688 = vpop.f32.mrb[0].mxu0
    %v4689 = vadd.f32 0.0, %v4688
    %v4690 = vpop.f32.mrb[0].mxu0
    %4691 = vmatprep.mubr.bf16.mxu0 0
    %4692 = vmatmul.mubr.bf16.gmra.mrb[0].mxu0 %v266
    %v4693 = vpop.f32.mrb[0].mxu0
    %v4694 = vadd.f32 0.0, %v4693
    %v4695 = vpop.f32.mrb[0].mxu0
    %v4696 = vpop.f32.mrb[0].mxu0
    %v4697 = vadd.f32 0.0, %v4696
    %v4698 = vpop.f32.mrb[0].mxu0
    %4699 = vmatprep.mubr.bf16.mxu0 0
    %4700 = vmatmul.mubr.bf16.gmra.mrb[0].mxu0 %v269
    %v4701 = vpop.f32.mrb[0].mxu0
    %v4702 = vadd.f32 0.0, %v4701
    %v4703 = vpop.f32.mrb[0].mxu0
    %v4704 = vpop.f32.mrb[0].mxu0
    %v4705 = vadd.f32 0.0, %v4704
    %v4706 = vpop.f32.mrb[0].mxu0
    %4707 = vmatprep.mubr.bf16.mxu0 0
    %4708 = vmatmul.mubr.bf16.gmra.mrb[0].mxu0 %v272
    %v4709 = vpop.f32.mrb[0].mxu0
    %v4710 = vadd.f32 0.0, %v4709
    %v4711 = vpop.f32.mrb[0].mxu0
    %v4712 = vpop.f32.mrb[0].mxu0
    %v4713 = vadd.f32 0.0, %v4712
    %v4714 = vpop.f32.mrb[0].mxu0
    %4715 = vmatprep.mubr.bf16.mxu0 0
    %4716 = vmatmul.mubr.bf16.gmra.mrb[0].mxu0 %v275
    %v4717 = vpop.f32.mrb[0].mxu0
    %v4718 = vadd.f32 0.0, %v4717
    %v4719 = vpop.f32.mrb[0].mxu0
    %v4720 = vpop.f32.mrb[0].mxu0
    %v4721 = vadd.f32 0.0, %v4720
    %v4722 = vpop.f32.mrb[0].mxu0
    %4723 = vmatprep.mubr.bf16.mxu0 0
    %4724 = vmatmul.mubr.bf16.gmra.mrb[0].mxu0 %v278
    %v4725 = vpop.f32.mrb[0].mxu0
    %v4726 = vadd.f32 0.0, %v4725
    %v4727 = vpop.f32.mrb[0].mxu0
    %v4728 = vpop.f32.mrb[0].mxu0
    %v4729 = vadd.f32 0.0, %v4728
    %v4730 = vpop.f32.mrb[0].mxu0
    %4731 = vmatprep.mubr.bf16.mxu0 0
    %4732 = vmatmul.mubr.bf16.gmra.mrb[0].mxu0 %v281
    %v4733 = vpop.f32.mrb[0].mxu0
    %v4734 = vadd.f32 0.0, %v4733
    %v4735 = vpop.f32.mrb[0].mxu0
    %v4736 = vpop.f32.mrb[0].mxu0
    %v4737 = vadd.f32 0.0, %v4736
    %v4738 = vpop.f32.mrb[0].mxu0
    %4739 = vmatprep.mubr.bf16.mxu0 0
    %4740 = vmatmul.mubr.bf16.gmra.mrb[0].mxu0 %v284
    %v4741 = vpop.f32.mrb[0].mxu0
    %v4742 = vadd.f32 0.0, %v4741
    %v4743 = vpop.f32.mrb[0].mxu0
    %v4744 = vpop.f32.mrb[0].mxu0
    %v4745 = vadd.f32 0.0, %v4744
    %v4746 = vpop.f32.mrb[0].mxu0
    %4747 = vmatprep.mubr.bf16.mxu0 0
    %4748 = vmatmul.mubr.bf16.gmra.mrb[0].mxu0 %v287
    %v4749 = vpop.f32.mrb[0].mxu0
    %v4750 = vadd.f32 0.0, %v4749
    %v4751 = vpop.f32.mrb[0].mxu0
    %v4752 = vpop.f32.mrb[0].mxu0
    %v4753 = vadd.f32 0.0, %v4752
    %v4754 = vpop.f32.mrb[0].mxu0
    %4755 = vmatprep.mubr.bf16.mxu0 0
    %4756 = vmatmul.mubr.bf16.gmra.mrb[0].mxu0 %v290
    %v4757 = vpop.f32.mrb[0].mxu0
    %v4758 = vadd.f32 0.0, %v4757
    %v4759 = vpop.f32.mrb[0].mxu0
    %v4760 = vpop.f32.mrb[0].mxu0
    %v4761 = vadd.f32 0.0, %v4760
    %v4762 = vpop.f32.mrb[0].mxu0
    %4763 = vmatprep.mubr.bf16.mxu0 0
    %4764 = vmatmul.mubr.bf16.gmra.mrb[0].mxu0 %v293
    %v4765 = vpop.f32.mrb[0].mxu0
    %v4766 = vadd.f32 0.0, %v4765
    %v4767 = vpop.f32.mrb[0].mxu0
    %v4768 = vpop.f32.mrb[0].mxu0
    %v4769 = vadd.f32 0.0, %v4768
    %v4770 = vpop.f32.mrb[0].mxu0
    %4771 = vmatprep.mubr.bf16.mxu0 0
    %4772 = vmatmul.mubr.bf16.gmra.mrb[0].mxu0 %v296
    %v4773 = vpop.f32.mrb[0].mxu0
    %v4774 = vadd.f32 0.0, %v4773
    %v4775 = vpop.f32.mrb[0].mxu0
    %v4776 = vpop.f32.mrb[0].mxu0
    %v4777 = vadd.f32 0.0, %v4776
    %v4778 = vpop.f32.mrb[0].mxu0
    %4779 = vmatprep.mubr.bf16.mxu0 0
    %4780 = vmatmul.mubr.bf16.gmra.mrb[0].mxu0 %v299
    %v4781 = vpop.f32.mrb[0].mxu0
    %v4782 = vadd.f32 0.0, %v4781
    %v4783 = vpop.f32.mrb[0].mxu0
    %v4784 = vpop.f32.mrb[0].mxu0
    %v4785 = vadd.f32 0.0, %v4784
    %v4786 = vpop.f32.mrb[0].mxu0
    %4787 = vmatprep.mubr.bf16.mxu0 0
    %4788 = vmatmul.mubr.bf16.gmra.mrb[0].mxu0 %v302
    %v4789 = vpop.f32.mrb[0].mxu0
    %v4790 = vadd.f32 0.0, %v4789
    %v4791 = vpop.f32.mrb[0].mxu0
    %v4792 = vpop.f32.mrb[0].mxu0
    %v4793 = vadd.f32 0.0, %v4792
    %v4794 = vpop.f32.mrb[0].mxu0
    %4795 = vmatprep.mubr.bf16.mxu0 0
    %4796 = vmatmul.mubr.bf16.gmra.mrb[0].mxu0 %v305
    %v4797 = vpop.f32.mrb[0].mxu0
    %v4798 = vadd.f32 0.0, %v4797
    %v4799 = vpop.f32.mrb[0].mxu0
    %v4800 = vpop.f32.mrb[0].mxu0
    %v4801 = vadd.f32 0.0, %v4800
    %v4802 = vpop.f32.mrb[0].mxu0
    %4803 = vmatprep.mubr.bf16.mxu0 0
    %4804 = vmatmul.mubr.bf16.gmra.mrb[0].mxu0 %v308
    %v4805 = vpop.f32.mrb[0].mxu0
    %v4806 = vadd.f32 0.0, %v4805
    %v4807 = vpop.f32.mrb[0].mxu0
    %v4808 = vpop.f32.mrb[0].mxu0
    %v4809 = vadd.f32 0.0, %v4808
    %v4810 = vpop.f32.mrb[0].mxu0
    %4811 = vmatprep.mubr.bf16.mxu0 0
    %4812 = vmatmul.mubr.bf16.gmra.mrb[0].mxu0 %v311
    %v4813 = vpop.f32.mrb[0].mxu0
    %v4814 = vadd.f32 0.0, %v4813
    %v4815 = vpop.f32.mrb[0].mxu0
    %v4816 = vpop.f32.mrb[0].mxu0
    %v4817 = vadd.f32 0.0, %v4816
    %v4818 = vpop.f32.mrb[0].mxu0
    %4819 = vdwg.mxu0
    %v4820 = vmax.f32 %v4662, 0.0
    %v4821 = vmax.f32 %v4665, 0.0
    %v4822 = vmax.f32 %v4670, 0.0
    %v4823 = vmax.f32 %v4673, 0.0
    %v4824 = vmax.f32 %v4678, 0.0
    %v4825 = vmax.f32 %v4681, 0.0
    %v4826 = vmax.f32 %v4686, 0.0
    %v4827 = vmax.f32 %v4689, 0.0
    %v4828 = vmax.f32 %v4694, 0.0
    %v4829 = vmax.f32 %v4697, 0.0
    %v4830 = vmax.f32 %v4702, 0.0
    %v4831 = vmax.f32 %v4705, 0.0
    %v4832 = vmax.f32 %v4710, 0.0
    %v4833 = vmax.f32 %v4713, 0.0
    %v4834 = vmax.f32 %v4718, 0.0
    %v4835 = vmax.f32 %v4721, 0.0
    %v4836 = vmax.f32 %v4726, 0.0
    %v4837 = vmax.f32 %v4729, 0.0
    %v4838 = vmax.f32 %v4734, 0.0
    %v4839 = vmax.f32 %v4737, 0.0
    %v4840 = vmax.f32 %v4742, 0.0
    %v4841 = vmax.f32 %v4745, 0.0
    %v4842 = vmax.f32 %v4750, 0.0
    %v4843 = vmax.f32 %v4753, 0.0
    %v4844 = vmax.f32 %v4758, 0.0
    %v4845 = vmax.f32 %v4761, 0.0
    %v4846 = vmax.f32 %v4766, 0.0
    %v4847 = vmax.f32 %v4769, 0.0
    %v4848 = vmax.f32 %v4774, 0.0
    %v4849 = vmax.f32 %v4777, 0.0
    %v4850 = vmax.f32 %v4782, 0.0
    %v4851 = vmax.f32 %v4785, 0.0
    %v4852 = vmax.f32 %v4790, 0.0
    %v4853 = vmax.f32 %v4793, 0.0
    %v4854 = vmax.f32 %v4798, 0.0
    %v4855 = vmax.f32 %v4801, 0.0
    %v4856 = vmax.f32 %v4806, 0.0
    %v4857 = vmax.f32 %v4809, 0.0
    %v4858 = vmax.f32 %v4814, 0.0
    %v4859 = vmax.f32 %v4817, 0.0
    %v4860 = vpack.c.bf16 %v4821, %v4820
    %v4861 = vpack.c.bf16 %v4823, %v4822
    %v4862 = vpack.c.bf16 %v4825, %v4824
    %v4863 = vpack.c.bf16 %v4827, %v4826
    %v4864 = vpack.c.bf16 %v4829, %v4828
    %v4865 = vpack.c.bf16 %v4831, %v4830
    %v4866 = vpack.c.bf16 %v4833, %v4832
    %v4867 = vpack.c.bf16 %v4835, %v4834
    %v4868 = vpack.c.bf16 %v4837, %v4836
    %v4869 = vpack.c.bf16 %v4839, %v4838
    %v4870 = vpack.c.bf16 %v4841, %v4840
    %v4871 = vpack.c.bf16 %v4843, %v4842
    %v4872 = vpack.c.bf16 %v4845, %v4844
    %v4873 = vpack.c.bf16 %v4847, %v4846
    %v4874 = vpack.c.bf16 %v4849, %v4848
    %v4875 = vpack.c.bf16 %v4851, %v4850
    %v4876 = vpack.c.bf16 %v4853, %v4852
    %v4877 = vpack.c.bf16 %v4855, %v4854
    %v4878 = vpack.c.bf16 %v4857, %v4856
    %v4879 = vpack.c.bf16 %v4859, %v4858
    %4880 = vmatprep.subr.bf16.mxu0 0
    %4881 = vmatpush1.bf16.msra.mxu0 %v4860
    %4882 = vmatprep.subr.bf16.mxu0 0
    %4883 = vmatpush1.bf16.msra.mxu0 %v4861
    %4884 = vmatprep.subr.bf16.mxu0 0
    %4885 = vmatpush1.bf16.msra.mxu0 %v4862
    %4886 = vmatprep.subr.bf16.mxu0 0
    %4887 = vmatpush1.bf16.msra.mxu0 %v4863
    %4888 = vmatprep.subr.bf16.mxu0 0
    %4889 = vmatpush1.bf16.msra.mxu0 %v4864
    %4890 = vmatprep.subr.bf16.mxu0 0
    %4891 = vmatpush1.bf16.msra.mxu0 %v4865
    %4892 = vmatprep.subr.bf16.mxu0 0
    %4893 = vmatpush1.bf16.msra.mxu0 %v4866
    %4894 = vmatprep.subr.bf16.mxu0 0
    %4895 = vmatpush1.bf16.msra.mxu0 %v4867
    %4896 = vmatprep.subr.bf16.mxu0 0
    %4897 = vmatpush1.bf16.msra.mxu0 %v4868
    %4898 = vmatprep.subr.bf16.mxu0 0
    %4899 = vmatpush1.bf16.msra.mxu0 %v4869
    %4900 = vmatprep.subr.bf16.mxu0 0
    %4901 = vmatpush1.bf16.msra.mxu0 %v4870
    %4902 = vmatprep.subr.bf16.mxu0 0
    %4903 = vmatpush1.bf16.msra.mxu0 %v4871
    %4904 = vmatprep.subr.bf16.mxu0 0
    %4905 = vmatpush1.bf16.msra.mxu0 %v4872
    %4906 = vmatprep.subr.bf16.mxu0 0
    %4907 = vmatpush1.bf16.msra.mxu0 %v4873
    %4908 = vmatprep.subr.bf16.mxu0 0
    %4909 = vmatpush1.bf16.msra.mxu0 %v4874
    %4910 = vmatprep.subr.bf16.mxu0 0
    %4911 = vmatpush1.bf16.msra.mxu0 %v4875
    %4912 = vmatprep.mubr.bf16.mxu0 %v727
    %4913 = vmatmul.mubr.bf16.gmra.mrb[0].mxu0 %v726
    %v4914 = vpop.f32.mrb[0].mxu0
    %v4915 = vadd.f32 0.0, %v4914
    %v4916 = vpop.f32.mrb[0].mxu0
    %v4917 = vpop.f32.mrb[0].mxu0
    %v4918 = vadd.f32 0.0, %v4917
    %v4919 = vpop.f32.mrb[0].mxu0
    %4920 = vmatprep.mubr.bf16.mxu0 %v730
    %4921 = vmatmul.mubr.bf16.gmra.mrb[0].mxu0 %v729
    %v4922 = vpop.f32.mrb[0].mxu0
    %v4923 = vadd.f32 0.0, %v4922
    %v4924 = vpop.f32.mrb[0].mxu0
    %v4925 = vpop.f32.mrb[0].mxu0
    %v4926 = vadd.f32 0.0, %v4925
    %v4927 = vpop.f32.mrb[0].mxu0
    %4928 = vmatprep.mubr.bf16.mxu0 %v733
    %4929 = vmatmul.mubr.bf16.gmra.mrb[0].mxu0 %v732
    %v4930 = vpop.f32.mrb[0].mxu0
    %v4931 = vadd.f32 0.0, %v4930
    %v4932 = vpop.f32.mrb[0].mxu0
    %v4933 = vpop.f32.mrb[0].mxu0
    %v4934 = vadd.f32 0.0, %v4933
    %v4935 = vpop.f32.mrb[0].mxu0
    %4936 = vmatprep.mubr.bf16.mxu0 %v736
    %4937 = vmatmul.mubr.bf16.gmra.mrb[0].mxu0 %v735
    %v4938 = vpop.f32.mrb[0].mxu0
    %v4939 = vadd.f32 0.0, %v4938
    %v4940 = vpop.f32.mrb[0].mxu0
    %v4941 = vpop.f32.mrb[0].mxu0
    %v4942 = vadd.f32 0.0, %v4941
    %v4943 = vpop.f32.mrb[0].mxu0
    %4944 = vmatprep.mubr.bf16.mxu0 %v739
    %4945 = vmatmul.mubr.bf16.gmra.mrb[0].mxu0 %v738
    %v4946 = vpop.f32.mrb[0].mxu0
    %v4947 = vadd.f32 0.0, %v4946
    %v4948 = vpop.f32.mrb[0].mxu0
    %v4949 = vpop.f32.mrb[0].mxu0
    %v4950 = vadd.f32 0.0, %v4949
    %v4951 = vpop.f32.mrb[0].mxu0
    %4952 = vmatprep.mubr.bf16.mxu0 %v742
    %4953 = vmatmul.mubr.bf16.gmra.mrb[0].mxu0 %v741
    %v4954 = vpop.f32.mrb[0].mxu0
    %v4955 = vadd.f32 0.0, %v4954
    %v4956 = vpop.f32.mrb[0].mxu0
    %v4957 = vpop.f32.mrb[0].mxu0
    %v4958 = vadd.f32 0.0, %v4957
    %v4959 = vpop.f32.mrb[0].mxu0
    %4960 = vmatprep.mubr.bf16.mxu0 %v745
    %4961 = vmatmul.mubr.bf16.gmra.mrb[0].mxu0 %v744
    %v4962 = vpop.f32.mrb[0].mxu0
    %v4963 = vadd.f32 0.0, %v4962
    %v4964 = vpop.f32.mrb[0].mxu0
    %v4965 = vpop.f32.mrb[0].mxu0
    %v4966 = vadd.f32 0.0, %v4965
    %v4967 = vpop.f32.mrb[0].mxu0
    %4968 = vmatprep.mubr.bf16.mxu0 %v748
    %4969 = vmatmul.mubr.bf16.gmra.mrb[0].mxu0 %v747
    %v4970 = vpop.f32.mrb[0].mxu0
    %v4971 = vadd.f32 0.0, %v4970
    %v4972 = vpop.f32.mrb[0].mxu0
    %v4973 = vpop.f32.mrb[0].mxu0
    %v4974 = vadd.f32 0.0, %v4973
    %v4975 = vpop.f32.mrb[0].mxu0
    %4976 = vmatprep.mubr.bf16.mxu0 %v751
    %4977 = vmatmul.mubr.bf16.gmra.mrb[0].mxu0 %v750
    %v4978 = vpop.f32.mrb[0].mxu0
    %v4979 = vadd.f32 0.0, %v4978
    %v4980 = vpop.f32.mrb[0].mxu0
    %v4981 = vpop.f32.mrb[0].mxu0
    %v4982 = vadd.f32 0.0, %v4981
    %v4983 = vpop.f32.mrb[0].mxu0
    %4984 = vmatprep.mubr.bf16.mxu0 %v754
    %4985 = vmatmul.mubr.bf16.gmra.mrb[0].mxu0 %v753
    %v4986 = vpop.f32.mrb[0].mxu0
    %v4987 = vadd.f32 0.0, %v4986
    %v4988 = vpop.f32.mrb[0].mxu0
    %v4989 = vpop.f32.mrb[0].mxu0
    %v4990 = vadd.f32 0.0, %v4989
    %v4991 = vpop.f32.mrb[0].mxu0
    %4992 = vmatprep.mubr.bf16.mxu0 %v757
    %4993 = vmatmul.mubr.bf16.gmra.mrb[0].mxu0 %v756
    %v4994 = vpop.f32.mrb[0].mxu0
    %v4995 = vadd.f32 0.0, %v4994
    %v4996 = vpop.f32.mrb[0].mxu0
    %v4997 = vpop.f32.mrb[0].mxu0
    %v4998 = vadd.f32 0.0, %v4997
    %v4999 = vpop.f32.mrb[0].mxu0
    %5000 = vmatprep.mubr.bf16.mxu0 %v760
    %5001 = vmatmul.mubr.bf16.gmra.mrb[0].mxu0 %v759
    %v5002 = vpop.f32.mrb[0].mxu0
    %v5003 = vadd.f32 0.0, %v5002
    %v5004 = vpop.f32.mrb[0].mxu0
    %v5005 = vpop.f32.mrb[0].mxu0
    %v5006 = vadd.f32 0.0, %v5005
    %v5007 = vpop.f32.mrb[0].mxu0
    %5008 = vmatprep.mubr.bf16.mxu0 %v763
    %5009 = vmatmul.mubr.bf16.gmra.mrb[0].mxu0 %v762
    %v5010 = vpop.f32.mrb[0].mxu0
    %v5011 = vadd.f32 0.0, %v5010
    %v5012 = vpop.f32.mrb[0].mxu0
    %v5013 = vpop.f32.mrb[0].mxu0
    %v5014 = vadd.f32 0.0, %v5013
    %v5015 = vpop.f32.mrb[0].mxu0
    %5016 = vmatprep.mubr.bf16.mxu0 %v766
    %5017 = vmatmul.mubr.bf16.gmra.mrb[0].mxu0 %v765
    %v5018 = vpop.f32.mrb[0].mxu0
    %v5019 = vadd.f32 0.0, %v5018
    %v5020 = vpop.f32.mrb[0].mxu0
    %v5021 = vpop.f32.mrb[0].mxu0
    %v5022 = vadd.f32 0.0, %v5021
    %v5023 = vpop.f32.mrb[0].mxu0
    %5024 = vmatprep.mubr.bf16.mxu0 %v769
    %5025 = vmatmul.mubr.bf16.gmra.mrb[0].mxu0 %v768
    %v5026 = vpop.f32.mrb[0].mxu0
    %v5027 = vadd.f32 0.0, %v5026
    %v5028 = vpop.f32.mrb[0].mxu0
    %v5029 = vpop.f32.mrb[0].mxu0
    %v5030 = vadd.f32 0.0, %v5029
    %v5031 = vpop.f32.mrb[0].mxu0
    %5032 = vmatprep.mubr.bf16.mxu0 %v772
    %5033 = vmatmul.mubr.bf16.gmra.mrb[0].mxu0 %v771
    %v5034 = vpop.f32.mrb[0].mxu0
    %v5035 = vadd.f32 0.0, %v5034
    %v5036 = vpop.f32.mrb[0].mxu0
    %v5037 = vpop.f32.mrb[0].mxu0
    %v5038 = vadd.f32 0.0, %v5037
    %v5039 = vpop.f32.mrb[0].mxu0
    %5040 = vdwg.mxu0
    %5041 = vmatprep.subr.bf16.mxu0 0
    %5042 = vmatpush1.bf16.msra.mxu0 %v4876
    %5043 = vmatprep.subr.bf16.mxu0 0
    %5044 = vmatpush1.bf16.msra.mxu0 %v4877
    %5045 = vmatprep.subr.bf16.mxu0 0
    %5046 = vmatpush1.bf16.msra.mxu0 %v4878
    %5047 = vmatprep.subr.bf16.mxu0 0
    %5048 = vmatpush1.bf16.msra.mxu0 %v4879
    %5049 = vmatprep.subr.bf16.mxu0 0
    %5050 = vmatpush1.bf16.msra.mxu0 0
    %5051 = vmatprep.subr.bf16.mxu0 0
    %5052 = vmatpush1.bf16.msra.mxu0 0
    %5053 = vmatprep.subr.bf16.mxu0 0
    %5054 = vmatpush1.bf16.msra.mxu0 0
    %5055 = vmatprep.subr.bf16.mxu0 0
    %5056 = vmatpush1.bf16.msra.mxu0 0
    %5057 = vmatprep.subr.bf16.mxu0 0
    %5058 = vmatpush1.bf16.msra.mxu0 0
    %5059 = vmatprep.subr.bf16.mxu0 0
    %5060 = vmatpush1.bf16.msra.mxu0 0
    %5061 = vmatprep.subr.bf16.mxu0 0
    %5062 = vmatpush1.bf16.msra.mxu0 0
    %5063 = vmatprep.subr.bf16.mxu0 0
    %5064 = vmatpush1.bf16.msra.mxu0 0
    %5065 = vmatprep.subr.bf16.mxu0 0
    %5066 = vmatpush1.bf16.msra.mxu0 0
    %5067 = vmatprep.subr.bf16.mxu0 0
    %5068 = vmatpush1.bf16.msra.mxu0 0
    %5069 = vmatprep.subr.bf16.mxu0 0
    %5070 = vmatpush1.bf16.msra.mxu0 0
    %5071 = vmatprep.subr.bf16.mxu0 0
    %5072 = vmatpush1.bf16.msra.mxu0 0
    %5073 = vmatprep.mubr.bf16.mxu0 0
    %5074 = vmatmul.mubr.bf16.gmra.mrb[0].mxu0 %v807
    %v5075 = vpop.f32.mrb[0].mxu0
    %v5076 = vadd.f32 %v4915, %v5075
    %v5077 = vpop.f32.mrb[0].mxu0
    %v5078 = vpop.f32.mrb[0].mxu0
    %v5079 = vadd.f32 %v4918, %v5078
    %v5080 = vpop.f32.mrb[0].mxu0
    %5081 = vmatprep.mubr.bf16.mxu0 0
    %5082 = vmatmul.mubr.bf16.gmra.mrb[0].mxu0 %v810
    %v5083 = vpop.f32.mrb[0].mxu0
    %v5084 = vadd.f32 %v4923, %v5083
    %v5085 = vpop.f32.mrb[0].mxu0
    %v5086 = vpop.f32.mrb[0].mxu0
    %v5087 = vadd.f32 %v4926, %v5086
    %v5088 = vpop.f32.mrb[0].mxu0
    %5089 = vmatprep.mubr.bf16.mxu0 0
    %5090 = vmatmul.mubr.bf16.gmra.mrb[0].mxu0 %v813
    %v5091 = vpop.f32.mrb[0].mxu0
    %v5092 = vadd.f32 %v4931, %v5091
    %v5093 = vpop.f32.mrb[0].mxu0
    %v5094 = vpop.f32.mrb[0].mxu0
    %v5095 = vadd.f32 %v4934, %v5094
    %v5096 = vpop.f32.mrb[0].mxu0
    %5097 = vmatprep.mubr.bf16.mxu0 0
    %5098 = vmatmul.mubr.bf16.gmra.mrb[0].mxu0 %v816
    %v5099 = vpop.f32.mrb[0].mxu0
    %v5100 = vadd.f32 %v4939, %v5099
    %v5101 = vpop.f32.mrb[0].mxu0
    %v5102 = vpop.f32.mrb[0].mxu0
    %v5103 = vadd.f32 %v4942, %v5102
    %v5104 = vpop.f32.mrb[0].mxu0
    %5105 = vmatprep.mubr.bf16.mxu0 0
    %5106 = vmatmul.mubr.bf16.gmra.mrb[0].mxu0 %v819
    %v5107 = vpop.f32.mrb[0].mxu0
    %v5108 = vadd.f32 %v4947, %v5107
    %v5109 = vpop.f32.mrb[0].mxu0
    %v5110 = vpop.f32.mrb[0].mxu0
    %v5111 = vadd.f32 %v4950, %v5110
    %v5112 = vpop.f32.mrb[0].mxu0
    %5113 = vmatprep.mubr.bf16.mxu0 0
    %5114 = vmatmul.mubr.bf16.gmra.mrb[0].mxu0 %v822
    %v5115 = vpop.f32.mrb[0].mxu0
    %v5116 = vadd.f32 %v4955, %v5115
    %v5117 = vpop.f32.mrb[0].mxu0
    %v5118 = vpop.f32.mrb[0].mxu0
    %v5119 = vadd.f32 %v4958, %v5118
    %v5120 = vpop.f32.mrb[0].mxu0
    %5121 = vmatprep.mubr.bf16.mxu0 0
    %5122 = vmatmul.mubr.bf16.gmra.mrb[0].mxu0 %v825
    %v5123 = vpop.f32.mrb[0].mxu0
    %v5124 = vadd.f32 %v4963, %v5123
    %v5125 = vpop.f32.mrb[0].mxu0
    %v5126 = vpop.f32.mrb[0].mxu0
    %v5127 = vadd.f32 %v4966, %v5126
    %v5128 = vpop.f32.mrb[0].mxu0
    %5129 = vmatprep.mubr.bf16.mxu0 0
    %5130 = vmatmul.mubr.bf16.gmra.mrb[0].mxu0 %v828
    %v5131 = vpop.f32.mrb[0].mxu0
    %v5132 = vadd.f32 %v4971, %v5131
    %v5133 = vpop.f32.mrb[0].mxu0
    %v5134 = vpop.f32.mrb[0].mxu0
    %v5135 = vadd.f32 %v4974, %v5134
    %v5136 = vpop.f32.mrb[0].mxu0
    %5137 = vmatprep.mubr.bf16.mxu0 0
    %5138 = vmatmul.mubr.bf16.gmra.mrb[0].mxu0 %v831
    %v5139 = vpop.f32.mrb[0].mxu0
    %v5140 = vadd.f32 %v4979, %v5139
    %v5141 = vpop.f32.mrb[0].mxu0
    %v5142 = vpop.f32.mrb[0].mxu0
    %v5143 = vadd.f32 %v4982, %v5142
    %v5144 = vpop.f32.mrb[0].mxu0
    %5145 = vmatprep.mubr.bf16.mxu0 0
    %5146 = vmatmul.mubr.bf16.gmra.mrb[0].mxu0 %v834
    %v5147 = vpop.f32.mrb[0].mxu0
    %v5148 = vadd.f32 %v4987, %v5147
    %v5149 = vpop.f32.mrb[0].mxu0
    %v5150 = vpop.f32.mrb[0].mxu0
    %v5151 = vadd.f32 %v4990, %v5150
    %v5152 = vpop.f32.mrb[0].mxu0
    %5153 = vmatprep.mubr.bf16.mxu0 0
    %5154 = vmatmul.mubr.bf16.gmra.mrb[0].mxu0 %v837
    %v5155 = vpop.f32.mrb[0].mxu0
    %v5156 = vadd.f32 %v4995, %v5155
    %v5157 = vpop.f32.mrb[0].mxu0
    %v5158 = vpop.f32.mrb[0].mxu0
    %v5159 = vadd.f32 %v4998, %v5158
    %v5160 = vpop.f32.mrb[0].mxu0
    %5161 = vmatprep.mubr.bf16.mxu0 0
    %5162 = vmatmul.mubr.bf16.gmra.mrb[0].mxu0 %v840
    %v5163 = vpop.f32.mrb[0].mxu0
    %v5164 = vadd.f32 %v5003, %v5163
    %v5165 = vpop.f32.mrb[0].mxu0
    %v5166 = vpop.f32.mrb[0].mxu0
    %v5167 = vadd.f32 %v5006, %v5166
    %v5168 = vpop.f32.mrb[0].mxu0
    %5169 = vmatprep.mubr.bf16.mxu0 0
    %5170 = vmatmul.mubr.bf16.gmra.mrb[0].mxu0 %v843
    %v5171 = vpop.f32.mrb[0].mxu0
    %v5172 = vadd.f32 %v5011, %v5171
    %v5173 = vpop.f32.mrb[0].mxu0
    %v5174 = vpop.f32.mrb[0].mxu0
    %v5175 = vadd.f32 %v5014, %v5174
    %v5176 = vpop.f32.mrb[0].mxu0
    %5177 = vmatprep.mubr.bf16.mxu0 0
    %5178 = vmatmul.mubr.bf16.gmra.mrb[0].mxu0 %v846
    %v5179 = vpop.f32.mrb[0].mxu0
    %v5180 = vadd.f32 %v5019, %v5179
    %v5181 = vpop.f32.mrb[0].mxu0
    %v5182 = vpop.f32.mrb[0].mxu0
    %v5183 = vadd.f32 %v5022, %v5182
    %v5184 = vpop.f32.mrb[0].mxu0
    %5185 = vmatprep.mubr.bf16.mxu0 0
    %5186 = vmatmul.mubr.bf16.gmra.mrb[0].mxu0 %v849
    %v5187 = vpop.f32.mrb[0].mxu0
    %v5188 = vadd.f32 %v5027, %v5187
    %v5189 = vpop.f32.mrb[0].mxu0
    %v5190 = vpop.f32.mrb[0].mxu0
    %v5191 = vadd.f32 %v5030, %v5190
    %v5192 = vpop.f32.mrb[0].mxu0
    %5193 = vmatprep.mubr.bf16.mxu0 0
    %5194 = vmatmul.mubr.bf16.gmra.mrb[0].mxu0 %v852
    %v5195 = vpop.f32.mrb[0].mxu0
    %v5196 = vadd.f32 %v5035, %v5195
    %v5197 = vpop.f32.mrb[0].mxu0
    %v5198 = vpop.f32.mrb[0].mxu0
    %v5199 = vadd.f32 %v5038, %v5198
    %v5200 = vpop.f32.mrb[0].mxu0
    %5201 = vdwg.mxu0
    %v5202 = vmax.f32 %v5076, 0.0
    %v5203 = vmax.f32 %v5079, 0.0
    %v5204 = vmax.f32 %v5084, 0.0
    %v5205 = vmax.f32 %v5087, 0.0
    %v5206 = vmax.f32 %v5092, 0.0
    %v5207 = vmax.f32 %v5095, 0.0
    %v5208 = vmax.f32 %v5100, 0.0
    %v5209 = vmax.f32 %v5103, 0.0
    %v5210 = vmax.f32 %v5108, 0.0
    %v5211 = vmax.f32 %v5111, 0.0
    %v5212 = vmax.f32 %v5116, 0.0
    %v5213 = vmax.f32 %v5119, 0.0
    %v5214 = vmax.f32 %v5124, 0.0
    %v5215 = vmax.f32 %v5127, 0.0
    %v5216 = vmax.f32 %v5132, 0.0
    %v5217 = vmax.f32 %v5135, 0.0
    %v5218 = vmax.f32 %v5140, 0.0
    %v5219 = vmax.f32 %v5143, 0.0
    %v5220 = vmax.f32 %v5148, 0.0
    %v5221 = vmax.f32 %v5151, 0.0
    %v5222 = vmax.f32 %v5156, 0.0
    %v5223 = vmax.f32 %v5159, 0.0
    %v5224 = vmax.f32 %v5164, 0.0
    %v5225 = vmax.f32 %v5167, 0.0
    %v5226 = vmax.f32 %v5172, 0.0
    %v5227 = vmax.f32 %v5175, 0.0
    %v5228 = vmax.f32 %v5180, 0.0
    %v5229 = vmax.f32 %v5183, 0.0
    %v5230 = vmax.f32 %v5188, 0.0
    %v5231 = vmax.f32 %v5191, 0.0
    %v5232 = vmax.f32 %v5196, 0.0
    %v5233 = vmax.f32 %v5199, 0.0
    %v5234 = vmax.f32 %v4591, %v5202
    %v5235 = vmax.f32 %v4592, %v5203
    %v5236 = vmax.f32 %v4593, %v5204
    %v5237 = vmax.f32 %v4594, %v5205
    %v5238 = vmax.f32 %v5234, %v5206
    %v5239 = vmax.f32 %v5235, %v5207
    %v5240 = vmax.f32 %v5236, %v5208
    %v5241 = vmax.f32 %v5237, %v5209
    %v5242 = vmax.f32 %v5238, %v5210
    %v5243 = vmax.f32 %v5239, %v5211
    %v5244 = vmax.f32 %v5240, %v5212
    %v5245 = vmax.f32 %v5241, %v5213
    %v5246 = vmax.f32 %v5242, %v5214
    %v5247 = vmax.f32 %v5243, %v5215
    %v5248 = vmax.f32 %v5244, %v5216
    %v5249 = vmax.f32 %v5245, %v5217
    %v5250 = vmax.f32 %v5246, %v5218
    %v5251 = vmax.f32 %v5247, %v5219
    %v5252 = vmax.f32 %v5248, %v5220
    %v5253 = vmax.f32 %v5249, %v5221
    %v5254 = vmax.f32 %v5250, %v5222
    %v5255 = vmax.f32 %v5251, %v5223
    %v5256 = vmax.f32 %v5252, %v5224
    %v5257 = vmax.f32 %v5253, %v5225
    %v5258 = vmax.f32 %v5254, %v5226
    %v5259 = vmax.f32 %v5255, %v5227
    %v5260 = vmax.f32 %v5256, %v5228
    %v5261 = vmax.f32 %v5257, %v5229
    %v5262 = vmax.f32 %v5258, %v5230
    %v5263 = vmax.f32 %v5259, %v5231
    %v5264 = vmax.f32 %v5260, %v5232
    %v5265 = vmax.f32 %v5261, %v5233
    %v5266 = vld [vmem:[%s0 + $0xe0] sm:$0xf]
    %v5267 = vld [vmem:[%s0 + $0xe4] sm:$0xf]
    %v5268 = vld [vmem:[%s0 + $0xe8] sm:$0xf]
    %v5269 = vld [vmem:[%s0 + $0xec] sm:$0xf]
    %v5270 = vld [vmem:[%s0 + $0xf0] sm:$0xf]
    %v5271 = vld [vmem:[%s0 + $0xf4] sm:$0xf]
    %v5272 = vld [vmem:[%s0 + $0xf8] sm:$0xf]
    %v5273 = vld [vmem:[%s0 + $0xfc] sm:$0xf]
    %v5282 = vunpack.c.l.b16 %v5266
    %v5283 = vunpack.c.l.b16 %v5267
    %v5284 = vunpack.c.l.b16 %v5268
    %v5285 = vunpack.c.l.b16 %v5269
    %v5286 = vunpack.c.l.b16 %v5270
    %v5287 = vunpack.c.l.b16 %v5271
    %v5288 = vunpack.c.l.b16 %v5272
    %v5289 = vunpack.c.l.b16 %v5273
    %v5290 = vpack.c.b16 %v5283, %v5282
    %v5291 = vpack.c.b16 %v5285, %v5284
    %v5292 = vpack.c.b16 %v5287, %v5286
    %v5293 = vpack.c.b16 %v5289, %v5288
    %5298 = vmatprep.subr.bf16.mxu0 0
    %5299 = vmatpush1.bf16.msra.mxu0 %v5290
    %5300 = vmatprep.subr.bf16.mxu0 0
    %5301 = vmatpush1.bf16.msra.mxu0 %v5291
    %5302 = vmatprep.subr.bf16.mxu0 0
    %5303 = vmatpush1.bf16.msra.mxu0 %v5292
    %5304 = vmatprep.subr.bf16.mxu0 0
    %5305 = vmatpush1.bf16.msra.mxu0 %v5293
    %5306 = vmatprep.subr.bf16.mxu0 0
    %5307 = vmatpush1.bf16.msra.mxu0 0
    %5308 = vmatprep.subr.bf16.mxu0 0
    %5309 = vmatpush1.bf16.msra.mxu0 0
    %5310 = vmatprep.subr.bf16.mxu0 0
    %5311 = vmatpush1.bf16.msra.mxu0 0
    %5312 = vmatprep.subr.bf16.mxu0 0
    %5313 = vmatpush1.bf16.msra.mxu0 0
    %5314 = vmatprep.subr.bf16.mxu0 0
    %5315 = vmatpush1.bf16.msra.mxu0 0
    %5316 = vmatprep.subr.bf16.mxu0 0
    %5317 = vmatpush1.bf16.msra.mxu0 0
    %5318 = vmatprep.subr.bf16.mxu0 0
    %5319 = vmatpush1.bf16.msra.mxu0 0
    %5320 = vmatprep.subr.bf16.mxu0 0
    %5321 = vmatpush1.bf16.msra.mxu0 0
    %5322 = vmatprep.subr.bf16.mxu0 0
    %5323 = vmatpush1.bf16.msra.mxu0 0
    %5324 = vmatprep.subr.bf16.mxu0 0
    %5325 = vmatpush1.bf16.msra.mxu0 0
    %5326 = vmatprep.subr.bf16.mxu0 0
    %5327 = vmatpush1.bf16.msra.mxu0 0
    %5328 = vmatprep.subr.bf16.mxu0 0
    %5329 = vmatpush1.bf16.msra.mxu0 0
    %5330 = vmatprep.mubr.bf16.mxu0 0
    %5331 = vmatmul.mubr.bf16.gmra.mrb[0].mxu0 %v254
    %v5332 = vpop.f32.mrb[0].mxu0
    %v5333 = vadd.f32 0.0, %v5332
    %v5334 = vpop.f32.mrb[0].mxu0
    %v5335 = vpop.f32.mrb[0].mxu0
    %v5336 = vadd.f32 0.0, %v5335
    %v5337 = vpop.f32.mrb[0].mxu0
    %5338 = vmatprep.mubr.bf16.mxu0 0
    %5339 = vmatmul.mubr.bf16.gmra.mrb[0].mxu0 %v257
    %v5340 = vpop.f32.mrb[0].mxu0
    %v5341 = vadd.f32 0.0, %v5340
    %v5342 = vpop.f32.mrb[0].mxu0
    %v5343 = vpop.f32.mrb[0].mxu0
    %v5344 = vadd.f32 0.0, %v5343
    %v5345 = vpop.f32.mrb[0].mxu0
    %5346 = vmatprep.mubr.bf16.mxu0 0
    %5347 = vmatmul.mubr.bf16.gmra.mrb[0].mxu0 %v260
    %v5348 = vpop.f32.mrb[0].mxu0
    %v5349 = vadd.f32 0.0, %v5348
    %v5350 = vpop.f32.mrb[0].mxu0
    %v5351 = vpop.f32.mrb[0].mxu0
    %v5352 = vadd.f32 0.0, %v5351
    %v5353 = vpop.f32.mrb[0].mxu0
    %5354 = vmatprep.mubr.bf16.mxu0 0
    %5355 = vmatmul.mubr.bf16.gmra.mrb[0].mxu0 %v263
    %v5356 = vpop.f32.mrb[0].mxu0
    %v5357 = vadd.f32 0.0, %v5356
    %v5358 = vpop.f32.mrb[0].mxu0
    %v5359 = vpop.f32.mrb[0].mxu0
    %v5360 = vadd.f32 0.0, %v5359
    %v5361 = vpop.f32.mrb[0].mxu0
    %5362 = vmatprep.mubr.bf16.mxu0 0
    %5363 = vmatmul.mubr.bf16.gmra.mrb[0].mxu0 %v266
    %v5364 = vpop.f32.mrb[0].mxu0
    %v5365 = vadd.f32 0.0, %v5364
    %v5366 = vpop.f32.mrb[0].mxu0
    %v5367 = vpop.f32.mrb[0].mxu0
    %v5368 = vadd.f32 0.0, %v5367
    %v5369 = vpop.f32.mrb[0].mxu0
    %5370 = vmatprep.mubr.bf16.mxu0 0
    %5371 = vmatmul.mubr.bf16.gmra.mrb[0].mxu0 %v269
    %v5372 = vpop.f32.mrb[0].mxu0
    %v5373 = vadd.f32 0.0, %v5372
    %v5374 = vpop.f32.mrb[0].mxu0
    %v5375 = vpop.f32.mrb[0].mxu0
    %v5376 = vadd.f32 0.0, %v5375
    %v5377 = vpop.f32.mrb[0].mxu0
    %5378 = vmatprep.mubr.bf16.mxu0 0
    %5379 = vmatmul.mubr.bf16.gmra.mrb[0].mxu0 %v272
    %v5380 = vpop.f32.mrb[0].mxu0
    %v5381 = vadd.f32 0.0, %v5380
    %v5382 = vpop.f32.mrb[0].mxu0
    %v5383 = vpop.f32.mrb[0].mxu0
    %v5384 = vadd.f32 0.0, %v5383
    %v5385 = vpop.f32.mrb[0].mxu0
    %5386 = vmatprep.mubr.bf16.mxu0 0
    %5387 = vmatmul.mubr.bf16.gmra.mrb[0].mxu0 %v275
    %v5388 = vpop.f32.mrb[0].mxu0
    %v5389 = vadd.f32 0.0, %v5388
    %v5390 = vpop.f32.mrb[0].mxu0
    %v5391 = vpop.f32.mrb[0].mxu0
    %v5392 = vadd.f32 0.0, %v5391
    %v5393 = vpop.f32.mrb[0].mxu0
    %5394 = vmatprep.mubr.bf16.mxu0 0
    %5395 = vmatmul.mubr.bf16.gmra.mrb[0].mxu0 %v278
    %v5396 = vpop.f32.mrb[0].mxu0
    %v5397 = vadd.f32 0.0, %v5396
    %v5398 = vpop.f32.mrb[0].mxu0
    %v5399 = vpop.f32.mrb[0].mxu0
    %v5400 = vadd.f32 0.0, %v5399
    %v5401 = vpop.f32.mrb[0].mxu0
    %5402 = vmatprep.mubr.bf16.mxu0 0
    %5403 = vmatmul.mubr.bf16.gmra.mrb[0].mxu0 %v281
    %v5404 = vpop.f32.mrb[0].mxu0
    %v5405 = vadd.f32 0.0, %v5404
    %v5406 = vpop.f32.mrb[0].mxu0
    %v5407 = vpop.f32.mrb[0].mxu0
    %v5408 = vadd.f32 0.0, %v5407
    %v5409 = vpop.f32.mrb[0].mxu0
    %5410 = vmatprep.mubr.bf16.mxu0 0
    %5411 = vmatmul.mubr.bf16.gmra.mrb[0].mxu0 %v284
    %v5412 = vpop.f32.mrb[0].mxu0
    %v5413 = vadd.f32 0.0, %v5412
    %v5414 = vpop.f32.mrb[0].mxu0
    %v5415 = vpop.f32.mrb[0].mxu0
    %v5416 = vadd.f32 0.0, %v5415
    %v5417 = vpop.f32.mrb[0].mxu0
    %5418 = vmatprep.mubr.bf16.mxu0 0
    %5419 = vmatmul.mubr.bf16.gmra.mrb[0].mxu0 %v287
    %v5420 = vpop.f32.mrb[0].mxu0
    %v5421 = vadd.f32 0.0, %v5420
    %v5422 = vpop.f32.mrb[0].mxu0
    %v5423 = vpop.f32.mrb[0].mxu0
    %v5424 = vadd.f32 0.0, %v5423
    %v5425 = vpop.f32.mrb[0].mxu0
    %5426 = vmatprep.mubr.bf16.mxu0 0
    %5427 = vmatmul.mubr.bf16.gmra.mrb[0].mxu0 %v290
    %v5428 = vpop.f32.mrb[0].mxu0
    %v5429 = vadd.f32 0.0, %v5428
    %v5430 = vpop.f32.mrb[0].mxu0
    %v5431 = vpop.f32.mrb[0].mxu0
    %v5432 = vadd.f32 0.0, %v5431
    %v5433 = vpop.f32.mrb[0].mxu0
    %5434 = vmatprep.mubr.bf16.mxu0 0
    %5435 = vmatmul.mubr.bf16.gmra.mrb[0].mxu0 %v293
    %v5436 = vpop.f32.mrb[0].mxu0
    %v5437 = vadd.f32 0.0, %v5436
    %v5438 = vpop.f32.mrb[0].mxu0
    %v5439 = vpop.f32.mrb[0].mxu0
    %v5440 = vadd.f32 0.0, %v5439
    %v5441 = vpop.f32.mrb[0].mxu0
    %5442 = vmatprep.mubr.bf16.mxu0 0
    %5443 = vmatmul.mubr.bf16.gmra.mrb[0].mxu0 %v296
    %v5444 = vpop.f32.mrb[0].mxu0
    %v5445 = vadd.f32 0.0, %v5444
    %v5446 = vpop.f32.mrb[0].mxu0
    %v5447 = vpop.f32.mrb[0].mxu0
    %v5448 = vadd.f32 0.0, %v5447
    %v5449 = vpop.f32.mrb[0].mxu0
    %5450 = vmatprep.mubr.bf16.mxu0 0
    %5451 = vmatmul.mubr.bf16.gmra.mrb[0].mxu0 %v299
    %v5452 = vpop.f32.mrb[0].mxu0
    %v5453 = vadd.f32 0.0, %v5452
    %v5454 = vpop.f32.mrb[0].mxu0
    %v5455 = vpop.f32.mrb[0].mxu0
    %v5456 = vadd.f32 0.0, %v5455
    %v5457 = vpop.f32.mrb[0].mxu0
    %5458 = vmatprep.mubr.bf16.mxu0 0
    %5459 = vmatmul.mubr.bf16.gmra.mrb[0].mxu0 %v302
    %v5460 = vpop.f32.mrb[0].mxu0
    %v5461 = vadd.f32 0.0, %v5460
    %v5462 = vpop.f32.mrb[0].mxu0
    %v5463 = vpop.f32.mrb[0].mxu0
    %v5464 = vadd.f32 0.0, %v5463
    %v5465 = vpop.f32.mrb[0].mxu0
    %5466 = vmatprep.mubr.bf16.mxu0 0
    %5467 = vmatmul.mubr.bf16.gmra.mrb[0].mxu0 %v305
    %v5468 = vpop.f32.mrb[0].mxu0
    %v5469 = vadd.f32 0.0, %v5468
    %v5470 = vpop.f32.mrb[0].mxu0
    %v5471 = vpop.f32.mrb[0].mxu0
    %v5472 = vadd.f32 0.0, %v5471
    %v5473 = vpop.f32.mrb[0].mxu0
    %5474 = vmatprep.mubr.bf16.mxu0 0
    %5475 = vmatmul.mubr.bf16.gmra.mrb[0].mxu0 %v308
    %v5476 = vpop.f32.mrb[0].mxu0
    %v5477 = vadd.f32 0.0, %v5476
    %v5478 = vpop.f32.mrb[0].mxu0
    %v5479 = vpop.f32.mrb[0].mxu0
    %v5480 = vadd.f32 0.0, %v5479
    %v5481 = vpop.f32.mrb[0].mxu0
    %5482 = vmatprep.mubr.bf16.mxu0 0
    %5483 = vmatmul.mubr.bf16.gmra.mrb[0].mxu0 %v311
    %v5484 = vpop.f32.mrb[0].mxu0
    %v5485 = vadd.f32 0.0, %v5484
    %v5486 = vpop.f32.mrb[0].mxu0
    %v5487 = vpop.f32.mrb[0].mxu0
    %v5488 = vadd.f32 0.0, %v5487
    %v5489 = vpop.f32.mrb[0].mxu0
    %5490 = vdwg.mxu0
    %v5491 = vmax.f32 %v5333, 0.0
    %v5492 = vmax.f32 %v5336, 0.0
    %v5493 = vmax.f32 %v5341, 0.0
    %v5494 = vmax.f32 %v5344, 0.0
    %v5495 = vmax.f32 %v5349, 0.0
    %v5496 = vmax.f32 %v5352, 0.0
    %v5497 = vmax.f32 %v5357, 0.0
    %v5498 = vmax.f32 %v5360, 0.0
    %v5499 = vmax.f32 %v5365, 0.0
    %v5500 = vmax.f32 %v5368, 0.0
    %v5501 = vmax.f32 %v5373, 0.0
    %v5502 = vmax.f32 %v5376, 0.0
    %v5503 = vmax.f32 %v5381, 0.0
    %v5504 = vmax.f32 %v5384, 0.0
    %v5505 = vmax.f32 %v5389, 0.0
    %v5506 = vmax.f32 %v5392, 0.0
    %v5507 = vmax.f32 %v5397, 0.0
    %v5508 = vmax.f32 %v5400, 0.0
    %v5509 = vmax.f32 %v5405, 0.0
    %v5510 = vmax.f32 %v5408, 0.0
    %v5511 = vmax.f32 %v5413, 0.0
    %v5512 = vmax.f32 %v5416, 0.0
    %v5513 = vmax.f32 %v5421, 0.0
    %v5514 = vmax.f32 %v5424, 0.0
    %v5515 = vmax.f32 %v5429, 0.0
    %v5516 = vmax.f32 %v5432, 0.0
    %v5517 = vmax.f32 %v5437, 0.0
    %v5518 = vmax.f32 %v5440, 0.0
    %v5519 = vmax.f32 %v5445, 0.0
    %v5520 = vmax.f32 %v5448, 0.0
    %v5521 = vmax.f32 %v5453, 0.0
    %v5522 = vmax.f32 %v5456, 0.0
    %v5523 = vmax.f32 %v5461, 0.0
    %v5524 = vmax.f32 %v5464, 0.0
    %v5525 = vmax.f32 %v5469, 0.0
    %v5526 = vmax.f32 %v5472, 0.0
    %v5527 = vmax.f32 %v5477, 0.0
    %v5528 = vmax.f32 %v5480, 0.0
    %v5529 = vmax.f32 %v5485, 0.0
    %v5530 = vmax.f32 %v5488, 0.0
    %v5531 = vpack.c.bf16 %v5492, %v5491
    %v5532 = vpack.c.bf16 %v5494, %v5493
    %v5533 = vpack.c.bf16 %v5496, %v5495
    %v5534 = vpack.c.bf16 %v5498, %v5497
    %v5535 = vpack.c.bf16 %v5500, %v5499
    %v5536 = vpack.c.bf16 %v5502, %v5501
    %v5537 = vpack.c.bf16 %v5504, %v5503
    %v5538 = vpack.c.bf16 %v5506, %v5505
    %v5539 = vpack.c.bf16 %v5508, %v5507
    %v5540 = vpack.c.bf16 %v5510, %v5509
    %v5541 = vpack.c.bf16 %v5512, %v5511
    %v5542 = vpack.c.bf16 %v5514, %v5513
    %v5543 = vpack.c.bf16 %v5516, %v5515
    %v5544 = vpack.c.bf16 %v5518, %v5517
    %v5545 = vpack.c.bf16 %v5520, %v5519
    %v5546 = vpack.c.bf16 %v5522, %v5521
    %v5547 = vpack.c.bf16 %v5524, %v5523
    %v5548 = vpack.c.bf16 %v5526, %v5525
    %v5549 = vpack.c.bf16 %v5528, %v5527
    %v5550 = vpack.c.bf16 %v5530, %v5529
    %5551 = vmatprep.subr.bf16.mxu0 0
    %5552 = vmatpush1.bf16.msra.mxu0 %v5531
    %5553 = vmatprep.subr.bf16.mxu0 0
    %5554 = vmatpush1.bf16.msra.mxu0 %v5532
    %5555 = vmatprep.subr.bf16.mxu0 0
    %5556 = vmatpush1.bf16.msra.mxu0 %v5533
    %5557 = vmatprep.subr.bf16.mxu0 0
    %5558 = vmatpush1.bf16.msra.mxu0 %v5534
    %5559 = vmatprep.subr.bf16.mxu0 0
    %5560 = vmatpush1.bf16.msra.mxu0 %v5535
    %5561 = vmatprep.subr.bf16.mxu0 0
    %5562 = vmatpush1.bf16.msra.mxu0 %v5536
    %5563 = vmatprep.subr.bf16.mxu0 0
    %5564 = vmatpush1.bf16.msra.mxu0 %v5537
    %5565 = vmatprep.subr.bf16.mxu0 0
    %5566 = vmatpush1.bf16.msra.mxu0 %v5538
    %5567 = vmatprep.subr.bf16.mxu0 0
    %5568 = vmatpush1.bf16.msra.mxu0 %v5539
    %5569 = vmatprep.subr.bf16.mxu0 0
    %5570 = vmatpush1.bf16.msra.mxu0 %v5540
    %5571 = vmatprep.subr.bf16.mxu0 0
    %5572 = vmatpush1.bf16.msra.mxu0 %v5541
    %5573 = vmatprep.subr.bf16.mxu0 0
    %5574 = vmatpush1.bf16.msra.mxu0 %v5542
    %5575 = vmatprep.subr.bf16.mxu0 0
    %5576 = vmatpush1.bf16.msra.mxu0 %v5543
    %5577 = vmatprep.subr.bf16.mxu0 0
    %5578 = vmatpush1.bf16.msra.mxu0 %v5544
    %5579 = vmatprep.subr.bf16.mxu0 0
    %5580 = vmatpush1.bf16.msra.mxu0 %v5545
    %5581 = vmatprep.subr.bf16.mxu0 0
    %5582 = vmatpush1.bf16.msra.mxu0 %v5546
    %5583 = vmatprep.mubr.bf16.mxu0 %v727
    %5584 = vmatmul.mubr.bf16.gmra.mrb[0].mxu0 %v726
    %v5585 = vpop.f32.mrb[0].mxu0
    %v5586 = vadd.f32 0.0, %v5585
    %v5587 = vpop.f32.mrb[0].mxu0
    %v5588 = vpop.f32.mrb[0].mxu0
    %v5589 = vadd.f32 0.0, %v5588
    %v5590 = vpop.f32.mrb[0].mxu0
    %5591 = vmatprep.mubr.bf16.mxu0 %v730
    %5592 = vmatmul.mubr.bf16.gmra.mrb[0].mxu0 %v729
    %v5593 = vpop.f32.mrb[0].mxu0
    %v5594 = vadd.f32 0.0, %v5593
    %v5595 = vpop.f32.mrb[0].mxu0
    %v5596 = vpop.f32.mrb[0].mxu0
    %v5597 = vadd.f32 0.0, %v5596
    %v5598 = vpop.f32.mrb[0].mxu0
    %5599 = vmatprep.mubr.bf16.mxu0 %v733
    %5600 = vmatmul.mubr.bf16.gmra.mrb[0].mxu0 %v732
    %v5601 = vpop.f32.mrb[0].mxu0
    %v5602 = vadd.f32 0.0, %v5601
    %v5603 = vpop.f32.mrb[0].mxu0
    %v5604 = vpop.f32.mrb[0].mxu0
    %v5605 = vadd.f32 0.0, %v5604
    %v5606 = vpop.f32.mrb[0].mxu0
    %5607 = vmatprep.mubr.bf16.mxu0 %v736
    %5608 = vmatmul.mubr.bf16.gmra.mrb[0].mxu0 %v735
    %v5609 = vpop.f32.mrb[0].mxu0
    %v5610 = vadd.f32 0.0, %v5609
    %v5611 = vpop.f32.mrb[0].mxu0
    %v5612 = vpop.f32.mrb[0].mxu0
    %v5613 = vadd.f32 0.0, %v5612
    %v5614 = vpop.f32.mrb[0].mxu0
    %5615 = vmatprep.mubr.bf16.mxu0 %v739
    %5616 = vmatmul.mubr.bf16.gmra.mrb[0].mxu0 %v738
    %v5617 = vpop.f32.mrb[0].mxu0
    %v5618 = vadd.f32 0.0, %v5617
    %v5619 = vpop.f32.mrb[0].mxu0
    %v5620 = vpop.f32.mrb[0].mxu0
    %v5621 = vadd.f32 0.0, %v5620
    %v5622 = vpop.f32.mrb[0].mxu0
    %5623 = vmatprep.mubr.bf16.mxu0 %v742
    %5624 = vmatmul.mubr.bf16.gmra.mrb[0].mxu0 %v741
    %v5625 = vpop.f32.mrb[0].mxu0
    %v5626 = vadd.f32 0.0, %v5625
    %v5627 = vpop.f32.mrb[0].mxu0
    %v5628 = vpop.f32.mrb[0].mxu0
    %v5629 = vadd.f32 0.0, %v5628
    %v5630 = vpop.f32.mrb[0].mxu0
    %5631 = vmatprep.mubr.bf16.mxu0 %v745
    %5632 = vmatmul.mubr.bf16.gmra.mrb[0].mxu0 %v744
    %v5633 = vpop.f32.mrb[0].mxu0
    %v5634 = vadd.f32 0.0, %v5633
    %v5635 = vpop.f32.mrb[0].mxu0
    %v5636 = vpop.f32.mrb[0].mxu0
    %v5637 = vadd.f32 0.0, %v5636
    %v5638 = vpop.f32.mrb[0].mxu0
    %5639 = vmatprep.mubr.bf16.mxu0 %v748
    %5640 = vmatmul.mubr.bf16.gmra.mrb[0].mxu0 %v747
    %v5641 = vpop.f32.mrb[0].mxu0
    %v5642 = vadd.f32 0.0, %v5641
    %v5643 = vpop.f32.mrb[0].mxu0
    %v5644 = vpop.f32.mrb[0].mxu0
    %v5645 = vadd.f32 0.0, %v5644
    %v5646 = vpop.f32.mrb[0].mxu0
    %5647 = vmatprep.mubr.bf16.mxu0 %v751
    %5648 = vmatmul.mubr.bf16.gmra.mrb[0].mxu0 %v750
    %v5649 = vpop.f32.mrb[0].mxu0
    %v5650 = vadd.f32 0.0, %v5649
    %v5651 = vpop.f32.mrb[0].mxu0
    %v5652 = vpop.f32.mrb[0].mxu0
    %v5653 = vadd.f32 0.0, %v5652
    %v5654 = vpop.f32.mrb[0].mxu0
    %5655 = vmatprep.mubr.bf16.mxu0 %v754
    %5656 = vmatmul.mubr.bf16.gmra.mrb[0].mxu0 %v753
    %v5657 = vpop.f32.mrb[0].mxu0
    %v5658 = vadd.f32 0.0, %v5657
    %v5659 = vpop.f32.mrb[0].mxu0
    %v5660 = vpop.f32.mrb[0].mxu0
    %v5661 = vadd.f32 0.0, %v5660
    %v5662 = vpop.f32.mrb[0].mxu0
    %5663 = vmatprep.mubr.bf16.mxu0 %v757
    %5664 = vmatmul.mubr.bf16.gmra.mrb[0].mxu0 %v756
    %v5665 = vpop.f32.mrb[0].mxu0
    %v5666 = vadd.f32 0.0, %v5665
    %v5667 = vpop.f32.mrb[0].mxu0
    %v5668 = vpop.f32.mrb[0].mxu0
    %v5669 = vadd.f32 0.0, %v5668
    %v5670 = vpop.f32.mrb[0].mxu0
    %5671 = vmatprep.mubr.bf16.mxu0 %v760
    %5672 = vmatmul.mubr.bf16.gmra.mrb[0].mxu0 %v759
    %v5673 = vpop.f32.mrb[0].mxu0
    %v5674 = vadd.f32 0.0, %v5673
    %v5675 = vpop.f32.mrb[0].mxu0
    %v5676 = vpop.f32.mrb[0].mxu0
    %v5677 = vadd.f32 0.0, %v5676
    %v5678 = vpop.f32.mrb[0].mxu0
    %5679 = vmatprep.mubr.bf16.mxu0 %v763
    %5680 = vmatmul.mubr.bf16.gmra.mrb[0].mxu0 %v762
    %v5681 = vpop.f32.mrb[0].mxu0
    %v5682 = vadd.f32 0.0, %v5681
    %v5683 = vpop.f32.mrb[0].mxu0
    %v5684 = vpop.f32.mrb[0].mxu0
    %v5685 = vadd.f32 0.0, %v5684
    %v5686 = vpop.f32.mrb[0].mxu0
    %5687 = vmatprep.mubr.bf16.mxu0 %v766
    %5688 = vmatmul.mubr.bf16.gmra.mrb[0].mxu0 %v765
    %v5689 = vpop.f32.mrb[0].mxu0
    %v5690 = vadd.f32 0.0, %v5689
    %v5691 = vpop.f32.mrb[0].mxu0
    %v5692 = vpop.f32.mrb[0].mxu0
    %v5693 = vadd.f32 0.0, %v5692
    %v5694 = vpop.f32.mrb[0].mxu0
    %5695 = vmatprep.mubr.bf16.mxu0 %v769
    %5696 = vmatmul.mubr.bf16.gmra.mrb[0].mxu0 %v768
    %v5697 = vpop.f32.mrb[0].mxu0
    %v5698 = vadd.f32 0.0, %v5697
    %v5699 = vpop.f32.mrb[0].mxu0
    %v5700 = vpop.f32.mrb[0].mxu0
    %v5701 = vadd.f32 0.0, %v5700
    %v5702 = vpop.f32.mrb[0].mxu0
    %5703 = vmatprep.mubr.bf16.mxu0 %v772
    %5704 = vmatmul.mubr.bf16.gmra.mrb[0].mxu0 %v771
    %v5705 = vpop.f32.mrb[0].mxu0
    %v5706 = vadd.f32 0.0, %v5705
    %v5707 = vpop.f32.mrb[0].mxu0
    %v5708 = vpop.f32.mrb[0].mxu0
    %v5709 = vadd.f32 0.0, %v5708
    %v5710 = vpop.f32.mrb[0].mxu0
    %5711 = vdwg.mxu0
    %5712 = vmatprep.subr.bf16.mxu0 0
    %5713 = vmatpush1.bf16.msra.mxu0 %v5547
    %5714 = vmatprep.subr.bf16.mxu0 0
    %5715 = vmatpush1.bf16.msra.mxu0 %v5548
    %5716 = vmatprep.subr.bf16.mxu0 0
    %5717 = vmatpush1.bf16.msra.mxu0 %v5549
    %5718 = vmatprep.subr.bf16.mxu0 0
    %5719 = vmatpush1.bf16.msra.mxu0 %v5550
    %5720 = vmatprep.subr.bf16.mxu0 0
    %5721 = vmatpush1.bf16.msra.mxu0 0
    %5722 = vmatprep.subr.bf16.mxu0 0
    %5723 = vmatpush1.bf16.msra.mxu0 0
    %5724 = vmatprep.subr.bf16.mxu0 0
    %5725 = vmatpush1.bf16.msra.mxu0 0
    %5726 = vmatprep.subr.bf16.mxu0 0
    %5727 = vmatpush1.bf16.msra.mxu0 0
    %5728 = vmatprep.subr.bf16.mxu0 0
    %5729 = vmatpush1.bf16.msra.mxu0 0
    %5730 = vmatprep.subr.bf16.mxu0 0
    %5731 = vmatpush1.bf16.msra.mxu0 0
    %5732 = vmatprep.subr.bf16.mxu0 0
    %5733 = vmatpush1.bf16.msra.mxu0 0
    %5734 = vmatprep.subr.bf16.mxu0 0
    %5735 = vmatpush1.bf16.msra.mxu0 0
    %5736 = vmatprep.subr.bf16.mxu0 0
    %5737 = vmatpush1.bf16.msra.mxu0 0
    %5738 = vmatprep.subr.bf16.mxu0 0
    %5739 = vmatpush1.bf16.msra.mxu0 0
    %5740 = vmatprep.subr.bf16.mxu0 0
    %5741 = vmatpush1.bf16.msra.mxu0 0
    %5742 = vmatprep.subr.bf16.mxu0 0
    %5743 = vmatpush1.bf16.msra.mxu0 0
    %5744 = vmatprep.mubr.bf16.mxu0 0
    %5745 = vmatmul.mubr.bf16.gmra.mrb[0].mxu0 %v807
    %v5746 = vpop.f32.mrb[0].mxu0
    %v5747 = vadd.f32 %v5586, %v5746
    %v5748 = vpop.f32.mrb[0].mxu0
    %v5749 = vpop.f32.mrb[0].mxu0
    %v5750 = vadd.f32 %v5589, %v5749
    %v5751 = vpop.f32.mrb[0].mxu0
    %5752 = vmatprep.mubr.bf16.mxu0 0
    %5753 = vmatmul.mubr.bf16.gmra.mrb[0].mxu0 %v810
    %v5754 = vpop.f32.mrb[0].mxu0
    %v5755 = vadd.f32 %v5594, %v5754
    %v5756 = vpop.f32.mrb[0].mxu0
    %v5757 = vpop.f32.mrb[0].mxu0
    %v5758 = vadd.f32 %v5597, %v5757
    %v5759 = vpop.f32.mrb[0].mxu0
    %5760 = vmatprep.mubr.bf16.mxu0 0
    %5761 = vmatmul.mubr.bf16.gmra.mrb[0].mxu0 %v813
    %v5762 = vpop.f32.mrb[0].mxu0
    %v5763 = vadd.f32 %v5602, %v5762
    %v5764 = vpop.f32.mrb[0].mxu0
    %v5765 = vpop.f32.mrb[0].mxu0
    %v5766 = vadd.f32 %v5605, %v5765
    %v5767 = vpop.f32.mrb[0].mxu0
    %5768 = vmatprep.mubr.bf16.mxu0 0
    %5769 = vmatmul.mubr.bf16.gmra.mrb[0].mxu0 %v816
    %v5770 = vpop.f32.mrb[0].mxu0
    %v5771 = vadd.f32 %v5610, %v5770
    %v5772 = vpop.f32.mrb[0].mxu0
    %v5773 = vpop.f32.mrb[0].mxu0
    %v5774 = vadd.f32 %v5613, %v5773
    %v5775 = vpop.f32.mrb[0].mxu0
    %5776 = vmatprep.mubr.bf16.mxu0 0
    %5777 = vmatmul.mubr.bf16.gmra.mrb[0].mxu0 %v819
    %v5778 = vpop.f32.mrb[0].mxu0
    %v5779 = vadd.f32 %v5618, %v5778
    %v5780 = vpop.f32.mrb[0].mxu0
    %v5781 = vpop.f32.mrb[0].mxu0
    %v5782 = vadd.f32 %v5621, %v5781
    %v5783 = vpop.f32.mrb[0].mxu0
    %5784 = vmatprep.mubr.bf16.mxu0 0
    %5785 = vmatmul.mubr.bf16.gmra.mrb[0].mxu0 %v822
    %v5786 = vpop.f32.mrb[0].mxu0
    %v5787 = vadd.f32 %v5626, %v5786
    %v5788 = vpop.f32.mrb[0].mxu0
    %v5789 = vpop.f32.mrb[0].mxu0
    %v5790 = vadd.f32 %v5629, %v5789
    %v5791 = vpop.f32.mrb[0].mxu0
    %5792 = vmatprep.mubr.bf16.mxu0 0
    %5793 = vmatmul.mubr.bf16.gmra.mrb[0].mxu0 %v825
    %v5794 = vpop.f32.mrb[0].mxu0
    %v5795 = vadd.f32 %v5634, %v5794
    %v5796 = vpop.f32.mrb[0].mxu0
    %v5797 = vpop.f32.mrb[0].mxu0
    %v5798 = vadd.f32 %v5637, %v5797
    %v5799 = vpop.f32.mrb[0].mxu0
    %5800 = vmatprep.mubr.bf16.mxu0 0
    %5801 = vmatmul.mubr.bf16.gmra.mrb[0].mxu0 %v828
    %v5802 = vpop.f32.mrb[0].mxu0
    %v5803 = vadd.f32 %v5642, %v5802
    %v5804 = vpop.f32.mrb[0].mxu0
    %v5805 = vpop.f32.mrb[0].mxu0
    %v5806 = vadd.f32 %v5645, %v5805
    %v5807 = vpop.f32.mrb[0].mxu0
    %5808 = vmatprep.mubr.bf16.mxu0 0
    %5809 = vmatmul.mubr.bf16.gmra.mrb[0].mxu0 %v831
    %v5810 = vpop.f32.mrb[0].mxu0
    %v5811 = vadd.f32 %v5650, %v5810
    %v5812 = vpop.f32.mrb[0].mxu0
    %v5813 = vpop.f32.mrb[0].mxu0
    %v5814 = vadd.f32 %v5653, %v5813
    %v5815 = vpop.f32.mrb[0].mxu0
    %5816 = vmatprep.mubr.bf16.mxu0 0
    %5817 = vmatmul.mubr.bf16.gmra.mrb[0].mxu0 %v834
    %v5818 = vpop.f32.mrb[0].mxu0
    %v5819 = vadd.f32 %v5658, %v5818
    %v5820 = vpop.f32.mrb[0].mxu0
    %v5821 = vpop.f32.mrb[0].mxu0
    %v5822 = vadd.f32 %v5661, %v5821
    %v5823 = vpop.f32.mrb[0].mxu0
    %5824 = vmatprep.mubr.bf16.mxu0 0
    %5825 = vmatmul.mubr.bf16.gmra.mrb[0].mxu0 %v837
    %v5826 = vpop.f32.mrb[0].mxu0
    %v5827 = vadd.f32 %v5666, %v5826
    %v5828 = vpop.f32.mrb[0].mxu0
    %v5829 = vpop.f32.mrb[0].mxu0
    %v5830 = vadd.f32 %v5669, %v5829
    %v5831 = vpop.f32.mrb[0].mxu0
    %5832 = vmatprep.mubr.bf16.mxu0 0
    %5833 = vmatmul.mubr.bf16.gmra.mrb[0].mxu0 %v840
    %v5834 = vpop.f32.mrb[0].mxu0
    %v5835 = vadd.f32 %v5674, %v5834
    %v5836 = vpop.f32.mrb[0].mxu0
    %v5837 = vpop.f32.mrb[0].mxu0
    %v5838 = vadd.f32 %v5677, %v5837
    %v5839 = vpop.f32.mrb[0].mxu0
    %5840 = vmatprep.mubr.bf16.mxu0 0
    %5841 = vmatmul.mubr.bf16.gmra.mrb[0].mxu0 %v843
    %v5842 = vpop.f32.mrb[0].mxu0
    %v5843 = vadd.f32 %v5682, %v5842
    %v5844 = vpop.f32.mrb[0].mxu0
    %v5845 = vpop.f32.mrb[0].mxu0
    %v5846 = vadd.f32 %v5685, %v5845
    %v5847 = vpop.f32.mrb[0].mxu0
    %5848 = vmatprep.mubr.bf16.mxu0 0
    %5849 = vmatmul.mubr.bf16.gmra.mrb[0].mxu0 %v846
    %v5850 = vpop.f32.mrb[0].mxu0
    %v5851 = vadd.f32 %v5690, %v5850
    %v5852 = vpop.f32.mrb[0].mxu0
    %v5853 = vpop.f32.mrb[0].mxu0
    %v5854 = vadd.f32 %v5693, %v5853
    %v5855 = vpop.f32.mrb[0].mxu0
    %5856 = vmatprep.mubr.bf16.mxu0 0
    %5857 = vmatmul.mubr.bf16.gmra.mrb[0].mxu0 %v849
    %v5858 = vpop.f32.mrb[0].mxu0
    %v5859 = vadd.f32 %v5698, %v5858
    %v5860 = vpop.f32.mrb[0].mxu0
    %v5861 = vpop.f32.mrb[0].mxu0
    %v5862 = vadd.f32 %v5701, %v5861
    %v5863 = vpop.f32.mrb[0].mxu0
    %5864 = vmatprep.mubr.bf16.mxu0 0
    %5865 = vmatmul.mubr.bf16.gmra.mrb[0].mxu0 %v852
    %v5866 = vpop.f32.mrb[0].mxu0
    %v5867 = vadd.f32 %v5706, %v5866
    %v5868 = vpop.f32.mrb[0].mxu0
    %v5869 = vpop.f32.mrb[0].mxu0
    %v5870 = vadd.f32 %v5709, %v5869
    %v5871 = vpop.f32.mrb[0].mxu0
    %5872 = vdwg.mxu0
    %v5873 = vmax.f32 %v5747, 0.0
    %v5874 = vmax.f32 %v5750, 0.0
    %v5875 = vmax.f32 %v5755, 0.0
    %v5876 = vmax.f32 %v5758, 0.0
    %v5877 = vmax.f32 %v5763, 0.0
    %v5878 = vmax.f32 %v5766, 0.0
    %v5879 = vmax.f32 %v5771, 0.0
    %v5880 = vmax.f32 %v5774, 0.0
    %v5881 = vmax.f32 %v5779, 0.0
    %v5882 = vmax.f32 %v5782, 0.0
    %v5883 = vmax.f32 %v5787, 0.0
    %v5884 = vmax.f32 %v5790, 0.0
    %v5885 = vmax.f32 %v5795, 0.0
    %v5886 = vmax.f32 %v5798, 0.0
    %v5887 = vmax.f32 %v5803, 0.0
    %v5888 = vmax.f32 %v5806, 0.0
    %v5889 = vmax.f32 %v5811, 0.0
    %v5890 = vmax.f32 %v5814, 0.0
    %v5891 = vmax.f32 %v5819, 0.0
    %v5892 = vmax.f32 %v5822, 0.0
    %v5893 = vmax.f32 %v5827, 0.0
    %v5894 = vmax.f32 %v5830, 0.0
    %v5895 = vmax.f32 %v5835, 0.0
    %v5896 = vmax.f32 %v5838, 0.0
    %v5897 = vmax.f32 %v5843, 0.0
    %v5898 = vmax.f32 %v5846, 0.0
    %v5899 = vmax.f32 %v5851, 0.0
    %v5900 = vmax.f32 %v5854, 0.0
    %v5901 = vmax.f32 %v5859, 0.0
    %v5902 = vmax.f32 %v5862, 0.0
    %v5903 = vmax.f32 %v5867, 0.0
    %v5904 = vmax.f32 %v5870, 0.0
    %v5905 = vmax.f32 %v5262, %v5873
    %v5906 = vmax.f32 %v5263, %v5874
    %v5907 = vmax.f32 %v5264, %v5875
    %v5908 = vmax.f32 %v5265, %v5876
    %v5909 = vmax.f32 %v5905, %v5877
    %v5910 = vmax.f32 %v5906, %v5878
    %v5911 = vmax.f32 %v5907, %v5879
    %v5912 = vmax.f32 %v5908, %v5880
    %v5913 = vmax.f32 %v5909, %v5881
    %v5914 = vmax.f32 %v5910, %v5882
    %v5915 = vmax.f32 %v5911, %v5883
    %v5916 = vmax.f32 %v5912, %v5884
    %v5917 = vmax.f32 %v5913, %v5885
    %v5918 = vmax.f32 %v5914, %v5886
    %v5919 = vmax.f32 %v5915, %v5887
    %v5920 = vmax.f32 %v5916, %v5888
    %v5921 = vmax.f32 %v5917, %v5889
    %v5922 = vmax.f32 %v5918, %v5890
    %v5923 = vmax.f32 %v5919, %v5891
    %v5924 = vmax.f32 %v5920, %v5892
    %v5925 = vmax.f32 %v5921, %v5893
    %v5926 = vmax.f32 %v5922, %v5894
    %v5927 = vmax.f32 %v5923, %v5895
    %v5928 = vmax.f32 %v5924, %v5896
    %v5929 = vmax.f32 %v5925, %v5897
    %v5930 = vmax.f32 %v5926, %v5898
    %v5931 = vmax.f32 %v5927, %v5899
    %v5932 = vmax.f32 %v5928, %v5900
    %v5933 = vmax.f32 %v5929, %v5901
    %v5934 = vmax.f32 %v5930, %v5902
    %v5935 = vmax.f32 %v5931, %v5903
    %v5936 = vmax.f32 %v5932, %v5904
    %5937 = vst [vmem:[#allocation2] sm:$0xff] %v5933
    %5938 = vst [vmem:[#allocation2 + $0x8] sm:$0xff] %v5934
    %5939 = vst [vmem:[#allocation2 + $0x10] sm:$0xff] %v5935
    %5940 = vst [vmem:[#allocation2 + $0x18] sm:$0xff] %v5936
    // Predicated region
    $region14: #{tpu_custom_call.1} parent=1 // pred_check
      _
    $region15: #{tpu_custom_call.1} parent=1 // pred_check_branch
      %5942 = sbr.rel (0) target = $region17
    $region16: #{tpu_custom_call.1} parent=1 // pred_region
      %s5944 = ssub.s32 512, 512
      %5945 = vsyncadd [#allocation3], %s5944
      %s5946 = sshll.u32 [#allocation2], 4
      %s5947 = int_to_ptr.vmem [resolvable:$true] %s5946
      %5952 = dma.vmem_to_hbm [thread:$0]  %s5947, 512, %s3, [#allocation3], 128, 128, 8
    $region17: #{tpu_custom_call.1} parent=1 // pred_fallthru
      _
    // Predicated region
    $region18: #{tpu_custom_call.1} parent=1 // pred_check
      _
    $region19: #{tpu_custom_call.1} parent=1 // pred_check_branch
      %5954 = sbr.rel (0) target = $region21
    $region20: #{tpu_custom_call.1} parent=1 // pred_region
      %5955 = dma.done [#allocation3], 512
    $region21: #{tpu_custom_call.1} parent=1 // pred_fallthru
      _
    %5956 = vsyncpa [#allocation3], 1

</llo_original>
